<compile_context>
chip_gen: v7x
topology: tpu7x:2x2x1
jax: 0.10.0
libtpu: 0.0.40
codegen_flags: <defaults>
</compile_context>

<pallas_src>
import jax
import jax.numpy as jnp
from jax.experimental import pallas as pl
from jax.experimental.pallas import tpu as pltpu

MAX_BLOCK_N = 128          # per-grid-step batch block (multiple of 8)
_NEG_PAD = -1.0e30         # bias for the 31 padded fc2 classes


# ----------------------------- fused Pallas kernel -------------------------- #

def _dqn_kernel(x_ref, w1e_ref, b1e_ref, w2e_ref, b2e_ref,
                w1f_ref, b1f_ref, w2f_ref, b2f_ref, o_ref):
    """Whole DQNNet forward for one batch block (BN, 225) -> (BN, 256)."""
    x = x_ref[...]                                          # (BN, 225) bf16

    # conv1 fused with the 2x2 maxpool: one expanded matmul per pool offset,
    # elementwise max (the shared per-channel bias commutes with the max).
    h = jnp.dot(x, w1e_ref[0], preferred_element_type=jnp.float32)
    for d in range(1, 4):
        h = jnp.maximum(
            h, jnp.dot(x, w1e_ref[d], preferred_element_type=jnp.float32))
    pooled = jnp.maximum(h + b1e_ref[...], 0.0)             # (BN, 490) f32

    # conv2 as ONE dense matmul over the flattened pooled activation.  The
    # expanded weight's column order equals PyTorch's view(-1, 720) order, so
    # no flatten / permutation is needed before fc1.
    a2 = jnp.dot(pooled.astype(jnp.bfloat16), w2e_ref[...],
                 preferred_element_type=jnp.float32) + b2e_ref[...]
    a2 = jnp.maximum(a2, 0.0)                               # (BN, 720)

    # fc1 -> relu.
    # TODO(synk): F.dropout(training=self.training) has no deterministic Pallas
    # equivalent here; implemented with eval semantics (identity).
    h3 = jnp.dot(a2.astype(jnp.bfloat16), w1f_ref[...],
                 preferred_element_type=jnp.float32) + b1f_ref[...]
    h3 = jnp.maximum(h3, 0.0)                               # (BN, 400)

    # fc2 (256 padded lanes; fake classes get a -1e30 bias) -> log_softmax.
    z = jnp.dot(h3.astype(jnp.bfloat16), w2f_ref[...],
                preferred_element_type=jnp.float32) + b2f_ref[...]
    m = jnp.max(z, axis=-1, keepdims=True)
    lse = m + jnp.log(jnp.sum(jnp.exp(z - m), axis=-1, keepdims=True))
    o_ref[...] = z - lse                                    # (BN, 256) f32


# ------------------------- one-time weight preprocessing -------------------- #

def _pool_onehot(offset):
    """A[i, ph, ki] = 1 iff i == 2*ph + offset + ki   (15, 7, 2)."""
    i = jnp.arange(15)[:, None, None]
    p = jnp.arange(7)[None, :, None]
    k = jnp.arange(2)[None, None, :]
    return (i == 2 * p + offset + k).astype(jnp.float32)


def _conv_onehot():
    """B[ph, oh, ki] = 1 iff ph == oh + ki   (7, 6, 2)."""
    a = jnp.arange(7)[:, None, None]
    o = jnp.arange(6)[None, :, None]
    k = jnp.arange(2)[None, None, :]
    return (a == o + k).astype(jnp.float32)


def prepare_params(raw):
    """Expand PyTorch-layout weights into the matmul forms used by the kernel."""
    w1_core = raw["w1c"][:, 0]                              # (10, 2, 2)
    blocks = []
    for di in range(2):
        for dj in range(2):
            # rows = input pixel (i*15+j); cols = (ph*7+pw)*10 + c
            blk = jnp.einsum("iak,jbl,ckl->ijabc",
                             _pool_onehot(di), _pool_onehot(dj), w1_core)
            blocks.append(blk.reshape(225, 490))
    w1e = jnp.stack(blocks, axis=0).astype(jnp.bfloat16)    # (4, 225, 490)
    b1e = jnp.tile(raw["b1c"], 49).reshape(1, 490)          # col = (ph*7+pw)*10+c

    # conv2 expanded: rows = (ph*7+pw)*10 + cin ; cols = cout*36 + oh*6 + ow
    C = _conv_onehot()
    w2e = jnp.einsum("aok,bpl,uvkl->abvuop", C, C, raw["w2c"]).reshape(490, 720)
    b2e = jnp.repeat(raw["b2c"], 36).reshape(1, 720)

    w2f_pad = jnp.pad(raw["w2f"].T, ((0, 0), (0, 31)))      # (400, 256)
    b2f_pad = jnp.concatenate(
        [raw["b2f"], jnp.full((31,), _NEG_PAD, jnp.float32)]).reshape(1, 256)

    return {
        "w1e": w1e,
        "b1e": b1e,
        "w2e": w2e.astype(jnp.bfloat16),
        "b2e": b2e,
        "w1f": raw["w1f"].T.astype(jnp.bfloat16),           # (720, 400)
        "b1f": raw["b1f"].reshape(1, 400),
        "w2f": w2f_pad.astype(jnp.bfloat16),                 # (400, 256)
        "b2f": b2f_pad,
    }


# ------------------------------ JAX wrapper ---------------------------------- #

def _round_up(v, m):
    return (v + m - 1) // m * m


@jax.jit
def dqn_forward(x, p):
    n = x.shape[0]
    bn = MAX_BLOCK_N if n >= MAX_BLOCK_N else _round_up(max(n, 1), 8)
    n_pad = _round_up(n, bn)

    xf = x.reshape(n, 225).astype(jnp.bfloat16)
    if n_pad != n:
        xf = jnp.pad(xf, ((0, n_pad - n), (0, 0)))

    const2 = lambda i: (0, 0)
    out = pl.pallas_call(
        _dqn_kernel,
        out_shape=jax.ShapeDtypeStruct((n_pad, 256), jnp.float32),
        grid=(pl.cdiv(n_pad, bn),),
        in_specs=[
            pl.BlockSpec((bn, 225), lambda i: (i, 0)),       # x (batch tiled)
            pl.BlockSpec((4, 225, 490), lambda i: (0, 0, 0)),  # conv1 expanded
            pl.BlockSpec((1, 490), const2),
            pl.BlockSpec((490, 720), const2),                # conv2 expanded
            pl.BlockSpec((1, 720), const2),
            pl.BlockSpec((720, 400), const2),                # fc1
            pl.BlockSpec((1, 400), const2),
            pl.BlockSpec((400, 256), const2),                # fc2 (padded)
            pl.BlockSpec((1, 256), const2),
        ],
        out_specs=pl.BlockSpec((bn, 256), lambda i: (i, 0)),
        compiler_params=pltpu.CompilerParams(
            dimension_semantics=("parallel",),
            vmem_limit_bytes=32 * 1024 * 1024),
    )(xf, p["w1e"], p["b1e"], p["w2e"], p["b2e"],
      p["w1f"], p["b1f"], p["w2f"], p["b2f"])
    return out[:n, :225]


# ------------------------------ reference & test ----------------------------- #

def dqn_forward_ref(x, raw):
    """Pure-JAX f32 reference using the raw PyTorch-layout params."""
    dn = ("NCHW", "OIHW", "NCHW")
    c1 = jax.lax.conv_general_dilated(x, raw["w1c"], (1, 1), "VALID",
                                      dimension_numbers=dn)
    c1 = c1 + raw["b1c"].reshape(1, 10, 1, 1)
    pmax = jax.lax.reduce_window(c1, -jnp.inf, jax.lax.max,
                                 (1, 1, 2, 2), (1, 1, 2, 2), "VALID")
    h = jnp.maximum(pmax, 0.0)
    c2 = jax.lax.conv_general_dilated(h, raw["w2c"], (1, 1), "VALID",
                                      dimension_numbers=dn)
    c2 = jnp.maximum(c2 + raw["b2c"].reshape(1, 20, 1, 1), 0.0)
    flat = c2.reshape(x.shape[0], 720)
    f1 = jnp.maximum(flat @ raw["w1f"].T + raw["b1f"], 0.0)
    z = f1 @ raw["w2f"].T + raw["b2f"]
    return jax.nn.log_softmax(z, axis=1)


def init_params(key):
    ks = jax.random.split(key, 8)
    s = 0.05
    return {
        "w1c": s * jax.random.normal(ks[0], (10, 1, 2, 2), jnp.float32),
        "b1c": s * jax.random.normal(ks[1], (10,), jnp.float32),
        "w2c": s * jax.random.normal(ks[2], (20, 10, 2, 2), jnp.float32),
        "b2c": s * jax.random.normal(ks[3], (20,), jnp.float32),
        "w1f": s * jax.random.normal(ks[4], (400, 720), jnp.float32),
        "b1f": s * jax.random.normal(ks[5], (400,), jnp.float32),
        "w2f": s * jax.random.normal(ks[6], (225, 400), jnp.float32),
        "b2f": s * jax.random.normal(ks[7], (225,), jnp.float32),
    }


if __name__ == "__main__":
    key = jax.random.PRNGKey(0)
    pkey, xkey, xkey2 = jax.random.split(key, 3)
    raw = init_params(pkey)
    params = prepare_params(raw)

    # DQNNet expects 15x15 single-channel boards (fc1 expects 720 = 20*6*6).
    x = jax.random.normal(xkey, (2, 1, 15, 15), jnp.float32)
    out = jax.block_until_ready(dqn_forward(x, params))
    ref = jax.block_until_ready(dqn_forward_ref(x, raw))

    assert out.shape == (2, 225) and out.dtype == jnp.float32
    assert bool(jnp.all(jnp.isfinite(out)))
    # log_softmax rows must exponentiate to probability distributions.
    assert bool(jnp.allclose(jnp.sum(jnp.exp(out), axis=1), 1.0, atol=1e-3))
    assert bool(jnp.allclose(out, ref, rtol=2e-2, atol=2e-2))

    # Larger batch: exercises the multi-step batch grid and padded rows.
    x2 = jax.random.normal(xkey2, (132, 1, 15, 15), jnp.float32)
    out2 = jax.block_until_ready(dqn_forward(x2, params))
    ref2 = jax.block_until_ready(dqn_forward_ref(x2, raw))
    assert out2.shape == (132, 225)
    assert bool(jnp.all(jnp.isfinite(out2)))
    assert bool(jnp.allclose(out2, ref2, rtol=2e-2, atol=2e-2))

    print("KERNEL_OK")
</pallas_src>

<mosaic_0001>
module attributes {stable_mosaic.version = 11 : i64} {
  func.func @_dqn_kernel(%arg0: i32, %arg1: memref<8x225xbf16, #tpu.memory_space<vmem>>, %arg2: memref<4x225x490xbf16, #tpu.memory_space<vmem>>, %arg3: memref<1x490xf32, #tpu.memory_space<vmem>>, %arg4: memref<490x720xbf16, #tpu.memory_space<vmem>>, %arg5: memref<1x720xf32, #tpu.memory_space<vmem>>, %arg6: memref<720x400xbf16, #tpu.memory_space<vmem>>, %arg7: memref<1x400xf32, #tpu.memory_space<vmem>>, %arg8: memref<400x256xbf16, #tpu.memory_space<vmem>>, %arg9: memref<1x256xf32, #tpu.memory_space<vmem>>, %arg10: memref<8x256xf32, #tpu.memory_space<vmem>>) attributes {dimension_semantics = [#tpu.dimension_semantics<parallel>], iteration_bounds = array<i64: 1>, scalar_prefetch = 0 : i64, scratch_operands = 0 : i64, tpu.core_type = #tpu.core_type<tc>, window_params = [{transform_indices = @transform_0, window_bounds = array<i64: 8, 225>}, {pipeline_mode = #tpu.pipeline_mode<synchronous>, transform_indices = @transform_1, window_bounds = array<i64: 4, 225, 490>}, {pipeline_mode = #tpu.pipeline_mode<synchronous>, transform_indices = @transform_2, window_bounds = array<i64: 1, 490>}, {pipeline_mode = #tpu.pipeline_mode<synchronous>, transform_indices = @transform_3, window_bounds = array<i64: 490, 720>}, {pipeline_mode = #tpu.pipeline_mode<synchronous>, transform_indices = @transform_4, window_bounds = array<i64: 1, 720>}, {pipeline_mode = #tpu.pipeline_mode<synchronous>, transform_indices = @transform_5, window_bounds = array<i64: 720, 400>}, {pipeline_mode = #tpu.pipeline_mode<synchronous>, transform_indices = @transform_6, window_bounds = array<i64: 1, 400>}, {pipeline_mode = #tpu.pipeline_mode<synchronous>, transform_indices = @transform_7, window_bounds = array<i64: 400, 256>}, {pipeline_mode = #tpu.pipeline_mode<synchronous>, transform_indices = @transform_8, window_bounds = array<i64: 1, 256>}, {transform_indices = @transform_9, window_bounds = array<i64: 8, 256>}]} {
    %c0 = arith.constant 0 : index
    %c0_0 = arith.constant 0 : index
    %0 = vector.load %arg1[%c0, %c0_0] : memref<8x225xbf16, #tpu.memory_space<vmem>>, vector<8x225xbf16>
    %c0_1 = arith.constant 0 : index
    %c0_2 = arith.constant 0 : index
    %c0_3 = arith.constant 0 : index
    %1 = vector.load %arg2[%c0_1, %c0_2, %c0_3] : memref<4x225x490xbf16, #tpu.memory_space<vmem>>, vector<1x225x490xbf16>
    %2 = vector.shape_cast %1 : vector<1x225x490xbf16> to vector<225x490xbf16>
    %cst = arith.constant dense<0.000000e+00> : vector<8x490xf32>
    %3 = tpu.matmul %0, %2, %cst {dimension_numbers = #tpu.dot_dimension_numbers<[1], [0], [0], [1], [0, 0, 1, 1], [], []>} : vector<8x225xbf16>, vector<225x490xbf16>, vector<8x490xf32> -> vector<8x490xf32>
    %c1 = arith.constant 1 : index
    %c0_4 = arith.constant 0 : index
    %c0_5 = arith.constant 0 : index
    %4 = vector.load %arg2[%c1, %c0_4, %c0_5] : memref<4x225x490xbf16, #tpu.memory_space<vmem>>, vector<1x225x490xbf16>
    %5 = vector.shape_cast %4 : vector<1x225x490xbf16> to vector<225x490xbf16>
    %cst_6 = arith.constant dense<0.000000e+00> : vector<8x490xf32>
    %6 = tpu.matmul %0, %5, %cst_6 {dimension_numbers = #tpu.dot_dimension_numbers<[1], [0], [0], [1], [0, 0, 1, 1], [], []>} : vector<8x225xbf16>, vector<225x490xbf16>, vector<8x490xf32> -> vector<8x490xf32>
    %7 = arith.maximumf %3, %6 : vector<8x490xf32>
    %c2 = arith.constant 2 : index
    %c0_7 = arith.constant 0 : index
    %c0_8 = arith.constant 0 : index
    %8 = vector.load %arg2[%c2, %c0_7, %c0_8] : memref<4x225x490xbf16, #tpu.memory_space<vmem>>, vector<1x225x490xbf16>
    %9 = vector.shape_cast %8 : vector<1x225x490xbf16> to vector<225x490xbf16>
    %cst_9 = arith.constant dense<0.000000e+00> : vector<8x490xf32>
    %10 = tpu.matmul %0, %9, %cst_9 {dimension_numbers = #tpu.dot_dimension_numbers<[1], [0], [0], [1], [0, 0, 1, 1], [], []>} : vector<8x225xbf16>, vector<225x490xbf16>, vector<8x490xf32> -> vector<8x490xf32>
    %11 = arith.maximumf %7, %10 : vector<8x490xf32>
    %c3 = arith.constant 3 : index
    %c0_10 = arith.constant 0 : index
    %c0_11 = arith.constant 0 : index
    %12 = vector.load %arg2[%c3, %c0_10, %c0_11] : memref<4x225x490xbf16, #tpu.memory_space<vmem>>, vector<1x225x490xbf16>
    %13 = vector.shape_cast %12 : vector<1x225x490xbf16> to vector<225x490xbf16>
    %cst_12 = arith.constant dense<0.000000e+00> : vector<8x490xf32>
    %14 = tpu.matmul %0, %13, %cst_12 {dimension_numbers = #tpu.dot_dimension_numbers<[1], [0], [0], [1], [0, 0, 1, 1], [], []>} : vector<8x225xbf16>, vector<225x490xbf16>, vector<8x490xf32> -> vector<8x490xf32>
    %15 = arith.maximumf %11, %14 : vector<8x490xf32>
    %c0_13 = arith.constant 0 : index
    %c0_14 = arith.constant 0 : index
    %16 = vector.load %arg3[%c0_13, %c0_14] : memref<1x490xf32, #tpu.memory_space<vmem>>, vector<1x490xf32>
    %17 = vector.broadcast %16 : vector<1x490xf32> to vector<8x490xf32>
    %18 = arith.addf %15, %17 : vector<8x490xf32>
    %cst_15 = arith.constant 0.000000e+00 : f32
    %19 = vector.broadcast %cst_15 : f32 to vector<8x490xf32>
    %20 = arith.maximumf %18, %19 : vector<8x490xf32>
    %21 = arith.truncf %20 : vector<8x490xf32> to vector<8x490xbf16>
    %c0_16 = arith.constant 0 : index
    %c0_17 = arith.constant 0 : index
    %22 = vector.load %arg4[%c0_16, %c0_17] : memref<490x720xbf16, #tpu.memory_space<vmem>>, vector<490x720xbf16>
    %cst_18 = arith.constant dense<0.000000e+00> : vector<8x720xf32>
    %23 = tpu.matmul %21, %22, %cst_18 {dimension_numbers = #tpu.dot_dimension_numbers<[1], [0], [0], [1], [0, 0, 1, 1], [], []>} : vector<8x490xbf16>, vector<490x720xbf16>, vector<8x720xf32> -> vector<8x720xf32>
    %c0_19 = arith.constant 0 : index
    %c0_20 = arith.constant 0 : index
    %24 = vector.load %arg5[%c0_19, %c0_20] : memref<1x720xf32, #tpu.memory_space<vmem>>, vector<1x720xf32>
    %25 = vector.broadcast %24 : vector<1x720xf32> to vector<8x720xf32>
    %26 = arith.addf %23, %25 : vector<8x720xf32>
    %cst_21 = arith.constant 0.000000e+00 : f32
    %27 = vector.broadcast %cst_21 : f32 to vector<8x720xf32>
    %28 = arith.maximumf %26, %27 : vector<8x720xf32>
    %29 = arith.truncf %28 : vector<8x720xf32> to vector<8x720xbf16>
    %c0_22 = arith.constant 0 : index
    %c0_23 = arith.constant 0 : index
    %30 = vector.load %arg6[%c0_22, %c0_23] : memref<720x400xbf16, #tpu.memory_space<vmem>>, vector<720x400xbf16>
    %cst_24 = arith.constant dense<0.000000e+00> : vector<8x400xf32>
    %31 = tpu.matmul %29, %30, %cst_24 {dimension_numbers = #tpu.dot_dimension_numbers<[1], [0], [0], [1], [0, 0, 1, 1], [], []>} : vector<8x720xbf16>, vector<720x400xbf16>, vector<8x400xf32> -> vector<8x400xf32>
    %c0_25 = arith.constant 0 : index
    %c0_26 = arith.constant 0 : index
    %32 = vector.load %arg7[%c0_25, %c0_26] : memref<1x400xf32, #tpu.memory_space<vmem>>, vector<1x400xf32>
    %33 = vector.broadcast %32 : vector<1x400xf32> to vector<8x400xf32>
    %34 = arith.addf %31, %33 : vector<8x400xf32>
    %cst_27 = arith.constant 0.000000e+00 : f32
    %35 = vector.broadcast %cst_27 : f32 to vector<8x400xf32>
    %36 = arith.maximumf %34, %35 : vector<8x400xf32>
    %37 = arith.truncf %36 : vector<8x400xf32> to vector<8x400xbf16>
    %c0_28 = arith.constant 0 : index
    %c0_29 = arith.constant 0 : index
    %38 = vector.load %arg8[%c0_28, %c0_29] : memref<400x256xbf16, #tpu.memory_space<vmem>>, vector<400x256xbf16>
    %cst_30 = arith.constant dense<0.000000e+00> : vector<8x256xf32>
    %39 = tpu.matmul %37, %38, %cst_30 {dimension_numbers = #tpu.dot_dimension_numbers<[1], [0], [0], [1], [0, 0, 1, 1], [], []>} : vector<8x400xbf16>, vector<400x256xbf16>, vector<8x256xf32> -> vector<8x256xf32>
    %c0_31 = arith.constant 0 : index
    %c0_32 = arith.constant 0 : index
    %40 = vector.load %arg9[%c0_31, %c0_32] : memref<1x256xf32, #tpu.memory_space<vmem>>, vector<1x256xf32>
    %41 = vector.broadcast %40 : vector<1x256xf32> to vector<8x256xf32>
    %42 = arith.addf %39, %41 : vector<8x256xf32>
    %cst_33 = arith.constant dense<0xFF800000> : vector<8xf32>
    %43 = vector.multi_reduction <maximumf>, %42, %cst_33 [1] : vector<8x256xf32> to vector<8xf32>
    %44 = vector.shape_cast %43 : vector<8xf32> to vector<8x1xf32>
    %45 = vector.broadcast %44 : vector<8x1xf32> to vector<8x256xf32>
    %46 = arith.subf %42, %45 : vector<8x256xf32>
    %47 = math.exp %46 : vector<8x256xf32>
    %cst_34 = arith.constant dense<0.000000e+00> : vector<8xf32>
    %48 = vector.multi_reduction <add>, %47, %cst_34 [1] : vector<8x256xf32> to vector<8xf32>
    %49 = vector.shape_cast %48 : vector<8xf32> to vector<8x1xf32>
    %50 = math.log %49 : vector<8x1xf32>
    %51 = arith.addf %44, %50 : vector<8x1xf32>
    %52 = vector.broadcast %51 : vector<8x1xf32> to vector<8x256xf32>
    %53 = arith.subf %42, %52 : vector<8x256xf32>
    %c0_35 = arith.constant 0 : index
    %c0_36 = arith.constant 0 : index
    %54 = vector.load %arg10[%c0_35, %c0_36] : memref<8x256xf32, #tpu.memory_space<vmem>>, vector<8x256xf32>
    tpu.vector_store %arg10[%c0_35, %c0_36], %53 {strides = array<i32>} : memref<8x256xf32, #tpu.memory_space<vmem>>, vector<8x256xf32>,
    return
  }
  func.func @transform_0(%arg0: i32) -> (i32, i32) {
    %c0_i32 = arith.constant 0 : i32
    %c0_i32_0 = arith.constant 0 : i32
    return %arg0, %c0_i32 : i32, i32
  }
  func.func @transform_1(%arg0: i32) -> (i32, i32, i32) {
    %c0_i32 = arith.constant 0 : i32
    %c0_i32_0 = arith.constant 0 : i32
    %c0_i32_1 = arith.constant 0 : i32
    %c0_i32_2 = arith.constant 0 : i32
    return %c0_i32, %c0_i32_0, %c0_i32_1 : i32, i32, i32
  }
  func.func @transform_2(%arg0: i32) -> (i32, i32) {
    %c0_i32 = arith.constant 0 : i32
    %c0_i32_0 = arith.constant 0 : i32
    %c0_i32_1 = arith.constant 0 : i32
    return %c0_i32, %c0_i32_0 : i32, i32
  }
  func.func @transform_3(%arg0: i32) -> (i32, i32) {
    %c0_i32 = arith.constant 0 : i32
    %c0_i32_0 = arith.constant 0 : i32
    %c0_i32_1 = arith.constant 0 : i32
    return %c0_i32, %c0_i32_0 : i32, i32
  }
  func.func @transform_4(%arg0: i32) -> (i32, i32) {
    %c0_i32 = arith.constant 0 : i32
    %c0_i32_0 = arith.constant 0 : i32
    %c0_i32_1 = arith.constant 0 : i32
    return %c0_i32, %c0_i32_0 : i32, i32
  }
  func.func @transform_5(%arg0: i32) -> (i32, i32) {
    %c0_i32 = arith.constant 0 : i32
    %c0_i32_0 = arith.constant 0 : i32
    %c0_i32_1 = arith.constant 0 : i32
    return %c0_i32, %c0_i32_0 : i32, i32
  }
  func.func @transform_6(%arg0: i32) -> (i32, i32) {
    %c0_i32 = arith.constant 0 : i32
    %c0_i32_0 = arith.constant 0 : i32
    %c0_i32_1 = arith.constant 0 : i32
    return %c0_i32, %c0_i32_0 : i32, i32
  }
  func.func @transform_7(%arg0: i32) -> (i32, i32) {
    %c0_i32 = arith.constant 0 : i32
    %c0_i32_0 = arith.constant 0 : i32
    %c0_i32_1 = arith.constant 0 : i32
    return %c0_i32, %c0_i32_0 : i32, i32
  }
  func.func @transform_8(%arg0: i32) -> (i32, i32) {
    %c0_i32 = arith.constant 0 : i32
    %c0_i32_0 = arith.constant 0 : i32
    %c0_i32_1 = arith.constant 0 : i32
    return %c0_i32, %c0_i32_0 : i32, i32
  }
  func.func @transform_9(%arg0: i32) -> (i32, i32) {
    %c0_i32 = arith.constant 0 : i32
    %c0_i32_0 = arith.constant 0 : i32
    return %arg0, %c0_i32 : i32, i32
  }
}

</mosaic_0001>

<llo_original>
// kernel: dqn_forward.1
$region0: #{dqn_forward.1}
  #allocation0 [shape = 'u32[]', space=smem, size = 0x4, offset = 0x4, fixed_abs, tag = 'smem constant byte address 0x4 - core index']
  #allocation1 [shape = 'u32[144,128]{1,0:T(1,128)}', space=vmem, size = 0x12000, scoped, tag = 'internal scratch']
  %s0 = inlined_call_operand.vmem [shape: bf16[8,225], index: 0, kind: input, shape index: {}]
  %s1 = inlined_call_operand.vmem [shape: bf16[4,225,490], index: 1, kind: input, shape index: {}]
  %s2 = inlined_call_operand.vmem [shape: f32[1,490], index: 2, kind: input, shape index: {}]
  %s3 = inlined_call_operand.vmem [shape: bf16[490,720], index: 3, kind: input, shape index: {}]
  %s4 = inlined_call_operand.vmem [shape: f32[1,720], index: 4, kind: input, shape index: {}]
  %s5 = inlined_call_operand.vmem [shape: bf16[720,400], index: 5, kind: input, shape index: {}]
  %s6 = inlined_call_operand.vmem [shape: f32[1,400], index: 6, kind: input, shape index: {}]
  %s7 = inlined_call_operand.vmem [shape: bf16[400,256], index: 7, kind: input, shape index: {}]
  %s8 = inlined_call_operand.vmem [shape: f32[1,256], index: 8, kind: input, shape index: {}]
  %s9 = inlined_call_operand.vmem [shape: f32[8,256], index: 9, kind: output, shape index: {}]
  %s10 = sld [smem:[#allocation0]]
  $region46: #{dqn_forward.1} parent=0
    _
  %s12 = ssub.s32 1, %s10
  %s13 = scalar_select 0, %s12, %s10
  // Predicated region
  $region2: #{dqn_forward.1} parent=0 // pred_check
    _
  $region3: #{dqn_forward.1} parent=0 // pred_check_branch
    %15 = sbr.rel (0) target = $region5
  $region4: #{dqn_forward.1} parent=0 // pred_region
    _
  $region5: #{dqn_forward.1} parent=0 // pred_fallthru
    _
  // Predicated region
  $region6: #{dqn_forward.1} parent=0 // pred_check
    _
  $region7: #{dqn_forward.1} parent=0 // pred_check_branch
    %17 = sbr.rel (0) target = $region9
  $region8: #{dqn_forward.1} parent=0 // pred_region
    _
  $region9: #{dqn_forward.1} parent=0 // pred_fallthru
    _
  // Predicated region
  $region10: #{dqn_forward.1} parent=0 // pred_check
    _
  $region11: #{dqn_forward.1} parent=0 // pred_check_branch
    %19 = sbr.rel (0) target = $region13
  $region12: #{dqn_forward.1} parent=0 // pred_region
    _
  $region13: #{dqn_forward.1} parent=0 // pred_fallthru
    _
  // Predicated region
  $region14: #{dqn_forward.1} parent=0 // pred_check
    _
  $region15: #{dqn_forward.1} parent=0 // pred_check_branch
    %21 = sbr.rel (0) target = $region17
  $region16: #{dqn_forward.1} parent=0 // pred_region
    _
  $region17: #{dqn_forward.1} parent=0 // pred_fallthru
    _
  // Predicated region
  $region18: #{dqn_forward.1} parent=0 // pred_check
    _
  $region19: #{dqn_forward.1} parent=0 // pred_check_branch
    %23 = sbr.rel (0) target = $region21
  $region20: #{dqn_forward.1} parent=0 // pred_region
    _
  $region21: #{dqn_forward.1} parent=0 // pred_fallthru
    _
  // Predicated region
  $region22: #{dqn_forward.1} parent=0 // pred_check
    _
  $region23: #{dqn_forward.1} parent=0 // pred_check_branch
    %25 = sbr.rel (0) target = $region25
  $region24: #{dqn_forward.1} parent=0 // pred_region
    _
  $region25: #{dqn_forward.1} parent=0 // pred_fallthru
    _
  // Predicated region
  $region26: #{dqn_forward.1} parent=0 // pred_check
    _
  $region27: #{dqn_forward.1} parent=0 // pred_check_branch
    %27 = sbr.rel (0) target = $region29
  $region28: #{dqn_forward.1} parent=0 // pred_region
    _
  $region29: #{dqn_forward.1} parent=0 // pred_fallthru
    _
  // Predicated region
  $region30: #{dqn_forward.1} parent=0 // pred_check
    _
  $region31: #{dqn_forward.1} parent=0 // pred_check_branch
    %29 = sbr.rel (0) target = $region33
  $region32: #{dqn_forward.1} parent=0 // pred_region
    _
  $region33: #{dqn_forward.1} parent=0 // pred_fallthru
    _
  // Predicated region
  $region34: #{dqn_forward.1} parent=0 // pred_check
    _
  $region35: #{dqn_forward.1} parent=0 // pred_check_branch
    %31 = sbr.rel (0) target = $region37
  $region36: #{dqn_forward.1} parent=0 // pred_region
    _
  $region37: #{dqn_forward.1} parent=0 // pred_fallthru
    _
  %v33 = vld [vmem:[%s0] sm:$0xff]
  %v34 = vld [vmem:[%s1] sm:$0xff]
  %v35 = vld [vmem:[%s1 + $0x8] sm:$0xff]
  %v36 = vld [vmem:[%s1 + $0x10] sm:$0xff]
  %v37 = vld [vmem:[%s1 + $0x18] sm:$0xff]
  %v38 = vld [vmem:[%s1 + $0x20] sm:$0xff]
  %v39 = vld [vmem:[%s1 + $0x28] sm:$0xff]
  %v40 = vld [vmem:[%s1 + $0x30] sm:$0xff]
  %v41 = vld [vmem:[%s1 + $0x38] sm:$0xff]
  %v42 = vld [vmem:[%s1 + $0x40] sm:$0xff]
  %v43 = vld [vmem:[%s1 + $0x48] sm:$0xff]
  %v44 = vld [vmem:[%s1 + $0x50] sm:$0xff]
  %v45 = vld [vmem:[%s1 + $0x58] sm:$0xff]
  %v46 = vld [vmem:[%s1 + $0x60] sm:$0xff]
  %v47 = vld [vmem:[%s1 + $0x68] sm:$0xff]
  %v48 = vld [vmem:[%s1 + $0x70] sm:$0xff]
  %v49 = vld [vmem:[%s1 + $0x78] sm:$0xff]
  %v50 = vld [vmem:[%s1 + $0x80] sm:$0xff]
  %v51 = vld [vmem:[%s1 + $0x88] sm:$0xff]
  %v52 = vld [vmem:[%s1 + $0x90] sm:$0xff]
  %v53 = vld [vmem:[%s1 + $0x98] sm:$0xff]
  %v54 = vld [vmem:[%s1 + $0xa0] sm:$0xff]
  %v55 = vld [vmem:[%s1 + $0xa8] sm:$0xff]
  %v56 = vld [vmem:[%s1 + $0xb0] sm:$0xff]
  %v57 = vld [vmem:[%s1 + $0xb8] sm:$0xff]
  %v58 = vld [vmem:[%s1 + $0xc0] sm:$0xff]
  %v59 = vld [vmem:[%s1 + $0xc8] sm:$0xff]
  %v60 = vld [vmem:[%s1 + $0xd0] sm:$0xff]
  %v61 = vld [vmem:[%s1 + $0xd8] sm:$0xff]
  %v62 = vld [vmem:[%s1 + $0xe0] sm:$0xff]
  %v63 = vld [vmem:[%s1 + $0xe8] sm:$0xff]
  %v64 = vld [vmem:[%s1 + $0xf0] sm:$0xff]
  %v65 = vld [vmem:[%s1 + $0xf8] sm:$0xff]
  %v66 = vld [vmem:[%s1 + $0x100] sm:$0xff]
  %v67 = vld [vmem:[%s1 + $0x108] sm:$0xff]
  %v68 = vld [vmem:[%s1 + $0x110] sm:$0xff]
  %v69 = vld [vmem:[%s1 + $0x118] sm:$0xff]
  %v70 = vld [vmem:[%s1 + $0x120] sm:$0xff]
  %v71 = vld [vmem:[%s1 + $0x128] sm:$0xff]
  %v72 = vld [vmem:[%s1 + $0x130] sm:$0xff]
  %v73 = vld [vmem:[%s1 + $0x138] sm:$0xff]
  %v74 = vld [vmem:[%s1 + $0x140] sm:$0xff]
  %v75 = vld [vmem:[%s1 + $0x148] sm:$0xff]
  %v76 = vld [vmem:[%s1 + $0x150] sm:$0xff]
  %v77 = vld [vmem:[%s1 + $0x158] sm:$0xff]
  %v78 = vld [vmem:[%s1 + $0x160] sm:$0xff]
  %v79 = vld [vmem:[%s1 + $0x168] sm:$0xff]
  %v80 = vld [vmem:[%s1 + $0x170] sm:$0xff]
  %v81 = vld [vmem:[%s1 + $0x178] sm:$0xff]
  %v82 = vld [vmem:[%s1 + $0x180] sm:$0xff]
  %v83 = vld [vmem:[%s1 + $0x188] sm:$0xff]
  %v84 = vld [vmem:[%s1 + $0x190] sm:$0xff]
  %v85 = vld [vmem:[%s1 + $0x198] sm:$0xff]
  %v86 = vld [vmem:[%s1 + $0x1a0] sm:$0xff]
  %v87 = vld [vmem:[%s1 + $0x1a8] sm:$0xff]
  %v88 = vld [vmem:[%s1 + $0x1b0] sm:$0xff]
  %v89 = vld [vmem:[%s1 + $0x1b8] sm:$0xff]
  %v90 = vld [vmem:[%s1 + $0x1c0] sm:$0x11]
  %v91 = vld [vmem:[%s1 + $0x1c8] sm:$0x11]
  %v93 = vunpack.c.l.b16 %v33
  %v94 = vunpack.c.h.b16 %v33
  %v95 = vpack.c.b16 %v93, %v93
  %v96 = vpack.c.b16 %v94, %v94
  %v156 = vunpack.c.l.b16 %v34
  %v157 = vunpack.c.h.b16 %v34
  %v158 = vunpack.c.l.b16 %v35
  %v159 = vunpack.c.h.b16 %v35
  %v160 = vunpack.c.l.b16 %v36
  %v161 = vunpack.c.h.b16 %v36
  %v162 = vunpack.c.l.b16 %v37
  %v163 = vunpack.c.h.b16 %v37
  %v164 = vunpack.c.l.b16 %v38
  %v165 = vunpack.c.h.b16 %v38
  %v166 = vunpack.c.l.b16 %v39
  %v167 = vunpack.c.h.b16 %v39
  %v168 = vunpack.c.l.b16 %v40
  %v169 = vunpack.c.h.b16 %v40
  %v170 = vunpack.c.l.b16 %v41
  %v171 = vunpack.c.h.b16 %v41
  %v172 = vunpack.c.l.b16 %v42
  %v173 = vunpack.c.h.b16 %v42
  %v174 = vunpack.c.l.b16 %v43
  %v175 = vunpack.c.h.b16 %v43
  %v176 = vunpack.c.l.b16 %v44
  %v177 = vunpack.c.h.b16 %v44
  %v178 = vunpack.c.l.b16 %v45
  %v179 = vunpack.c.h.b16 %v45
  %v180 = vunpack.c.l.b16 %v46
  %v181 = vunpack.c.h.b16 %v46
  %v182 = vunpack.c.l.b16 %v47
  %v183 = vunpack.c.h.b16 %v47
  %v184 = vunpack.c.l.b16 %v48
  %v185 = vunpack.c.h.b16 %v48
  %v186 = vunpack.c.l.b16 %v49
  %v187 = vunpack.c.h.b16 %v49
  %v188 = vunpack.c.l.b16 %v50
  %v189 = vunpack.c.h.b16 %v50
  %v190 = vunpack.c.l.b16 %v51
  %v191 = vunpack.c.h.b16 %v51
  %v192 = vunpack.c.l.b16 %v52
  %v193 = vunpack.c.h.b16 %v52
  %v194 = vunpack.c.l.b16 %v53
  %v195 = vunpack.c.h.b16 %v53
  %v196 = vunpack.c.l.b16 %v54
  %v197 = vunpack.c.h.b16 %v54
  %v198 = vunpack.c.l.b16 %v55
  %v199 = vunpack.c.h.b16 %v55
  %v200 = vunpack.c.l.b16 %v56
  %v201 = vunpack.c.h.b16 %v56
  %v202 = vunpack.c.l.b16 %v57
  %v203 = vunpack.c.h.b16 %v57
  %v204 = vunpack.c.l.b16 %v58
  %v205 = vunpack.c.h.b16 %v58
  %v206 = vunpack.c.l.b16 %v59
  %v207 = vunpack.c.h.b16 %v59
  %v208 = vunpack.c.l.b16 %v60
  %v209 = vunpack.c.h.b16 %v60
  %v210 = vunpack.c.l.b16 %v61
  %v211 = vunpack.c.h.b16 %v61
  %v212 = vunpack.c.l.b16 %v62
  %v213 = vunpack.c.h.b16 %v62
  %v214 = vunpack.c.l.b16 %v63
  %v215 = vunpack.c.h.b16 %v63
  %v216 = vunpack.c.l.b16 %v64
  %v217 = vunpack.c.h.b16 %v64
  %v218 = vunpack.c.l.b16 %v65
  %v219 = vunpack.c.h.b16 %v65
  %v220 = vunpack.c.l.b16 %v66
  %v221 = vunpack.c.h.b16 %v66
  %v222 = vunpack.c.l.b16 %v67
  %v223 = vunpack.c.h.b16 %v67
  %v224 = vunpack.c.l.b16 %v68
  %v225 = vunpack.c.h.b16 %v68
  %v226 = vunpack.c.l.b16 %v69
  %v227 = vunpack.c.h.b16 %v69
  %v228 = vunpack.c.l.b16 %v70
  %v229 = vunpack.c.h.b16 %v70
  %v230 = vunpack.c.l.b16 %v71
  %v231 = vunpack.c.h.b16 %v71
  %v232 = vunpack.c.l.b16 %v72
  %v233 = vunpack.c.h.b16 %v72
  %v234 = vunpack.c.l.b16 %v73
  %v235 = vunpack.c.h.b16 %v73
  %v236 = vunpack.c.l.b16 %v74
  %v237 = vunpack.c.h.b16 %v74
  %v238 = vunpack.c.l.b16 %v75
  %v239 = vunpack.c.h.b16 %v75
  %v240 = vunpack.c.l.b16 %v76
  %v241 = vunpack.c.h.b16 %v76
  %v242 = vunpack.c.l.b16 %v77
  %v243 = vunpack.c.h.b16 %v77
  %v244 = vunpack.c.l.b16 %v78
  %v245 = vunpack.c.h.b16 %v78
  %v246 = vunpack.c.l.b16 %v79
  %v247 = vunpack.c.h.b16 %v79
  %v248 = vunpack.c.l.b16 %v80
  %v249 = vunpack.c.h.b16 %v80
  %v250 = vunpack.c.l.b16 %v81
  %v251 = vunpack.c.h.b16 %v81
  %v252 = vunpack.c.l.b16 %v82
  %v253 = vunpack.c.h.b16 %v82
  %v254 = vunpack.c.l.b16 %v83
  %v255 = vunpack.c.h.b16 %v83
  %v256 = vunpack.c.l.b16 %v84
  %v257 = vunpack.c.h.b16 %v84
  %v258 = vunpack.c.l.b16 %v85
  %v259 = vunpack.c.h.b16 %v85
  %v260 = vunpack.c.l.b16 %v86
  %v261 = vunpack.c.h.b16 %v86
  %v262 = vunpack.c.l.b16 %v87
  %v263 = vunpack.c.h.b16 %v87
  %v264 = vunpack.c.l.b16 %v88
  %v265 = vunpack.c.h.b16 %v88
  %v266 = vunpack.c.l.b16 %v89
  %v267 = vunpack.c.h.b16 %v89
  %v268 = vunpack.c.l.b16 %v90
  %v269 = vunpack.c.h.b16 %v90
  %v270 = vunpack.c.l.b16 %v91
  %v271 = vunpack.c.h.b16 %v91
  %v272 = vpack.c.b16 %v160, %v156
  %v273 = vpack.c.b16 %v161, %v157
  %v274 = vpack.c.b16 %v162, %v158
  %v275 = vpack.c.b16 %v163, %v159
  %v276 = vpack.c.b16 %v168, %v164
  %v277 = vpack.c.b16 %v169, %v165
  %v278 = vpack.c.b16 %v170, %v166
  %v279 = vpack.c.b16 %v171, %v167
  %v280 = vpack.c.b16 %v176, %v172
  %v281 = vpack.c.b16 %v177, %v173
  %v282 = vpack.c.b16 %v178, %v174
  %v283 = vpack.c.b16 %v179, %v175
  %v284 = vpack.c.b16 %v184, %v180
  %v285 = vpack.c.b16 %v185, %v181
  %v286 = vpack.c.b16 %v186, %v182
  %v287 = vpack.c.b16 %v187, %v183
  %v288 = vpack.c.b16 %v192, %v188
  %v289 = vpack.c.b16 %v193, %v189
  %v290 = vpack.c.b16 %v194, %v190
  %v291 = vpack.c.b16 %v195, %v191
  %v292 = vpack.c.b16 %v200, %v196
  %v293 = vpack.c.b16 %v201, %v197
  %v294 = vpack.c.b16 %v202, %v198
  %v295 = vpack.c.b16 %v203, %v199
  %v296 = vpack.c.b16 %v208, %v204
  %v297 = vpack.c.b16 %v209, %v205
  %v298 = vpack.c.b16 %v210, %v206
  %v299 = vpack.c.b16 %v211, %v207
  %v300 = vpack.c.b16 %v216, %v212
  %v301 = vpack.c.b16 %v217, %v213
  %v302 = vpack.c.b16 %v218, %v214
  %v303 = vpack.c.b16 %v219, %v215
  %v304 = vpack.c.b16 %v224, %v220
  %v305 = vpack.c.b16 %v225, %v221
  %v306 = vpack.c.b16 %v226, %v222
  %v307 = vpack.c.b16 %v227, %v223
  %v308 = vpack.c.b16 %v232, %v228
  %v309 = vpack.c.b16 %v233, %v229
  %v310 = vpack.c.b16 %v234, %v230
  %v311 = vpack.c.b16 %v235, %v231
  %v312 = vpack.c.b16 %v240, %v236
  %v313 = vpack.c.b16 %v241, %v237
  %v314 = vpack.c.b16 %v242, %v238
  %v315 = vpack.c.b16 %v243, %v239
  %v316 = vpack.c.b16 %v248, %v244
  %v317 = vpack.c.b16 %v249, %v245
  %v318 = vpack.c.b16 %v250, %v246
  %v319 = vpack.c.b16 %v251, %v247
  %v320 = vpack.c.b16 %v256, %v252
  %v321 = vpack.c.b16 %v257, %v253
  %v322 = vpack.c.b16 %v258, %v254
  %v323 = vpack.c.b16 %v259, %v255
  %v324 = vpack.c.b16 %v264, %v260
  %v325 = vpack.c.b16 %v265, %v261
  %v326 = vpack.c.b16 %v266, %v262
  %v327 = vpack.c.b16 %v267, %v263
  %v328 = vpack.c.b16 %v268, %v268
  %v329 = vpack.c.b16 %v269, %v269
  %v330 = vpack.c.b16 %v270, %v270
  %v331 = vpack.c.b16 %v271, %v271
  %vm388 = vcmask 793600
  %v390 = vsel %vm388, %v96, 0
  %vm392 = vcmask 1040384
  %v393 = vsel 0, 4294967295, 65535
  %v394 = vsel %vm392, %v393, 0
  %v396 = vand.u32 %v328, %v394
  %v399 = vand.u32 %v329, %v394
  %v402 = vand.u32 %v330, %v394
  %v405 = vand.u32 %v331, %v394
  %407 = vmatprep.subr.bf16.mxu0 %v273
  %408 = vmatpush1.bf16.msra.mxu0 %v272
  %409 = vmatprep.subr.bf16.mxu0 %v277
  %410 = vmatpush1.bf16.msra.mxu0 %v276
  %411 = vmatprep.subr.bf16.mxu0 %v281
  %412 = vmatpush1.bf16.msra.mxu0 %v280
  %413 = vmatprep.subr.bf16.mxu0 %v285
  %414 = vmatpush1.bf16.msra.mxu0 %v284
  %415 = vmatprep.subr.bf16.mxu0 %v289
  %416 = vmatpush1.bf16.msra.mxu0 %v288
  %417 = vmatprep.subr.bf16.mxu0 %v293
  %418 = vmatpush1.bf16.msra.mxu0 %v292
  %419 = vmatprep.subr.bf16.mxu0 %v297
  %420 = vmatpush1.bf16.msra.mxu0 %v296
  %421 = vmatprep.subr.bf16.mxu0 %v301
  %422 = vmatpush1.bf16.msra.mxu0 %v300
  %423 = vmatprep.subr.bf16.mxu0 %v305
  %424 = vmatpush1.bf16.msra.mxu0 %v304
  %425 = vmatprep.subr.bf16.mxu0 %v309
  %426 = vmatpush1.bf16.msra.mxu0 %v308
  %427 = vmatprep.subr.bf16.mxu0 %v313
  %428 = vmatpush1.bf16.msra.mxu0 %v312
  %429 = vmatprep.subr.bf16.mxu0 %v317
  %430 = vmatpush1.bf16.msra.mxu0 %v316
  %431 = vmatprep.subr.bf16.mxu0 %v321
  %432 = vmatpush1.bf16.msra.mxu0 %v320
  %433 = vmatprep.subr.bf16.mxu0 %v325
  %434 = vmatpush1.bf16.msra.mxu0 %v324
  %435 = vmatprep.subr.bf16.mxu0 %v399
  %436 = vmatpush1.bf16.msra.mxu0 %v396
  %437 = vmatprep.subr.bf16.mxu0 0
  %438 = vmatpush1.bf16.msra.mxu0 0
  %439 = vmatprep.mubr.bf16.mxu0 %v390
  %440 = vmatmul.mubr.bf16.gmra.mrb[0].mxu0 %v95
  %v441 = vpop.f32.mrb[0].mxu0
  %v442 = vadd.f32 0.0, %v441
  %v443 = vpop.f32.mrb[0].mxu0
  %v444 = vadd.f32 0.0, %v443
  %v445 = vpop.f32.mrb[0].mxu0
  %v446 = vpop.f32.mrb[0].mxu0
  %447 = vdwg.mxu0
  %448 = vmatprep.subr.bf16.mxu0 %v275
  %449 = vmatpush1.bf16.msra.mxu0 %v274
  %450 = vmatprep.subr.bf16.mxu0 %v279
  %451 = vmatpush1.bf16.msra.mxu0 %v278
  %452 = vmatprep.subr.bf16.mxu0 %v283
  %453 = vmatpush1.bf16.msra.mxu0 %v282
  %454 = vmatprep.subr.bf16.mxu0 %v287
  %455 = vmatpush1.bf16.msra.mxu0 %v286
  %456 = vmatprep.subr.bf16.mxu0 %v291
  %457 = vmatpush1.bf16.msra.mxu0 %v290
  %458 = vmatprep.subr.bf16.mxu0 %v295
  %459 = vmatpush1.bf16.msra.mxu0 %v294
  %460 = vmatprep.subr.bf16.mxu0 %v299
  %461 = vmatpush1.bf16.msra.mxu0 %v298
  %462 = vmatprep.subr.bf16.mxu0 %v303
  %463 = vmatpush1.bf16.msra.mxu0 %v302
  %464 = vmatprep.subr.bf16.mxu0 %v307
  %465 = vmatpush1.bf16.msra.mxu0 %v306
  %466 = vmatprep.subr.bf16.mxu0 %v311
  %467 = vmatpush1.bf16.msra.mxu0 %v310
  %468 = vmatprep.subr.bf16.mxu0 %v315
  %469 = vmatpush1.bf16.msra.mxu0 %v314
  %470 = vmatprep.subr.bf16.mxu0 %v319
  %471 = vmatpush1.bf16.msra.mxu0 %v318
  %472 = vmatprep.subr.bf16.mxu0 %v323
  %473 = vmatpush1.bf16.msra.mxu0 %v322
  %474 = vmatprep.subr.bf16.mxu0 %v327
  %475 = vmatpush1.bf16.msra.mxu0 %v326
  %476 = vmatprep.subr.bf16.mxu0 %v405
  %477 = vmatpush1.bf16.msra.mxu0 %v402
  %478 = vmatprep.subr.bf16.mxu0 0
  %479 = vmatpush1.bf16.msra.mxu0 0
  %480 = vmatprep.mubr.bf16.mxu0 %v390
  %481 = vmatmul.mubr.bf16.gmra.mrb[0].mxu0 %v95
  %v482 = vpop.f32.mrb[0].mxu0
  %v483 = vadd.f32 0.0, %v482
  %v484 = vpop.f32.mrb[0].mxu0
  %v485 = vadd.f32 0.0, %v484
  %v486 = vpop.f32.mrb[0].mxu0
  %v487 = vpop.f32.mrb[0].mxu0
  %488 = vdwg.mxu0
  %s489 = scalar_lea.vmem %s1, 464
  %v490 = vld [vmem:[%s489] sm:$0xff]
  %v491 = vld [vmem:[%s489 + $0x8] sm:$0xff]
  %v492 = vld [vmem:[%s489 + $0x10] sm:$0xff]
  %v493 = vld [vmem:[%s489 + $0x18] sm:$0xff]
  %v494 = vld [vmem:[%s489 + $0x20] sm:$0xff]
  %v495 = vld [vmem:[%s489 + $0x28] sm:$0xff]
  %v496 = vld [vmem:[%s489 + $0x30] sm:$0xff]
  %v497 = vld [vmem:[%s489 + $0x38] sm:$0xff]
  %v498 = vld [vmem:[%s489 + $0x40] sm:$0xff]
  %v499 = vld [vmem:[%s489 + $0x48] sm:$0xff]
  %v500 = vld [vmem:[%s489 + $0x50] sm:$0xff]
  %v501 = vld [vmem:[%s489 + $0x58] sm:$0xff]
  %v502 = vld [vmem:[%s489 + $0x60] sm:$0xff]
  %v503 = vld [vmem:[%s489 + $0x68] sm:$0xff]
  %v504 = vld [vmem:[%s489 + $0x70] sm:$0xff]
  %v505 = vld [vmem:[%s489 + $0x78] sm:$0xff]
  %v506 = vld [vmem:[%s489 + $0x80] sm:$0xff]
  %v507 = vld [vmem:[%s489 + $0x88] sm:$0xff]
  %v508 = vld [vmem:[%s489 + $0x90] sm:$0xff]
  %v509 = vld [vmem:[%s489 + $0x98] sm:$0xff]
  %v510 = vld [vmem:[%s489 + $0xa0] sm:$0xff]
  %v511 = vld [vmem:[%s489 + $0xa8] sm:$0xff]
  %v512 = vld [vmem:[%s489 + $0xb0] sm:$0xff]
  %v513 = vld [vmem:[%s489 + $0xb8] sm:$0xff]
  %v514 = vld [vmem:[%s489 + $0xc0] sm:$0xff]
  %v515 = vld [vmem:[%s489 + $0xc8] sm:$0xff]
  %v516 = vld [vmem:[%s489 + $0xd0] sm:$0xff]
  %v517 = vld [vmem:[%s489 + $0xd8] sm:$0xff]
  %v518 = vld [vmem:[%s489 + $0xe0] sm:$0xff]
  %v519 = vld [vmem:[%s489 + $0xe8] sm:$0xff]
  %v520 = vld [vmem:[%s489 + $0xf0] sm:$0xff]
  %v521 = vld [vmem:[%s489 + $0xf8] sm:$0xff]
  %v522 = vld [vmem:[%s489 + $0x100] sm:$0xff]
  %v523 = vld [vmem:[%s489 + $0x108] sm:$0xff]
  %v524 = vld [vmem:[%s489 + $0x110] sm:$0xff]
  %v525 = vld [vmem:[%s489 + $0x118] sm:$0xff]
  %v526 = vld [vmem:[%s489 + $0x120] sm:$0xff]
  %v527 = vld [vmem:[%s489 + $0x128] sm:$0xff]
  %v528 = vld [vmem:[%s489 + $0x130] sm:$0xff]
  %v529 = vld [vmem:[%s489 + $0x138] sm:$0xff]
  %v530 = vld [vmem:[%s489 + $0x140] sm:$0xff]
  %v531 = vld [vmem:[%s489 + $0x148] sm:$0xff]
  %v532 = vld [vmem:[%s489 + $0x150] sm:$0xff]
  %v533 = vld [vmem:[%s489 + $0x158] sm:$0xff]
  %v534 = vld [vmem:[%s489 + $0x160] sm:$0xff]
  %v535 = vld [vmem:[%s489 + $0x168] sm:$0xff]
  %v536 = vld [vmem:[%s489 + $0x170] sm:$0xff]
  %v537 = vld [vmem:[%s489 + $0x178] sm:$0xff]
  %v538 = vld [vmem:[%s489 + $0x180] sm:$0xff]
  %v539 = vld [vmem:[%s489 + $0x188] sm:$0xff]
  %v540 = vld [vmem:[%s489 + $0x190] sm:$0xff]
  %v541 = vld [vmem:[%s489 + $0x198] sm:$0xff]
  %v542 = vld [vmem:[%s489 + $0x1a0] sm:$0xff]
  %v543 = vld [vmem:[%s489 + $0x1a8] sm:$0xff]
  %v544 = vld [vmem:[%s489 + $0x1b0] sm:$0xff]
  %v545 = vld [vmem:[%s489 + $0x1b8] sm:$0xff]
  %v546 = vld [vmem:[%s489 + $0x1c0] sm:$0x11]
  %v547 = vld [vmem:[%s489 + $0x1c8] sm:$0x11]
  %v606 = vunpack.c.l.b16 %v490
  %v607 = vunpack.c.h.b16 %v490
  %v608 = vunpack.c.l.b16 %v491
  %v609 = vunpack.c.h.b16 %v491
  %v610 = vunpack.c.l.b16 %v492
  %v611 = vunpack.c.h.b16 %v492
  %v612 = vunpack.c.l.b16 %v493
  %v613 = vunpack.c.h.b16 %v493
  %v614 = vunpack.c.l.b16 %v494
  %v615 = vunpack.c.h.b16 %v494
  %v616 = vunpack.c.l.b16 %v495
  %v617 = vunpack.c.h.b16 %v495
  %v618 = vunpack.c.l.b16 %v496
  %v619 = vunpack.c.h.b16 %v496
  %v620 = vunpack.c.l.b16 %v497
  %v621 = vunpack.c.h.b16 %v497
  %v622 = vunpack.c.l.b16 %v498
  %v623 = vunpack.c.h.b16 %v498
  %v624 = vunpack.c.l.b16 %v499
  %v625 = vunpack.c.h.b16 %v499
  %v626 = vunpack.c.l.b16 %v500
  %v627 = vunpack.c.h.b16 %v500
  %v628 = vunpack.c.l.b16 %v501
  %v629 = vunpack.c.h.b16 %v501
  %v630 = vunpack.c.l.b16 %v502
  %v631 = vunpack.c.h.b16 %v502
  %v632 = vunpack.c.l.b16 %v503
  %v633 = vunpack.c.h.b16 %v503
  %v634 = vunpack.c.l.b16 %v504
  %v635 = vunpack.c.h.b16 %v504
  %v636 = vunpack.c.l.b16 %v505
  %v637 = vunpack.c.h.b16 %v505
  %v638 = vunpack.c.l.b16 %v506
  %v639 = vunpack.c.h.b16 %v506
  %v640 = vunpack.c.l.b16 %v507
  %v641 = vunpack.c.h.b16 %v507
  %v642 = vunpack.c.l.b16 %v508
  %v643 = vunpack.c.h.b16 %v508
  %v644 = vunpack.c.l.b16 %v509
  %v645 = vunpack.c.h.b16 %v509
  %v646 = vunpack.c.l.b16 %v510
  %v647 = vunpack.c.h.b16 %v510
  %v648 = vunpack.c.l.b16 %v511
  %v649 = vunpack.c.h.b16 %v511
  %v650 = vunpack.c.l.b16 %v512
  %v651 = vunpack.c.h.b16 %v512
  %v652 = vunpack.c.l.b16 %v513
  %v653 = vunpack.c.h.b16 %v513
  %v654 = vunpack.c.l.b16 %v514
  %v655 = vunpack.c.h.b16 %v514
  %v656 = vunpack.c.l.b16 %v515
  %v657 = vunpack.c.h.b16 %v515
  %v658 = vunpack.c.l.b16 %v516
  %v659 = vunpack.c.h.b16 %v516
  %v660 = vunpack.c.l.b16 %v517
  %v661 = vunpack.c.h.b16 %v517
  %v662 = vunpack.c.l.b16 %v518
  %v663 = vunpack.c.h.b16 %v518
  %v664 = vunpack.c.l.b16 %v519
  %v665 = vunpack.c.h.b16 %v519
  %v666 = vunpack.c.l.b16 %v520
  %v667 = vunpack.c.h.b16 %v520
  %v668 = vunpack.c.l.b16 %v521
  %v669 = vunpack.c.h.b16 %v521
  %v670 = vunpack.c.l.b16 %v522
  %v671 = vunpack.c.h.b16 %v522
  %v672 = vunpack.c.l.b16 %v523
  %v673 = vunpack.c.h.b16 %v523
  %v674 = vunpack.c.l.b16 %v524
  %v675 = vunpack.c.h.b16 %v524
  %v676 = vunpack.c.l.b16 %v525
  %v677 = vunpack.c.h.b16 %v525
  %v678 = vunpack.c.l.b16 %v526
  %v679 = vunpack.c.h.b16 %v526
  %v680 = vunpack.c.l.b16 %v527
  %v681 = vunpack.c.h.b16 %v527
  %v682 = vunpack.c.l.b16 %v528
  %v683 = vunpack.c.h.b16 %v528
  %v684 = vunpack.c.l.b16 %v529
  %v685 = vunpack.c.h.b16 %v529
  %v686 = vunpack.c.l.b16 %v530
  %v687 = vunpack.c.h.b16 %v530
  %v688 = vunpack.c.l.b16 %v531
  %v689 = vunpack.c.h.b16 %v531
  %v690 = vunpack.c.l.b16 %v532
  %v691 = vunpack.c.h.b16 %v532
  %v692 = vunpack.c.l.b16 %v533
  %v693 = vunpack.c.h.b16 %v533
  %v694 = vunpack.c.l.b16 %v534
  %v695 = vunpack.c.h.b16 %v534
  %v696 = vunpack.c.l.b16 %v535
  %v697 = vunpack.c.h.b16 %v535
  %v698 = vunpack.c.l.b16 %v536
  %v699 = vunpack.c.h.b16 %v536
  %v700 = vunpack.c.l.b16 %v537
  %v701 = vunpack.c.h.b16 %v537
  %v702 = vunpack.c.l.b16 %v538
  %v703 = vunpack.c.h.b16 %v538
  %v704 = vunpack.c.l.b16 %v539
  %v705 = vunpack.c.h.b16 %v539
  %v706 = vunpack.c.l.b16 %v540
  %v707 = vunpack.c.h.b16 %v540
  %v708 = vunpack.c.l.b16 %v541
  %v709 = vunpack.c.h.b16 %v541
  %v710 = vunpack.c.l.b16 %v542
  %v711 = vunpack.c.h.b16 %v542
  %v712 = vunpack.c.l.b16 %v543
  %v713 = vunpack.c.h.b16 %v543
  %v714 = vunpack.c.l.b16 %v544
  %v715 = vunpack.c.h.b16 %v544
  %v716 = vunpack.c.l.b16 %v545
  %v717 = vunpack.c.h.b16 %v545
  %v718 = vunpack.c.l.b16 %v546
  %v719 = vunpack.c.h.b16 %v546
  %v720 = vunpack.c.l.b16 %v547
  %v721 = vunpack.c.h.b16 %v547
  %v722 = vpack.c.b16 %v610, %v606
  %v723 = vpack.c.b16 %v611, %v607
  %v724 = vpack.c.b16 %v612, %v608
  %v725 = vpack.c.b16 %v613, %v609
  %v726 = vpack.c.b16 %v618, %v614
  %v727 = vpack.c.b16 %v619, %v615
  %v728 = vpack.c.b16 %v620, %v616
  %v729 = vpack.c.b16 %v621, %v617
  %v730 = vpack.c.b16 %v626, %v622
  %v731 = vpack.c.b16 %v627, %v623
  %v732 = vpack.c.b16 %v628, %v624
  %v733 = vpack.c.b16 %v629, %v625
  %v734 = vpack.c.b16 %v634, %v630
  %v735 = vpack.c.b16 %v635, %v631
  %v736 = vpack.c.b16 %v636, %v632
  %v737 = vpack.c.b16 %v637, %v633
  %v738 = vpack.c.b16 %v642, %v638
  %v739 = vpack.c.b16 %v643, %v639
  %v740 = vpack.c.b16 %v644, %v640
  %v741 = vpack.c.b16 %v645, %v641
  %v742 = vpack.c.b16 %v650, %v646
  %v743 = vpack.c.b16 %v651, %v647
  %v744 = vpack.c.b16 %v652, %v648
  %v745 = vpack.c.b16 %v653, %v649
  %v746 = vpack.c.b16 %v658, %v654
  %v747 = vpack.c.b16 %v659, %v655
  %v748 = vpack.c.b16 %v660, %v656
  %v749 = vpack.c.b16 %v661, %v657
  %v750 = vpack.c.b16 %v666, %v662
  %v751 = vpack.c.b16 %v667, %v663
  %v752 = vpack.c.b16 %v668, %v664
  %v753 = vpack.c.b16 %v669, %v665
  %v754 = vpack.c.b16 %v674, %v670
  %v755 = vpack.c.b16 %v675, %v671
  %v756 = vpack.c.b16 %v676, %v672
  %v757 = vpack.c.b16 %v677, %v673
  %v758 = vpack.c.b16 %v682, %v678
  %v759 = vpack.c.b16 %v683, %v679
  %v760 = vpack.c.b16 %v684, %v680
  %v761 = vpack.c.b16 %v685, %v681
  %v762 = vpack.c.b16 %v690, %v686
  %v763 = vpack.c.b16 %v691, %v687
  %v764 = vpack.c.b16 %v692, %v688
  %v765 = vpack.c.b16 %v693, %v689
  %v766 = vpack.c.b16 %v698, %v694
  %v767 = vpack.c.b16 %v699, %v695
  %v768 = vpack.c.b16 %v700, %v696
  %v769 = vpack.c.b16 %v701, %v697
  %v770 = vpack.c.b16 %v706, %v702
  %v771 = vpack.c.b16 %v707, %v703
  %v772 = vpack.c.b16 %v708, %v704
  %v773 = vpack.c.b16 %v709, %v705
  %v774 = vpack.c.b16 %v714, %v710
  %v775 = vpack.c.b16 %v715, %v711
  %v776 = vpack.c.b16 %v716, %v712
  %v777 = vpack.c.b16 %v717, %v713
  %v778 = vpack.c.b16 %v718, %v718
  %v779 = vpack.c.b16 %v719, %v719
  %v780 = vpack.c.b16 %v720, %v720
  %v781 = vpack.c.b16 %v721, %v721
  %v839 = vand.u32 %v778, %v394
  %v842 = vand.u32 %v779, %v394
  %v845 = vand.u32 %v780, %v394
  %v848 = vand.u32 %v781, %v394
  %850 = vmatprep.subr.bf16.mxu0 %v723
  %851 = vmatpush1.bf16.msra.mxu0 %v722
  %852 = vmatprep.subr.bf16.mxu0 %v727
  %853 = vmatpush1.bf16.msra.mxu0 %v726
  %854 = vmatprep.subr.bf16.mxu0 %v731
  %855 = vmatpush1.bf16.msra.mxu0 %v730
  %856 = vmatprep.subr.bf16.mxu0 %v735
  %857 = vmatpush1.bf16.msra.mxu0 %v734
  %858 = vmatprep.subr.bf16.mxu0 %v739
  %859 = vmatpush1.bf16.msra.mxu0 %v738
  %860 = vmatprep.subr.bf16.mxu0 %v743
  %861 = vmatpush1.bf16.msra.mxu0 %v742
  %862 = vmatprep.subr.bf16.mxu0 %v747
  %863 = vmatpush1.bf16.msra.mxu0 %v746
  %864 = vmatprep.subr.bf16.mxu0 %v751
  %865 = vmatpush1.bf16.msra.mxu0 %v750
  %866 = vmatprep.subr.bf16.mxu0 %v755
  %867 = vmatpush1.bf16.msra.mxu0 %v754
  %868 = vmatprep.subr.bf16.mxu0 %v759
  %869 = vmatpush1.bf16.msra.mxu0 %v758
  %870 = vmatprep.subr.bf16.mxu0 %v763
  %871 = vmatpush1.bf16.msra.mxu0 %v762
  %872 = vmatprep.subr.bf16.mxu0 %v767
  %873 = vmatpush1.bf16.msra.mxu0 %v766
  %874 = vmatprep.subr.bf16.mxu0 %v771
  %875 = vmatpush1.bf16.msra.mxu0 %v770
  %876 = vmatprep.subr.bf16.mxu0 %v775
  %877 = vmatpush1.bf16.msra.mxu0 %v774
  %878 = vmatprep.subr.bf16.mxu0 %v842
  %879 = vmatpush1.bf16.msra.mxu0 %v839
  %880 = vmatprep.subr.bf16.mxu0 0
  %881 = vmatpush1.bf16.msra.mxu0 0
  %882 = vmatprep.mubr.bf16.mxu0 %v390
  %883 = vmatmul.mubr.bf16.gmra.mrb[0].mxu0 %v95
  %v884 = vpop.f32.mrb[0].mxu0
  %v885 = vadd.f32 0.0, %v884
  %v886 = vpop.f32.mrb[0].mxu0
  %v887 = vadd.f32 0.0, %v886
  %v888 = vpop.f32.mrb[0].mxu0
  %v889 = vpop.f32.mrb[0].mxu0
  %890 = vdwg.mxu0
  %891 = vmatprep.subr.bf16.mxu0 %v725
  %892 = vmatpush1.bf16.msra.mxu0 %v724
  %893 = vmatprep.subr.bf16.mxu0 %v729
  %894 = vmatpush1.bf16.msra.mxu0 %v728
  %895 = vmatprep.subr.bf16.mxu0 %v733
  %896 = vmatpush1.bf16.msra.mxu0 %v732
  %897 = vmatprep.subr.bf16.mxu0 %v737
  %898 = vmatpush1.bf16.msra.mxu0 %v736
  %899 = vmatprep.subr.bf16.mxu0 %v741
  %900 = vmatpush1.bf16.msra.mxu0 %v740
  %901 = vmatprep.subr.bf16.mxu0 %v745
  %902 = vmatpush1.bf16.msra.mxu0 %v744
  %903 = vmatprep.subr.bf16.mxu0 %v749
  %904 = vmatpush1.bf16.msra.mxu0 %v748
  %905 = vmatprep.subr.bf16.mxu0 %v753
  %906 = vmatpush1.bf16.msra.mxu0 %v752
  %907 = vmatprep.subr.bf16.mxu0 %v757
  %908 = vmatpush1.bf16.msra.mxu0 %v756
  %909 = vmatprep.subr.bf16.mxu0 %v761
  %910 = vmatpush1.bf16.msra.mxu0 %v760
  %911 = vmatprep.subr.bf16.mxu0 %v765
  %912 = vmatpush1.bf16.msra.mxu0 %v764
  %913 = vmatprep.subr.bf16.mxu0 %v769
  %914 = vmatpush1.bf16.msra.mxu0 %v768
  %915 = vmatprep.subr.bf16.mxu0 %v773
  %916 = vmatpush1.bf16.msra.mxu0 %v772
  %917 = vmatprep.subr.bf16.mxu0 %v777
  %918 = vmatpush1.bf16.msra.mxu0 %v776
  %919 = vmatprep.subr.bf16.mxu0 %v848
  %920 = vmatpush1.bf16.msra.mxu0 %v845
  %921 = vmatprep.subr.bf16.mxu0 0
  %922 = vmatpush1.bf16.msra.mxu0 0
  %923 = vmatprep.mubr.bf16.mxu0 %v390
  %924 = vmatmul.mubr.bf16.gmra.mrb[0].mxu0 %v95
  %v925 = vpop.f32.mrb[0].mxu0
  %v926 = vadd.f32 0.0, %v925
  %v927 = vpop.f32.mrb[0].mxu0
  %v928 = vadd.f32 0.0, %v927
  %v929 = vpop.f32.mrb[0].mxu0
  %v930 = vpop.f32.mrb[0].mxu0
  %931 = vdwg.mxu0
  %v932 = vmax.f32 %v442, %v885
  %v933 = vmax.f32 %v444, %v887
  %v934 = vmax.f32 %v483, %v926
  %v935 = vmax.f32 %v485, %v928
  %s936 = scalar_lea.vmem %s1, 928
  %v937 = vld [vmem:[%s936] sm:$0xff]
  %v938 = vld [vmem:[%s936 + $0x8] sm:$0xff]
  %v939 = vld [vmem:[%s936 + $0x10] sm:$0xff]
  %v940 = vld [vmem:[%s936 + $0x18] sm:$0xff]
  %v941 = vld [vmem:[%s936 + $0x20] sm:$0xff]
  %v942 = vld [vmem:[%s936 + $0x28] sm:$0xff]
  %v943 = vld [vmem:[%s936 + $0x30] sm:$0xff]
  %v944 = vld [vmem:[%s936 + $0x38] sm:$0xff]
  %v945 = vld [vmem:[%s936 + $0x40] sm:$0xff]
  %v946 = vld [vmem:[%s936 + $0x48] sm:$0xff]
  %v947 = vld [vmem:[%s936 + $0x50] sm:$0xff]
  %v948 = vld [vmem:[%s936 + $0x58] sm:$0xff]
  %v949 = vld [vmem:[%s936 + $0x60] sm:$0xff]
  %v950 = vld [vmem:[%s936 + $0x68] sm:$0xff]
  %v951 = vld [vmem:[%s936 + $0x70] sm:$0xff]
  %v952 = vld [vmem:[%s936 + $0x78] sm:$0xff]
  %v953 = vld [vmem:[%s936 + $0x80] sm:$0xff]
  %v954 = vld [vmem:[%s936 + $0x88] sm:$0xff]
  %v955 = vld [vmem:[%s936 + $0x90] sm:$0xff]
  %v956 = vld [vmem:[%s936 + $0x98] sm:$0xff]
  %v957 = vld [vmem:[%s936 + $0xa0] sm:$0xff]
  %v958 = vld [vmem:[%s936 + $0xa8] sm:$0xff]
  %v959 = vld [vmem:[%s936 + $0xb0] sm:$0xff]
  %v960 = vld [vmem:[%s936 + $0xb8] sm:$0xff]
  %v961 = vld [vmem:[%s936 + $0xc0] sm:$0xff]
  %v962 = vld [vmem:[%s936 + $0xc8] sm:$0xff]
  %v963 = vld [vmem:[%s936 + $0xd0] sm:$0xff]
  %v964 = vld [vmem:[%s936 + $0xd8] sm:$0xff]
  %v965 = vld [vmem:[%s936 + $0xe0] sm:$0xff]
  %v966 = vld [vmem:[%s936 + $0xe8] sm:$0xff]
  %v967 = vld [vmem:[%s936 + $0xf0] sm:$0xff]
  %v968 = vld [vmem:[%s936 + $0xf8] sm:$0xff]
  %v969 = vld [vmem:[%s936 + $0x100] sm:$0xff]
  %v970 = vld [vmem:[%s936 + $0x108] sm:$0xff]
  %v971 = vld [vmem:[%s936 + $0x110] sm:$0xff]
  %v972 = vld [vmem:[%s936 + $0x118] sm:$0xff]
  %v973 = vld [vmem:[%s936 + $0x120] sm:$0xff]
  %v974 = vld [vmem:[%s936 + $0x128] sm:$0xff]
  %v975 = vld [vmem:[%s936 + $0x130] sm:$0xff]
  %v976 = vld [vmem:[%s936 + $0x138] sm:$0xff]
  %v977 = vld [vmem:[%s936 + $0x140] sm:$0xff]
  %v978 = vld [vmem:[%s936 + $0x148] sm:$0xff]
  %v979 = vld [vmem:[%s936 + $0x150] sm:$0xff]
  %v980 = vld [vmem:[%s936 + $0x158] sm:$0xff]
  %v981 = vld [vmem:[%s936 + $0x160] sm:$0xff]
  %v982 = vld [vmem:[%s936 + $0x168] sm:$0xff]
  %v983 = vld [vmem:[%s936 + $0x170] sm:$0xff]
  %v984 = vld [vmem:[%s936 + $0x178] sm:$0xff]
  %v985 = vld [vmem:[%s936 + $0x180] sm:$0xff]
  %v986 = vld [vmem:[%s936 + $0x188] sm:$0xff]
  %v987 = vld [vmem:[%s936 + $0x190] sm:$0xff]
  %v988 = vld [vmem:[%s936 + $0x198] sm:$0xff]
  %v989 = vld [vmem:[%s936 + $0x1a0] sm:$0xff]
  %v990 = vld [vmem:[%s936 + $0x1a8] sm:$0xff]
  %v991 = vld [vmem:[%s936 + $0x1b0] sm:$0xff]
  %v992 = vld [vmem:[%s936 + $0x1b8] sm:$0xff]
  %v993 = vld [vmem:[%s936 + $0x1c0] sm:$0x11]
  %v994 = vld [vmem:[%s936 + $0x1c8] sm:$0x11]
  %v1053 = vunpack.c.l.b16 %v937
  %v1054 = vunpack.c.h.b16 %v937
  %v1055 = vunpack.c.l.b16 %v938
  %v1056 = vunpack.c.h.b16 %v938
  %v1057 = vunpack.c.l.b16 %v939
  %v1058 = vunpack.c.h.b16 %v939
  %v1059 = vunpack.c.l.b16 %v940
  %v1060 = vunpack.c.h.b16 %v940
  %v1061 = vunpack.c.l.b16 %v941
  %v1062 = vunpack.c.h.b16 %v941
  %v1063 = vunpack.c.l.b16 %v942
  %v1064 = vunpack.c.h.b16 %v942
  %v1065 = vunpack.c.l.b16 %v943
  %v1066 = vunpack.c.h.b16 %v943
  %v1067 = vunpack.c.l.b16 %v944
  %v1068 = vunpack.c.h.b16 %v944
  %v1069 = vunpack.c.l.b16 %v945
  %v1070 = vunpack.c.h.b16 %v945
  %v1071 = vunpack.c.l.b16 %v946
  %v1072 = vunpack.c.h.b16 %v946
  %v1073 = vunpack.c.l.b16 %v947
  %v1074 = vunpack.c.h.b16 %v947
  %v1075 = vunpack.c.l.b16 %v948
  %v1076 = vunpack.c.h.b16 %v948
  %v1077 = vunpack.c.l.b16 %v949
  %v1078 = vunpack.c.h.b16 %v949
  %v1079 = vunpack.c.l.b16 %v950
  %v1080 = vunpack.c.h.b16 %v950
  %v1081 = vunpack.c.l.b16 %v951
  %v1082 = vunpack.c.h.b16 %v951
  %v1083 = vunpack.c.l.b16 %v952
  %v1084 = vunpack.c.h.b16 %v952
  %v1085 = vunpack.c.l.b16 %v953
  %v1086 = vunpack.c.h.b16 %v953
  %v1087 = vunpack.c.l.b16 %v954
  %v1088 = vunpack.c.h.b16 %v954
  %v1089 = vunpack.c.l.b16 %v955
  %v1090 = vunpack.c.h.b16 %v955
  %v1091 = vunpack.c.l.b16 %v956
  %v1092 = vunpack.c.h.b16 %v956
  %v1093 = vunpack.c.l.b16 %v957
  %v1094 = vunpack.c.h.b16 %v957
  %v1095 = vunpack.c.l.b16 %v958
  %v1096 = vunpack.c.h.b16 %v958
  %v1097 = vunpack.c.l.b16 %v959
  %v1098 = vunpack.c.h.b16 %v959
  %v1099 = vunpack.c.l.b16 %v960
  %v1100 = vunpack.c.h.b16 %v960
  %v1101 = vunpack.c.l.b16 %v961
  %v1102 = vunpack.c.h.b16 %v961
  %v1103 = vunpack.c.l.b16 %v962
  %v1104 = vunpack.c.h.b16 %v962
  %v1105 = vunpack.c.l.b16 %v963
  %v1106 = vunpack.c.h.b16 %v963
  %v1107 = vunpack.c.l.b16 %v964
  %v1108 = vunpack.c.h.b16 %v964
  %v1109 = vunpack.c.l.b16 %v965
  %v1110 = vunpack.c.h.b16 %v965
  %v1111 = vunpack.c.l.b16 %v966
  %v1112 = vunpack.c.h.b16 %v966
  %v1113 = vunpack.c.l.b16 %v967
  %v1114 = vunpack.c.h.b16 %v967
  %v1115 = vunpack.c.l.b16 %v968
  %v1116 = vunpack.c.h.b16 %v968
  %v1117 = vunpack.c.l.b16 %v969
  %v1118 = vunpack.c.h.b16 %v969
  %v1119 = vunpack.c.l.b16 %v970
  %v1120 = vunpack.c.h.b16 %v970
  %v1121 = vunpack.c.l.b16 %v971
  %v1122 = vunpack.c.h.b16 %v971
  %v1123 = vunpack.c.l.b16 %v972
  %v1124 = vunpack.c.h.b16 %v972
  %v1125 = vunpack.c.l.b16 %v973
  %v1126 = vunpack.c.h.b16 %v973
  %v1127 = vunpack.c.l.b16 %v974
  %v1128 = vunpack.c.h.b16 %v974
  %v1129 = vunpack.c.l.b16 %v975
  %v1130 = vunpack.c.h.b16 %v975
  %v1131 = vunpack.c.l.b16 %v976
  %v1132 = vunpack.c.h.b16 %v976
  %v1133 = vunpack.c.l.b16 %v977
  %v1134 = vunpack.c.h.b16 %v977
  %v1135 = vunpack.c.l.b16 %v978
  %v1136 = vunpack.c.h.b16 %v978
  %v1137 = vunpack.c.l.b16 %v979
  %v1138 = vunpack.c.h.b16 %v979
  %v1139 = vunpack.c.l.b16 %v980
  %v1140 = vunpack.c.h.b16 %v980
  %v1141 = vunpack.c.l.b16 %v981
  %v1142 = vunpack.c.h.b16 %v981
  %v1143 = vunpack.c.l.b16 %v982
  %v1144 = vunpack.c.h.b16 %v982
  %v1145 = vunpack.c.l.b16 %v983
  %v1146 = vunpack.c.h.b16 %v983
  %v1147 = vunpack.c.l.b16 %v984
  %v1148 = vunpack.c.h.b16 %v984
  %v1149 = vunpack.c.l.b16 %v985
  %v1150 = vunpack.c.h.b16 %v985
  %v1151 = vunpack.c.l.b16 %v986
  %v1152 = vunpack.c.h.b16 %v986
  %v1153 = vunpack.c.l.b16 %v987
  %v1154 = vunpack.c.h.b16 %v987
  %v1155 = vunpack.c.l.b16 %v988
  %v1156 = vunpack.c.h.b16 %v988
  %v1157 = vunpack.c.l.b16 %v989
  %v1158 = vunpack.c.h.b16 %v989
  %v1159 = vunpack.c.l.b16 %v990
  %v1160 = vunpack.c.h.b16 %v990
  %v1161 = vunpack.c.l.b16 %v991
  %v1162 = vunpack.c.h.b16 %v991
  %v1163 = vunpack.c.l.b16 %v992
  %v1164 = vunpack.c.h.b16 %v992
  %v1165 = vunpack.c.l.b16 %v993
  %v1166 = vunpack.c.h.b16 %v993
  %v1167 = vunpack.c.l.b16 %v994
  %v1168 = vunpack.c.h.b16 %v994
  %v1169 = vpack.c.b16 %v1057, %v1053
  %v1170 = vpack.c.b16 %v1058, %v1054
  %v1171 = vpack.c.b16 %v1059, %v1055
  %v1172 = vpack.c.b16 %v1060, %v1056
  %v1173 = vpack.c.b16 %v1065, %v1061
  %v1174 = vpack.c.b16 %v1066, %v1062
  %v1175 = vpack.c.b16 %v1067, %v1063
  %v1176 = vpack.c.b16 %v1068, %v1064
  %v1177 = vpack.c.b16 %v1073, %v1069
  %v1178 = vpack.c.b16 %v1074, %v1070
  %v1179 = vpack.c.b16 %v1075, %v1071
  %v1180 = vpack.c.b16 %v1076, %v1072
  %v1181 = vpack.c.b16 %v1081, %v1077
  %v1182 = vpack.c.b16 %v1082, %v1078
  %v1183 = vpack.c.b16 %v1083, %v1079
  %v1184 = vpack.c.b16 %v1084, %v1080
  %v1185 = vpack.c.b16 %v1089, %v1085
  %v1186 = vpack.c.b16 %v1090, %v1086
  %v1187 = vpack.c.b16 %v1091, %v1087
  %v1188 = vpack.c.b16 %v1092, %v1088
  %v1189 = vpack.c.b16 %v1097, %v1093
  %v1190 = vpack.c.b16 %v1098, %v1094
  %v1191 = vpack.c.b16 %v1099, %v1095
  %v1192 = vpack.c.b16 %v1100, %v1096
  %v1193 = vpack.c.b16 %v1105, %v1101
  %v1194 = vpack.c.b16 %v1106, %v1102
  %v1195 = vpack.c.b16 %v1107, %v1103
  %v1196 = vpack.c.b16 %v1108, %v1104
  %v1197 = vpack.c.b16 %v1113, %v1109
  %v1198 = vpack.c.b16 %v1114, %v1110
  %v1199 = vpack.c.b16 %v1115, %v1111
  %v1200 = vpack.c.b16 %v1116, %v1112
  %v1201 = vpack.c.b16 %v1121, %v1117
  %v1202 = vpack.c.b16 %v1122, %v1118
  %v1203 = vpack.c.b16 %v1123, %v1119
  %v1204 = vpack.c.b16 %v1124, %v1120
  %v1205 = vpack.c.b16 %v1129, %v1125
  %v1206 = vpack.c.b16 %v1130, %v1126
  %v1207 = vpack.c.b16 %v1131, %v1127
  %v1208 = vpack.c.b16 %v1132, %v1128
  %v1209 = vpack.c.b16 %v1137, %v1133
  %v1210 = vpack.c.b16 %v1138, %v1134
  %v1211 = vpack.c.b16 %v1139, %v1135
  %v1212 = vpack.c.b16 %v1140, %v1136
  %v1213 = vpack.c.b16 %v1145, %v1141
  %v1214 = vpack.c.b16 %v1146, %v1142
  %v1215 = vpack.c.b16 %v1147, %v1143
  %v1216 = vpack.c.b16 %v1148, %v1144
  %v1217 = vpack.c.b16 %v1153, %v1149
  %v1218 = vpack.c.b16 %v1154, %v1150
  %v1219 = vpack.c.b16 %v1155, %v1151
  %v1220 = vpack.c.b16 %v1156, %v1152
  %v1221 = vpack.c.b16 %v1161, %v1157
  %v1222 = vpack.c.b16 %v1162, %v1158
  %v1223 = vpack.c.b16 %v1163, %v1159
  %v1224 = vpack.c.b16 %v1164, %v1160
  %v1225 = vpack.c.b16 %v1165, %v1165
  %v1226 = vpack.c.b16 %v1166, %v1166
  %v1227 = vpack.c.b16 %v1167, %v1167
  %v1228 = vpack.c.b16 %v1168, %v1168
  %v1286 = vand.u32 %v1225, %v394
  %v1289 = vand.u32 %v1226, %v394
  %v1292 = vand.u32 %v1227, %v394
  %v1295 = vand.u32 %v1228, %v394
  %1297 = vmatprep.subr.bf16.mxu0 %v1170
  %1298 = vmatpush1.bf16.msra.mxu0 %v1169
  %1299 = vmatprep.subr.bf16.mxu0 %v1174
  %1300 = vmatpush1.bf16.msra.mxu0 %v1173
  %1301 = vmatprep.subr.bf16.mxu0 %v1178
  %1302 = vmatpush1.bf16.msra.mxu0 %v1177
  %1303 = vmatprep.subr.bf16.mxu0 %v1182
  %1304 = vmatpush1.bf16.msra.mxu0 %v1181
  %1305 = vmatprep.subr.bf16.mxu0 %v1186
  %1306 = vmatpush1.bf16.msra.mxu0 %v1185
  %1307 = vmatprep.subr.bf16.mxu0 %v1190
  %1308 = vmatpush1.bf16.msra.mxu0 %v1189
  %1309 = vmatprep.subr.bf16.mxu0 %v1194
  %1310 = vmatpush1.bf16.msra.mxu0 %v1193
  %1311 = vmatprep.subr.bf16.mxu0 %v1198
  %1312 = vmatpush1.bf16.msra.mxu0 %v1197
  %1313 = vmatprep.subr.bf16.mxu0 %v1202
  %1314 = vmatpush1.bf16.msra.mxu0 %v1201
  %1315 = vmatprep.subr.bf16.mxu0 %v1206
  %1316 = vmatpush1.bf16.msra.mxu0 %v1205
  %1317 = vmatprep.subr.bf16.mxu0 %v1210
  %1318 = vmatpush1.bf16.msra.mxu0 %v1209
  %1319 = vmatprep.subr.bf16.mxu0 %v1214
  %1320 = vmatpush1.bf16.msra.mxu0 %v1213
  %1321 = vmatprep.subr.bf16.mxu0 %v1218
  %1322 = vmatpush1.bf16.msra.mxu0 %v1217
  %1323 = vmatprep.subr.bf16.mxu0 %v1222
  %1324 = vmatpush1.bf16.msra.mxu0 %v1221
  %1325 = vmatprep.subr.bf16.mxu0 %v1289
  %1326 = vmatpush1.bf16.msra.mxu0 %v1286
  %1327 = vmatprep.subr.bf16.mxu0 0
  %1328 = vmatpush1.bf16.msra.mxu0 0
  %1329 = vmatprep.mubr.bf16.mxu0 %v390
  %1330 = vmatmul.mubr.bf16.gmra.mrb[0].mxu0 %v95
  %v1331 = vpop.f32.mrb[0].mxu0
  %v1332 = vadd.f32 0.0, %v1331
  %v1333 = vpop.f32.mrb[0].mxu0
  %v1334 = vadd.f32 0.0, %v1333
  %v1335 = vpop.f32.mrb[0].mxu0
  %v1336 = vpop.f32.mrb[0].mxu0
  %1337 = vdwg.mxu0
  %1338 = vmatprep.subr.bf16.mxu0 %v1172
  %1339 = vmatpush1.bf16.msra.mxu0 %v1171
  %1340 = vmatprep.subr.bf16.mxu0 %v1176
  %1341 = vmatpush1.bf16.msra.mxu0 %v1175
  %1342 = vmatprep.subr.bf16.mxu0 %v1180
  %1343 = vmatpush1.bf16.msra.mxu0 %v1179
  %1344 = vmatprep.subr.bf16.mxu0 %v1184
  %1345 = vmatpush1.bf16.msra.mxu0 %v1183
  %1346 = vmatprep.subr.bf16.mxu0 %v1188
  %1347 = vmatpush1.bf16.msra.mxu0 %v1187
  %1348 = vmatprep.subr.bf16.mxu0 %v1192
  %1349 = vmatpush1.bf16.msra.mxu0 %v1191
  %1350 = vmatprep.subr.bf16.mxu0 %v1196
  %1351 = vmatpush1.bf16.msra.mxu0 %v1195
  %1352 = vmatprep.subr.bf16.mxu0 %v1200
  %1353 = vmatpush1.bf16.msra.mxu0 %v1199
  %1354 = vmatprep.subr.bf16.mxu0 %v1204
  %1355 = vmatpush1.bf16.msra.mxu0 %v1203
  %1356 = vmatprep.subr.bf16.mxu0 %v1208
  %1357 = vmatpush1.bf16.msra.mxu0 %v1207
  %1358 = vmatprep.subr.bf16.mxu0 %v1212
  %1359 = vmatpush1.bf16.msra.mxu0 %v1211
  %1360 = vmatprep.subr.bf16.mxu0 %v1216
  %1361 = vmatpush1.bf16.msra.mxu0 %v1215
  %1362 = vmatprep.subr.bf16.mxu0 %v1220
  %1363 = vmatpush1.bf16.msra.mxu0 %v1219
  %1364 = vmatprep.subr.bf16.mxu0 %v1224
  %1365 = vmatpush1.bf16.msra.mxu0 %v1223
  %1366 = vmatprep.subr.bf16.mxu0 %v1295
  %1367 = vmatpush1.bf16.msra.mxu0 %v1292
  %1368 = vmatprep.subr.bf16.mxu0 0
  %1369 = vmatpush1.bf16.msra.mxu0 0
  %1370 = vmatprep.mubr.bf16.mxu0 %v390
  %1371 = vmatmul.mubr.bf16.gmra.mrb[0].mxu0 %v95
  %v1372 = vpop.f32.mrb[0].mxu0
  %v1373 = vadd.f32 0.0, %v1372
  %v1374 = vpop.f32.mrb[0].mxu0
  %v1375 = vadd.f32 0.0, %v1374
  %v1376 = vpop.f32.mrb[0].mxu0
  %v1377 = vpop.f32.mrb[0].mxu0
  %1378 = vdwg.mxu0
  %v1379 = vmax.f32 %v932, %v1332
  %v1380 = vmax.f32 %v933, %v1334
  %v1381 = vmax.f32 %v934, %v1373
  %v1382 = vmax.f32 %v935, %v1375
  %s1383 = scalar_lea.vmem %s1, 1392
  %v1384 = vld [vmem:[%s1383] sm:$0xff]
  %v1385 = vld [vmem:[%s1383 + $0x8] sm:$0xff]
  %v1386 = vld [vmem:[%s1383 + $0x10] sm:$0xff]
  %v1387 = vld [vmem:[%s1383 + $0x18] sm:$0xff]
  %v1388 = vld [vmem:[%s1383 + $0x20] sm:$0xff]
  %v1389 = vld [vmem:[%s1383 + $0x28] sm:$0xff]
  %v1390 = vld [vmem:[%s1383 + $0x30] sm:$0xff]
  %v1391 = vld [vmem:[%s1383 + $0x38] sm:$0xff]
  %v1392 = vld [vmem:[%s1383 + $0x40] sm:$0xff]
  %v1393 = vld [vmem:[%s1383 + $0x48] sm:$0xff]
  %v1394 = vld [vmem:[%s1383 + $0x50] sm:$0xff]
  %v1395 = vld [vmem:[%s1383 + $0x58] sm:$0xff]
  %v1396 = vld [vmem:[%s1383 + $0x60] sm:$0xff]
  %v1397 = vld [vmem:[%s1383 + $0x68] sm:$0xff]
  %v1398 = vld [vmem:[%s1383 + $0x70] sm:$0xff]
  %v1399 = vld [vmem:[%s1383 + $0x78] sm:$0xff]
  %v1400 = vld [vmem:[%s1383 + $0x80] sm:$0xff]
  %v1401 = vld [vmem:[%s1383 + $0x88] sm:$0xff]
  %v1402 = vld [vmem:[%s1383 + $0x90] sm:$0xff]
  %v1403 = vld [vmem:[%s1383 + $0x98] sm:$0xff]
  %v1404 = vld [vmem:[%s1383 + $0xa0] sm:$0xff]
  %v1405 = vld [vmem:[%s1383 + $0xa8] sm:$0xff]
  %v1406 = vld [vmem:[%s1383 + $0xb0] sm:$0xff]
  %v1407 = vld [vmem:[%s1383 + $0xb8] sm:$0xff]
  %v1408 = vld [vmem:[%s1383 + $0xc0] sm:$0xff]
  %v1409 = vld [vmem:[%s1383 + $0xc8] sm:$0xff]
  %v1410 = vld [vmem:[%s1383 + $0xd0] sm:$0xff]
  %v1411 = vld [vmem:[%s1383 + $0xd8] sm:$0xff]
  %v1412 = vld [vmem:[%s1383 + $0xe0] sm:$0xff]
  %v1413 = vld [vmem:[%s1383 + $0xe8] sm:$0xff]
  %v1414 = vld [vmem:[%s1383 + $0xf0] sm:$0xff]
  %v1415 = vld [vmem:[%s1383 + $0xf8] sm:$0xff]
  %v1416 = vld [vmem:[%s1383 + $0x100] sm:$0xff]
  %v1417 = vld [vmem:[%s1383 + $0x108] sm:$0xff]
  %v1418 = vld [vmem:[%s1383 + $0x110] sm:$0xff]
  %v1419 = vld [vmem:[%s1383 + $0x118] sm:$0xff]
  %v1420 = vld [vmem:[%s1383 + $0x120] sm:$0xff]
  %v1421 = vld [vmem:[%s1383 + $0x128] sm:$0xff]
  %v1422 = vld [vmem:[%s1383 + $0x130] sm:$0xff]
  %v1423 = vld [vmem:[%s1383 + $0x138] sm:$0xff]
  %v1424 = vld [vmem:[%s1383 + $0x140] sm:$0xff]
  %v1425 = vld [vmem:[%s1383 + $0x148] sm:$0xff]
  %v1426 = vld [vmem:[%s1383 + $0x150] sm:$0xff]
  %v1427 = vld [vmem:[%s1383 + $0x158] sm:$0xff]
  %v1428 = vld [vmem:[%s1383 + $0x160] sm:$0xff]
  %v1429 = vld [vmem:[%s1383 + $0x168] sm:$0xff]
  %v1430 = vld [vmem:[%s1383 + $0x170] sm:$0xff]
  %v1431 = vld [vmem:[%s1383 + $0x178] sm:$0xff]
  %v1432 = vld [vmem:[%s1383 + $0x180] sm:$0xff]
  %v1433 = vld [vmem:[%s1383 + $0x188] sm:$0xff]
  %v1434 = vld [vmem:[%s1383 + $0x190] sm:$0xff]
  %v1435 = vld [vmem:[%s1383 + $0x198] sm:$0xff]
  %v1436 = vld [vmem:[%s1383 + $0x1a0] sm:$0xff]
  %v1437 = vld [vmem:[%s1383 + $0x1a8] sm:$0xff]
  %v1438 = vld [vmem:[%s1383 + $0x1b0] sm:$0xff]
  %v1439 = vld [vmem:[%s1383 + $0x1b8] sm:$0xff]
  %v1440 = vld [vmem:[%s1383 + $0x1c0] sm:$0x11]
  %v1441 = vld [vmem:[%s1383 + $0x1c8] sm:$0x11]
  %v1500 = vunpack.c.l.b16 %v1384
  %v1501 = vunpack.c.h.b16 %v1384
  %v1502 = vunpack.c.l.b16 %v1385
  %v1503 = vunpack.c.h.b16 %v1385
  %v1504 = vunpack.c.l.b16 %v1386
  %v1505 = vunpack.c.h.b16 %v1386
  %v1506 = vunpack.c.l.b16 %v1387
  %v1507 = vunpack.c.h.b16 %v1387
  %v1508 = vunpack.c.l.b16 %v1388
  %v1509 = vunpack.c.h.b16 %v1388
  %v1510 = vunpack.c.l.b16 %v1389
  %v1511 = vunpack.c.h.b16 %v1389
  %v1512 = vunpack.c.l.b16 %v1390
  %v1513 = vunpack.c.h.b16 %v1390
  %v1514 = vunpack.c.l.b16 %v1391
  %v1515 = vunpack.c.h.b16 %v1391
  %v1516 = vunpack.c.l.b16 %v1392
  %v1517 = vunpack.c.h.b16 %v1392
  %v1518 = vunpack.c.l.b16 %v1393
  %v1519 = vunpack.c.h.b16 %v1393
  %v1520 = vunpack.c.l.b16 %v1394
  %v1521 = vunpack.c.h.b16 %v1394
  %v1522 = vunpack.c.l.b16 %v1395
  %v1523 = vunpack.c.h.b16 %v1395
  %v1524 = vunpack.c.l.b16 %v1396
  %v1525 = vunpack.c.h.b16 %v1396
  %v1526 = vunpack.c.l.b16 %v1397
  %v1527 = vunpack.c.h.b16 %v1397
  %v1528 = vunpack.c.l.b16 %v1398
  %v1529 = vunpack.c.h.b16 %v1398
  %v1530 = vunpack.c.l.b16 %v1399
  %v1531 = vunpack.c.h.b16 %v1399
  %v1532 = vunpack.c.l.b16 %v1400
  %v1533 = vunpack.c.h.b16 %v1400
  %v1534 = vunpack.c.l.b16 %v1401
  %v1535 = vunpack.c.h.b16 %v1401
  %v1536 = vunpack.c.l.b16 %v1402
  %v1537 = vunpack.c.h.b16 %v1402
  %v1538 = vunpack.c.l.b16 %v1403
  %v1539 = vunpack.c.h.b16 %v1403
  %v1540 = vunpack.c.l.b16 %v1404
  %v1541 = vunpack.c.h.b16 %v1404
  %v1542 = vunpack.c.l.b16 %v1405
  %v1543 = vunpack.c.h.b16 %v1405
  %v1544 = vunpack.c.l.b16 %v1406
  %v1545 = vunpack.c.h.b16 %v1406
  %v1546 = vunpack.c.l.b16 %v1407
  %v1547 = vunpack.c.h.b16 %v1407
  %v1548 = vunpack.c.l.b16 %v1408
  %v1549 = vunpack.c.h.b16 %v1408
  %v1550 = vunpack.c.l.b16 %v1409
  %v1551 = vunpack.c.h.b16 %v1409
  %v1552 = vunpack.c.l.b16 %v1410
  %v1553 = vunpack.c.h.b16 %v1410
  %v1554 = vunpack.c.l.b16 %v1411
  %v1555 = vunpack.c.h.b16 %v1411
  %v1556 = vunpack.c.l.b16 %v1412
  %v1557 = vunpack.c.h.b16 %v1412
  %v1558 = vunpack.c.l.b16 %v1413
  %v1559 = vunpack.c.h.b16 %v1413
  %v1560 = vunpack.c.l.b16 %v1414
  %v1561 = vunpack.c.h.b16 %v1414
  %v1562 = vunpack.c.l.b16 %v1415
  %v1563 = vunpack.c.h.b16 %v1415
  %v1564 = vunpack.c.l.b16 %v1416
  %v1565 = vunpack.c.h.b16 %v1416
  %v1566 = vunpack.c.l.b16 %v1417
  %v1567 = vunpack.c.h.b16 %v1417
  %v1568 = vunpack.c.l.b16 %v1418
  %v1569 = vunpack.c.h.b16 %v1418
  %v1570 = vunpack.c.l.b16 %v1419
  %v1571 = vunpack.c.h.b16 %v1419
  %v1572 = vunpack.c.l.b16 %v1420
  %v1573 = vunpack.c.h.b16 %v1420
  %v1574 = vunpack.c.l.b16 %v1421
  %v1575 = vunpack.c.h.b16 %v1421
  %v1576 = vunpack.c.l.b16 %v1422
  %v1577 = vunpack.c.h.b16 %v1422
  %v1578 = vunpack.c.l.b16 %v1423
  %v1579 = vunpack.c.h.b16 %v1423
  %v1580 = vunpack.c.l.b16 %v1424
  %v1581 = vunpack.c.h.b16 %v1424
  %v1582 = vunpack.c.l.b16 %v1425
  %v1583 = vunpack.c.h.b16 %v1425
  %v1584 = vunpack.c.l.b16 %v1426
  %v1585 = vunpack.c.h.b16 %v1426
  %v1586 = vunpack.c.l.b16 %v1427
  %v1587 = vunpack.c.h.b16 %v1427
  %v1588 = vunpack.c.l.b16 %v1428
  %v1589 = vunpack.c.h.b16 %v1428
  %v1590 = vunpack.c.l.b16 %v1429
  %v1591 = vunpack.c.h.b16 %v1429
  %v1592 = vunpack.c.l.b16 %v1430
  %v1593 = vunpack.c.h.b16 %v1430
  %v1594 = vunpack.c.l.b16 %v1431
  %v1595 = vunpack.c.h.b16 %v1431
  %v1596 = vunpack.c.l.b16 %v1432
  %v1597 = vunpack.c.h.b16 %v1432
  %v1598 = vunpack.c.l.b16 %v1433
  %v1599 = vunpack.c.h.b16 %v1433
  %v1600 = vunpack.c.l.b16 %v1434
  %v1601 = vunpack.c.h.b16 %v1434
  %v1602 = vunpack.c.l.b16 %v1435
  %v1603 = vunpack.c.h.b16 %v1435
  %v1604 = vunpack.c.l.b16 %v1436
  %v1605 = vunpack.c.h.b16 %v1436
  %v1606 = vunpack.c.l.b16 %v1437
  %v1607 = vunpack.c.h.b16 %v1437
  %v1608 = vunpack.c.l.b16 %v1438
  %v1609 = vunpack.c.h.b16 %v1438
  %v1610 = vunpack.c.l.b16 %v1439
  %v1611 = vunpack.c.h.b16 %v1439
  %v1612 = vunpack.c.l.b16 %v1440
  %v1613 = vunpack.c.h.b16 %v1440
  %v1614 = vunpack.c.l.b16 %v1441
  %v1615 = vunpack.c.h.b16 %v1441
  %v1616 = vpack.c.b16 %v1504, %v1500
  %v1617 = vpack.c.b16 %v1505, %v1501
  %v1618 = vpack.c.b16 %v1506, %v1502
  %v1619 = vpack.c.b16 %v1507, %v1503
  %v1620 = vpack.c.b16 %v1512, %v1508
  %v1621 = vpack.c.b16 %v1513, %v1509
  %v1622 = vpack.c.b16 %v1514, %v1510
  %v1623 = vpack.c.b16 %v1515, %v1511
  %v1624 = vpack.c.b16 %v1520, %v1516
  %v1625 = vpack.c.b16 %v1521, %v1517
  %v1626 = vpack.c.b16 %v1522, %v1518
  %v1627 = vpack.c.b16 %v1523, %v1519
  %v1628 = vpack.c.b16 %v1528, %v1524
  %v1629 = vpack.c.b16 %v1529, %v1525
  %v1630 = vpack.c.b16 %v1530, %v1526
  %v1631 = vpack.c.b16 %v1531, %v1527
  %v1632 = vpack.c.b16 %v1536, %v1532
  %v1633 = vpack.c.b16 %v1537, %v1533
  %v1634 = vpack.c.b16 %v1538, %v1534
  %v1635 = vpack.c.b16 %v1539, %v1535
  %v1636 = vpack.c.b16 %v1544, %v1540
  %v1637 = vpack.c.b16 %v1545, %v1541
  %v1638 = vpack.c.b16 %v1546, %v1542
  %v1639 = vpack.c.b16 %v1547, %v1543
  %v1640 = vpack.c.b16 %v1552, %v1548
  %v1641 = vpack.c.b16 %v1553, %v1549
  %v1642 = vpack.c.b16 %v1554, %v1550
  %v1643 = vpack.c.b16 %v1555, %v1551
  %v1644 = vpack.c.b16 %v1560, %v1556
  %v1645 = vpack.c.b16 %v1561, %v1557
  %v1646 = vpack.c.b16 %v1562, %v1558
  %v1647 = vpack.c.b16 %v1563, %v1559
  %v1648 = vpack.c.b16 %v1568, %v1564
  %v1649 = vpack.c.b16 %v1569, %v1565
  %v1650 = vpack.c.b16 %v1570, %v1566
  %v1651 = vpack.c.b16 %v1571, %v1567
  %v1652 = vpack.c.b16 %v1576, %v1572
  %v1653 = vpack.c.b16 %v1577, %v1573
  %v1654 = vpack.c.b16 %v1578, %v1574
  %v1655 = vpack.c.b16 %v1579, %v1575
  %v1656 = vpack.c.b16 %v1584, %v1580
  %v1657 = vpack.c.b16 %v1585, %v1581
  %v1658 = vpack.c.b16 %v1586, %v1582
  %v1659 = vpack.c.b16 %v1587, %v1583
  %v1660 = vpack.c.b16 %v1592, %v1588
  %v1661 = vpack.c.b16 %v1593, %v1589
  %v1662 = vpack.c.b16 %v1594, %v1590
  %v1663 = vpack.c.b16 %v1595, %v1591
  %v1664 = vpack.c.b16 %v1600, %v1596
  %v1665 = vpack.c.b16 %v1601, %v1597
  %v1666 = vpack.c.b16 %v1602, %v1598
  %v1667 = vpack.c.b16 %v1603, %v1599
  %v1668 = vpack.c.b16 %v1608, %v1604
  %v1669 = vpack.c.b16 %v1609, %v1605
  %v1670 = vpack.c.b16 %v1610, %v1606
  %v1671 = vpack.c.b16 %v1611, %v1607
  %v1672 = vpack.c.b16 %v1612, %v1612
  %v1673 = vpack.c.b16 %v1613, %v1613
  %v1674 = vpack.c.b16 %v1614, %v1614
  %v1675 = vpack.c.b16 %v1615, %v1615
  %v1733 = vand.u32 %v1672, %v394
  %v1736 = vand.u32 %v1673, %v394
  %v1739 = vand.u32 %v1674, %v394
  %v1742 = vand.u32 %v1675, %v394
  %1744 = vmatprep.subr.bf16.mxu0 %v1617
  %1745 = vmatpush1.bf16.msra.mxu0 %v1616
  %1746 = vmatprep.subr.bf16.mxu0 %v1621
  %1747 = vmatpush1.bf16.msra.mxu0 %v1620
  %1748 = vmatprep.subr.bf16.mxu0 %v1625
  %1749 = vmatpush1.bf16.msra.mxu0 %v1624
  %1750 = vmatprep.subr.bf16.mxu0 %v1629
  %1751 = vmatpush1.bf16.msra.mxu0 %v1628
  %1752 = vmatprep.subr.bf16.mxu0 %v1633
  %1753 = vmatpush1.bf16.msra.mxu0 %v1632
  %1754 = vmatprep.subr.bf16.mxu0 %v1637
  %1755 = vmatpush1.bf16.msra.mxu0 %v1636
  %1756 = vmatprep.subr.bf16.mxu0 %v1641
  %1757 = vmatpush1.bf16.msra.mxu0 %v1640
  %1758 = vmatprep.subr.bf16.mxu0 %v1645
  %1759 = vmatpush1.bf16.msra.mxu0 %v1644
  %1760 = vmatprep.subr.bf16.mxu0 %v1649
  %1761 = vmatpush1.bf16.msra.mxu0 %v1648
  %1762 = vmatprep.subr.bf16.mxu0 %v1653
  %1763 = vmatpush1.bf16.msra.mxu0 %v1652
  %1764 = vmatprep.subr.bf16.mxu0 %v1657
  %1765 = vmatpush1.bf16.msra.mxu0 %v1656
  %1766 = vmatprep.subr.bf16.mxu0 %v1661
  %1767 = vmatpush1.bf16.msra.mxu0 %v1660
  %1768 = vmatprep.subr.bf16.mxu0 %v1665
  %1769 = vmatpush1.bf16.msra.mxu0 %v1664
  %1770 = vmatprep.subr.bf16.mxu0 %v1669
  %1771 = vmatpush1.bf16.msra.mxu0 %v1668
  %1772 = vmatprep.subr.bf16.mxu0 %v1736
  %1773 = vmatpush1.bf16.msra.mxu0 %v1733
  %1774 = vmatprep.subr.bf16.mxu0 0
  %1775 = vmatpush1.bf16.msra.mxu0 0
  %1776 = vmatprep.mubr.bf16.mxu0 %v390
  %1777 = vmatmul.mubr.bf16.gmra.mrb[0].mxu0 %v95
  %v1778 = vpop.f32.mrb[0].mxu0
  %v1779 = vadd.f32 0.0, %v1778
  %v1780 = vpop.f32.mrb[0].mxu0
  %v1781 = vadd.f32 0.0, %v1780
  %v1782 = vpop.f32.mrb[0].mxu0
  %v1783 = vpop.f32.mrb[0].mxu0
  %1784 = vdwg.mxu0
  %1785 = vmatprep.subr.bf16.mxu0 %v1619
  %1786 = vmatpush1.bf16.msra.mxu0 %v1618
  %1787 = vmatprep.subr.bf16.mxu0 %v1623
  %1788 = vmatpush1.bf16.msra.mxu0 %v1622
  %1789 = vmatprep.subr.bf16.mxu0 %v1627
  %1790 = vmatpush1.bf16.msra.mxu0 %v1626
  %1791 = vmatprep.subr.bf16.mxu0 %v1631
  %1792 = vmatpush1.bf16.msra.mxu0 %v1630
  %1793 = vmatprep.subr.bf16.mxu0 %v1635
  %1794 = vmatpush1.bf16.msra.mxu0 %v1634
  %1795 = vmatprep.subr.bf16.mxu0 %v1639
  %1796 = vmatpush1.bf16.msra.mxu0 %v1638
  %1797 = vmatprep.subr.bf16.mxu0 %v1643
  %1798 = vmatpush1.bf16.msra.mxu0 %v1642
  %1799 = vmatprep.subr.bf16.mxu0 %v1647
  %1800 = vmatpush1.bf16.msra.mxu0 %v1646
  %1801 = vmatprep.subr.bf16.mxu0 %v1651
  %1802 = vmatpush1.bf16.msra.mxu0 %v1650
  %1803 = vmatprep.subr.bf16.mxu0 %v1655
  %1804 = vmatpush1.bf16.msra.mxu0 %v1654
  %1805 = vmatprep.subr.bf16.mxu0 %v1659
  %1806 = vmatpush1.bf16.msra.mxu0 %v1658
  %1807 = vmatprep.subr.bf16.mxu0 %v1663
  %1808 = vmatpush1.bf16.msra.mxu0 %v1662
  %1809 = vmatprep.subr.bf16.mxu0 %v1667
  %1810 = vmatpush1.bf16.msra.mxu0 %v1666
  %1811 = vmatprep.subr.bf16.mxu0 %v1671
  %1812 = vmatpush1.bf16.msra.mxu0 %v1670
  %1813 = vmatprep.subr.bf16.mxu0 %v1742
  %1814 = vmatpush1.bf16.msra.mxu0 %v1739
  %1815 = vmatprep.subr.bf16.mxu0 0
  %1816 = vmatpush1.bf16.msra.mxu0 0
  %1817 = vmatprep.mubr.bf16.mxu0 %v390
  %1818 = vmatmul.mubr.bf16.gmra.mrb[0].mxu0 %v95
  %v1819 = vpop.f32.mrb[0].mxu0
  %v1820 = vadd.f32 0.0, %v1819
  %v1821 = vpop.f32.mrb[0].mxu0
  %v1822 = vadd.f32 0.0, %v1821
  %v1823 = vpop.f32.mrb[0].mxu0
  %v1824 = vpop.f32.mrb[0].mxu0
  %1825 = vdwg.mxu0
  %v1826 = vmax.f32 %v1379, %v1779
  %v1827 = vmax.f32 %v1380, %v1781
  %v1828 = vmax.f32 %v1381, %v1820
  %v1829 = vmax.f32 %v1382, %v1822
  %v1830 = vld [vmem:[%s2] sm:$0xf]
  %v1832 = vlaneseq
  %v1833 = vshrl.u32 %v1832, 7
  %v1834 = vsub.s32 0, %v1833
  %v1835 = vrot.slane %v1830, %v1834
  %v1836 = vlaneseq
  %v1837 = vshrl.u32 %v1836, 7
  %v1838 = vsub.s32 1, %v1837
  %v1839 = vrot.slane %v1830, %v1838
  %v1840 = vlaneseq
  %v1841 = vshrl.u32 %v1840, 7
  %v1842 = vsub.s32 2, %v1841
  %v1843 = vrot.slane %v1830, %v1842
  %v1844 = vlaneseq
  %v1845 = vshrl.u32 %v1844, 7
  %v1846 = vsub.s32 3, %v1845
  %v1847 = vrot.slane %v1830, %v1846
  %v1852 = vadd.f32 %v1826, %v1835
  %v1853 = vadd.f32 %v1827, %v1839
  %v1854 = vadd.f32 %v1828, %v1843
  %v1855 = vadd.f32 %v1829, %v1847
  %v1856 = vmax.f32 %v1852, 0.0
  %v1857 = vmax.f32 %v1853, 0.0
  %v1858 = vmax.f32 %v1854, 0.0
  %v1859 = vmax.f32 %v1855, 0.0
  %v1860 = vpack.c.bf16 %v1856, %v1856
  %v1861 = vpack.c.bf16 %v1857, %v1857
  %v1862 = vpack.c.bf16 %v1858, %v1858
  %v1863 = vpack.c.bf16 %v1859, %v1859
  %v1864 = vld [vmem:[%s3] sm:$0xff]
  %v1865 = vld [vmem:[%s3 + $0x8] sm:$0xff]
  %v1866 = vld [vmem:[%s3 + $0x10] sm:$0xff]
  %v1867 = vld [vmem:[%s3 + $0x18] sm:$0xff]
  %v1868 = vld [vmem:[%s3 + $0x20] sm:$0xff]
  %v1869 = vld [vmem:[%s3 + $0x28] sm:$0xff]
  %v1870 = vld [vmem:[%s3 + $0x30] sm:$0xff]
  %v1871 = vld [vmem:[%s3 + $0x38] sm:$0xff]
  %v1872 = vld [vmem:[%s3 + $0x40] sm:$0xff]
  %v1873 = vld [vmem:[%s3 + $0x48] sm:$0xff]
  %v1874 = vld [vmem:[%s3 + $0x50] sm:$0xff]
  %v1875 = vld [vmem:[%s3 + $0x58] sm:$0xff]
  %v1876 = vld [vmem:[%s3 + $0x60] sm:$0xff]
  %v1877 = vld [vmem:[%s3 + $0x68] sm:$0xff]
  %v1878 = vld [vmem:[%s3 + $0x70] sm:$0xff]
  %v1879 = vld [vmem:[%s3 + $0x78] sm:$0xff]
  %v1880 = vld [vmem:[%s3 + $0x80] sm:$0xff]
  %v1881 = vld [vmem:[%s3 + $0x88] sm:$0xff]
  %v1882 = vld [vmem:[%s3 + $0x90] sm:$0xff]
  %v1883 = vld [vmem:[%s3 + $0x98] sm:$0xff]
  %v1884 = vld [vmem:[%s3 + $0xa0] sm:$0xff]
  %v1885 = vld [vmem:[%s3 + $0xa8] sm:$0xff]
  %v1886 = vld [vmem:[%s3 + $0xb0] sm:$0xff]
  %v1887 = vld [vmem:[%s3 + $0xb8] sm:$0xff]
  %v1888 = vld [vmem:[%s3 + $0xc0] sm:$0xff]
  %v1889 = vld [vmem:[%s3 + $0xc8] sm:$0xff]
  %v1890 = vld [vmem:[%s3 + $0xd0] sm:$0xff]
  %v1891 = vld [vmem:[%s3 + $0xd8] sm:$0xff]
  %v1892 = vld [vmem:[%s3 + $0xe0] sm:$0xff]
  %v1893 = vld [vmem:[%s3 + $0xe8] sm:$0xff]
  %v1894 = vld [vmem:[%s3 + $0xf0] sm:$0xff]
  %v1895 = vld [vmem:[%s3 + $0xf8] sm:$0xff]
  %v1896 = vld [vmem:[%s3 + $0x100] sm:$0xff]
  %v1897 = vld [vmem:[%s3 + $0x108] sm:$0xff]
  %v1898 = vld [vmem:[%s3 + $0x110] sm:$0xff]
  %v1899 = vld [vmem:[%s3 + $0x118] sm:$0xff]
  %v1900 = vld [vmem:[%s3 + $0x120] sm:$0xff]
  %v1901 = vld [vmem:[%s3 + $0x128] sm:$0xff]
  %v1902 = vld [vmem:[%s3 + $0x130] sm:$0xff]
  %v1903 = vld [vmem:[%s3 + $0x138] sm:$0xff]
  %v1904 = vld [vmem:[%s3 + $0x140] sm:$0xff]
  %v1905 = vld [vmem:[%s3 + $0x148] sm:$0xff]
  %v1906 = vld [vmem:[%s3 + $0x150] sm:$0xff]
  %v1907 = vld [vmem:[%s3 + $0x158] sm:$0xff]
  %v1908 = vld [vmem:[%s3 + $0x160] sm:$0xff]
  %v1909 = vld [vmem:[%s3 + $0x168] sm:$0xff]
  %v1910 = vld [vmem:[%s3 + $0x170] sm:$0xff]
  %v1911 = vld [vmem:[%s3 + $0x178] sm:$0xff]
  %v1912 = vld [vmem:[%s3 + $0x180] sm:$0xff]
  %v1913 = vld [vmem:[%s3 + $0x188] sm:$0xff]
  %v1914 = vld [vmem:[%s3 + $0x190] sm:$0xff]
  %v1915 = vld [vmem:[%s3 + $0x198] sm:$0xff]
  %v1916 = vld [vmem:[%s3 + $0x1a0] sm:$0xff]
  %v1917 = vld [vmem:[%s3 + $0x1a8] sm:$0xff]
  %v1918 = vld [vmem:[%s3 + $0x1b0] sm:$0xff]
  %v1919 = vld [vmem:[%s3 + $0x1b8] sm:$0xff]
  %v1920 = vld [vmem:[%s3 + $0x1c0] sm:$0xff]
  %v1921 = vld [vmem:[%s3 + $0x1c8] sm:$0xff]
  %v1922 = vld [vmem:[%s3 + $0x1d0] sm:$0xff]
  %v1923 = vld [vmem:[%s3 + $0x1d8] sm:$0xff]
  %v1924 = vld [vmem:[%s3 + $0x1e0] sm:$0xff]
  %v1925 = vld [vmem:[%s3 + $0x1e8] sm:$0xff]
  %v1926 = vld [vmem:[%s3 + $0x1f0] sm:$0xff]
  %v1927 = vld [vmem:[%s3 + $0x1f8] sm:$0xff]
  %v1928 = vld [vmem:[%s3 + $0x200] sm:$0xff]
  %v1929 = vld [vmem:[%s3 + $0x208] sm:$0xff]
  %v1930 = vld [vmem:[%s3 + $0x210] sm:$0xff]
  %v1931 = vld [vmem:[%s3 + $0x218] sm:$0xff]
  %v1932 = vld [vmem:[%s3 + $0x220] sm:$0xff]
  %v1933 = vld [vmem:[%s3 + $0x228] sm:$0xff]
  %v1934 = vld [vmem:[%s3 + $0x230] sm:$0xff]
  %v1935 = vld [vmem:[%s3 + $0x238] sm:$0xff]
  %v1936 = vld [vmem:[%s3 + $0x240] sm:$0xff]
  %v1937 = vld [vmem:[%s3 + $0x248] sm:$0xff]
  %v1938 = vld [vmem:[%s3 + $0x250] sm:$0xff]
  %v1939 = vld [vmem:[%s3 + $0x258] sm:$0xff]
  %v1940 = vld [vmem:[%s3 + $0x260] sm:$0xff]
  %v1941 = vld [vmem:[%s3 + $0x268] sm:$0xff]
  %v1942 = vld [vmem:[%s3 + $0x270] sm:$0xff]
  %v1943 = vld [vmem:[%s3 + $0x278] sm:$0xff]
  %v1944 = vld [vmem:[%s3 + $0x280] sm:$0xff]
  %v1945 = vld [vmem:[%s3 + $0x288] sm:$0xff]
  %v1946 = vld [vmem:[%s3 + $0x290] sm:$0xff]
  %v1947 = vld [vmem:[%s3 + $0x298] sm:$0xff]
  %v1948 = vld [vmem:[%s3 + $0x2a0] sm:$0xff]
  %v1949 = vld [vmem:[%s3 + $0x2a8] sm:$0xff]
  %v1950 = vld [vmem:[%s3 + $0x2b0] sm:$0xff]
  %v1951 = vld [vmem:[%s3 + $0x2b8] sm:$0xff]
  %v1952 = vld [vmem:[%s3 + $0x2c0] sm:$0xff]
  %v1953 = vld [vmem:[%s3 + $0x2c8] sm:$0xff]
  %v1954 = vld [vmem:[%s3 + $0x2d0] sm:$0xff]
  %v1955 = vld [vmem:[%s3 + $0x2d8] sm:$0xff]
  %v1956 = vld [vmem:[%s3 + $0x2e0] sm:$0xff]
  %v1957 = vld [vmem:[%s3 + $0x2e8] sm:$0xff]
  %v1958 = vld [vmem:[%s3 + $0x2f0] sm:$0xff]
  %v1959 = vld [vmem:[%s3 + $0x2f8] sm:$0xff]
  %v1960 = vld [vmem:[%s3 + $0x300] sm:$0xff]
  %v1961 = vld [vmem:[%s3 + $0x308] sm:$0xff]
  %v1962 = vld [vmem:[%s3 + $0x310] sm:$0xff]
  %v1963 = vld [vmem:[%s3 + $0x318] sm:$0xff]
  %v1964 = vld [vmem:[%s3 + $0x320] sm:$0xff]
  %v1965 = vld [vmem:[%s3 + $0x328] sm:$0xff]
  %v1966 = vld [vmem:[%s3 + $0x330] sm:$0xff]
  %v1967 = vld [vmem:[%s3 + $0x338] sm:$0xff]
  %v1968 = vld [vmem:[%s3 + $0x340] sm:$0xff]
  %v1969 = vld [vmem:[%s3 + $0x348] sm:$0xff]
  %v1970 = vld [vmem:[%s3 + $0x350] sm:$0xff]
  %v1971 = vld [vmem:[%s3 + $0x358] sm:$0xff]
  %v1972 = vld [vmem:[%s3 + $0x360] sm:$0xff]
  %v1973 = vld [vmem:[%s3 + $0x368] sm:$0xff]
  %v1974 = vld [vmem:[%s3 + $0x370] sm:$0xff]
  %v1975 = vld [vmem:[%s3 + $0x378] sm:$0xff]
  %v1976 = vld [vmem:[%s3 + $0x380] sm:$0xff]
  %v1977 = vld [vmem:[%s3 + $0x388] sm:$0xff]
  %v1978 = vld [vmem:[%s3 + $0x390] sm:$0xff]
  %v1979 = vld [vmem:[%s3 + $0x398] sm:$0xff]
  %v1980 = vld [vmem:[%s3 + $0x3a0] sm:$0xff]
  %v1981 = vld [vmem:[%s3 + $0x3a8] sm:$0xff]
  %v1982 = vld [vmem:[%s3 + $0x3b0] sm:$0xff]
  %v1983 = vld [vmem:[%s3 + $0x3b8] sm:$0xff]
  %v1984 = vld [vmem:[%s3 + $0x3c0] sm:$0xff]
  %v1985 = vld [vmem:[%s3 + $0x3c8] sm:$0xff]
  %v1986 = vld [vmem:[%s3 + $0x3d0] sm:$0xff]
  %v1987 = vld [vmem:[%s3 + $0x3d8] sm:$0xff]
  %v1988 = vld [vmem:[%s3 + $0x3e0] sm:$0xff]
  %v1989 = vld [vmem:[%s3 + $0x3e8] sm:$0xff]
  %v1990 = vld [vmem:[%s3 + $0x3f0] sm:$0xff]
  %v1991 = vld [vmem:[%s3 + $0x3f8] sm:$0xff]
  %v1992 = vld [vmem:[%s3 + $0x400] sm:$0xff]
  %v1993 = vld [vmem:[%s3 + $0x408] sm:$0xff]
  %v1994 = vld [vmem:[%s3 + $0x410] sm:$0xff]
  %v1995 = vld [vmem:[%s3 + $0x418] sm:$0xff]
  %v1996 = vld [vmem:[%s3 + $0x420] sm:$0xff]
  %v1997 = vld [vmem:[%s3 + $0x428] sm:$0xff]
  %v1998 = vld [vmem:[%s3 + $0x430] sm:$0xff]
  %v1999 = vld [vmem:[%s3 + $0x438] sm:$0xff]
  %v2000 = vld [vmem:[%s3 + $0x440] sm:$0xff]
  %v2001 = vld [vmem:[%s3 + $0x448] sm:$0xff]
  %v2002 = vld [vmem:[%s3 + $0x450] sm:$0xff]
  %v2003 = vld [vmem:[%s3 + $0x458] sm:$0xff]
  %v2004 = vld [vmem:[%s3 + $0x460] sm:$0xff]
  %v2005 = vld [vmem:[%s3 + $0x468] sm:$0xff]
  %v2006 = vld [vmem:[%s3 + $0x470] sm:$0xff]
  %v2007 = vld [vmem:[%s3 + $0x478] sm:$0xff]
  %v2008 = vld [vmem:[%s3 + $0x480] sm:$0xff]
  %v2009 = vld [vmem:[%s3 + $0x488] sm:$0xff]
  %v2010 = vld [vmem:[%s3 + $0x490] sm:$0xff]
  %v2011 = vld [vmem:[%s3 + $0x498] sm:$0xff]
  %v2012 = vld [vmem:[%s3 + $0x4a0] sm:$0xff]
  %v2013 = vld [vmem:[%s3 + $0x4a8] sm:$0xff]
  %v2014 = vld [vmem:[%s3 + $0x4b0] sm:$0xff]
  %v2015 = vld [vmem:[%s3 + $0x4b8] sm:$0xff]
  %v2016 = vld [vmem:[%s3 + $0x4c0] sm:$0xff]
  %v2017 = vld [vmem:[%s3 + $0x4c8] sm:$0xff]
  %v2018 = vld [vmem:[%s3 + $0x4d0] sm:$0xff]
  %v2019 = vld [vmem:[%s3 + $0x4d8] sm:$0xff]
  %v2020 = vld [vmem:[%s3 + $0x4e0] sm:$0xff]
  %v2021 = vld [vmem:[%s3 + $0x4e8] sm:$0xff]
  %v2022 = vld [vmem:[%s3 + $0x4f0] sm:$0xff]
  %v2023 = vld [vmem:[%s3 + $0x4f8] sm:$0xff]
  %v2024 = vld [vmem:[%s3 + $0x500] sm:$0xff]
  %v2025 = vld [vmem:[%s3 + $0x508] sm:$0xff]
  %v2026 = vld [vmem:[%s3 + $0x510] sm:$0xff]
  %v2027 = vld [vmem:[%s3 + $0x518] sm:$0xff]
  %v2028 = vld [vmem:[%s3 + $0x520] sm:$0xff]
  %v2029 = vld [vmem:[%s3 + $0x528] sm:$0xff]
  %v2030 = vld [vmem:[%s3 + $0x530] sm:$0xff]
  %v2031 = vld [vmem:[%s3 + $0x538] sm:$0xff]
  %v2032 = vld [vmem:[%s3 + $0x540] sm:$0xff]
  %v2033 = vld [vmem:[%s3 + $0x548] sm:$0xff]
  %v2034 = vld [vmem:[%s3 + $0x550] sm:$0xff]
  %v2035 = vld [vmem:[%s3 + $0x558] sm:$0xff]
  %v2036 = vld [vmem:[%s3 + $0x560] sm:$0xff]
  %v2037 = vld [vmem:[%s3 + $0x568] sm:$0xff]
  %v2038 = vld [vmem:[%s3 + $0x570] sm:$0xff]
  %v2039 = vld [vmem:[%s3 + $0x578] sm:$0xff]
  %v2040 = vld [vmem:[%s3 + $0x580] sm:$0xff]
  %v2041 = vld [vmem:[%s3 + $0x588] sm:$0xff]
  %v2042 = vld [vmem:[%s3 + $0x590] sm:$0xff]
  %v2043 = vld [vmem:[%s3 + $0x598] sm:$0xff]
  %v2044 = vld [vmem:[%s3 + $0x5a0] sm:$0xff]
  %v2045 = vld [vmem:[%s3 + $0x5a8] sm:$0xff]
  %v2046 = vld [vmem:[%s3 + $0x5b0] sm:$0xff]
  %v2047 = vld [vmem:[%s3 + $0x5b8] sm:$0x11]
  %v2048 = vld [vmem:[%s3 + $0x5c0] sm:$0x11]
  %v2049 = vld [vmem:[%s3 + $0x5c8] sm:$0x11]
  %v2050 = vld [vmem:[%s4] sm:$0x3f]
  %v2052 = vlaneseq
  %v2053 = vshrl.u32 %v2052, 7
  %v2054 = vsub.s32 0, %v2053
  %v2055 = vrot.slane %v2050, %v2054
  %v2056 = vlaneseq
  %v2057 = vshrl.u32 %v2056, 7
  %v2058 = vsub.s32 1, %v2057
  %v2059 = vrot.slane %v2050, %v2058
  %v2060 = vlaneseq
  %v2061 = vshrl.u32 %v2060, 7
  %v2062 = vsub.s32 2, %v2061
  %v2063 = vrot.slane %v2050, %v2062
  %v2064 = vlaneseq
  %v2065 = vshrl.u32 %v2064, 7
  %v2066 = vsub.s32 3, %v2065
  %v2067 = vrot.slane %v2050, %v2066
  %v2068 = vlaneseq
  %v2069 = vshrl.u32 %v2068, 7
  %v2070 = vsub.s32 4, %v2069
  %v2071 = vrot.slane %v2050, %v2070
  %v2072 = vlaneseq
  %v2073 = vshrl.u32 %v2072, 7
  %v2074 = vsub.s32 5, %v2073
  %v2075 = vrot.slane %v2050, %v2074
  %v2268 = vunpack.c.l.b16 %v1864
  %v2269 = vunpack.c.h.b16 %v1864
  %v2270 = vunpack.c.l.b16 %v1865
  %v2271 = vunpack.c.h.b16 %v1865
  %v2272 = vunpack.c.l.b16 %v1866
  %v2273 = vunpack.c.h.b16 %v1866
  %v2274 = vunpack.c.l.b16 %v1867
  %v2275 = vunpack.c.h.b16 %v1867
  %v2276 = vunpack.c.l.b16 %v1868
  %v2277 = vunpack.c.h.b16 %v1868
  %v2278 = vunpack.c.l.b16 %v1869
  %v2279 = vunpack.c.h.b16 %v1869
  %v2280 = vunpack.c.l.b16 %v1870
  %v2281 = vunpack.c.h.b16 %v1870
  %v2282 = vunpack.c.l.b16 %v1871
  %v2283 = vunpack.c.h.b16 %v1871
  %v2284 = vunpack.c.l.b16 %v1872
  %v2285 = vunpack.c.h.b16 %v1872
  %v2286 = vunpack.c.l.b16 %v1873
  %v2287 = vunpack.c.h.b16 %v1873
  %v2288 = vunpack.c.l.b16 %v1874
  %v2289 = vunpack.c.h.b16 %v1874
  %v2290 = vunpack.c.l.b16 %v1875
  %v2291 = vunpack.c.h.b16 %v1875
  %v2292 = vunpack.c.l.b16 %v1876
  %v2293 = vunpack.c.h.b16 %v1876
  %v2294 = vunpack.c.l.b16 %v1877
  %v2295 = vunpack.c.h.b16 %v1877
  %v2296 = vunpack.c.l.b16 %v1878
  %v2297 = vunpack.c.h.b16 %v1878
  %v2298 = vunpack.c.l.b16 %v1879
  %v2299 = vunpack.c.h.b16 %v1879
  %v2300 = vunpack.c.l.b16 %v1880
  %v2301 = vunpack.c.h.b16 %v1880
  %v2302 = vunpack.c.l.b16 %v1881
  %v2303 = vunpack.c.h.b16 %v1881
  %v2304 = vunpack.c.l.b16 %v1882
  %v2305 = vunpack.c.h.b16 %v1882
  %v2306 = vunpack.c.l.b16 %v1883
  %v2307 = vunpack.c.h.b16 %v1883
  %v2308 = vunpack.c.l.b16 %v1884
  %v2309 = vunpack.c.h.b16 %v1884
  %v2310 = vunpack.c.l.b16 %v1885
  %v2311 = vunpack.c.h.b16 %v1885
  %v2312 = vunpack.c.l.b16 %v1886
  %v2313 = vunpack.c.h.b16 %v1886
  %v2314 = vunpack.c.l.b16 %v1887
  %v2315 = vunpack.c.h.b16 %v1887
  %v2316 = vunpack.c.l.b16 %v1888
  %v2317 = vunpack.c.h.b16 %v1888
  %v2318 = vunpack.c.l.b16 %v1889
  %v2319 = vunpack.c.h.b16 %v1889
  %v2320 = vunpack.c.l.b16 %v1890
  %v2321 = vunpack.c.h.b16 %v1890
  %v2322 = vunpack.c.l.b16 %v1891
  %v2323 = vunpack.c.h.b16 %v1891
  %v2324 = vunpack.c.l.b16 %v1892
  %v2325 = vunpack.c.h.b16 %v1892
  %v2326 = vunpack.c.l.b16 %v1893
  %v2327 = vunpack.c.h.b16 %v1893
  %v2328 = vunpack.c.l.b16 %v1894
  %v2329 = vunpack.c.h.b16 %v1894
  %v2330 = vunpack.c.l.b16 %v1895
  %v2331 = vunpack.c.h.b16 %v1895
  %v2332 = vunpack.c.l.b16 %v1896
  %v2333 = vunpack.c.h.b16 %v1896
  %v2334 = vunpack.c.l.b16 %v1897
  %v2335 = vunpack.c.h.b16 %v1897
  %v2336 = vunpack.c.l.b16 %v1898
  %v2337 = vunpack.c.h.b16 %v1898
  %v2338 = vunpack.c.l.b16 %v1899
  %v2339 = vunpack.c.h.b16 %v1899
  %v2340 = vunpack.c.l.b16 %v1900
  %v2341 = vunpack.c.h.b16 %v1900
  %v2342 = vunpack.c.l.b16 %v1901
  %v2343 = vunpack.c.h.b16 %v1901
  %v2344 = vunpack.c.l.b16 %v1902
  %v2345 = vunpack.c.h.b16 %v1902
  %v2346 = vunpack.c.l.b16 %v1903
  %v2347 = vunpack.c.h.b16 %v1903
  %v2348 = vunpack.c.l.b16 %v1904
  %v2349 = vunpack.c.h.b16 %v1904
  %v2350 = vunpack.c.l.b16 %v1905
  %v2351 = vunpack.c.h.b16 %v1905
  %v2352 = vunpack.c.l.b16 %v1906
  %v2353 = vunpack.c.h.b16 %v1906
  %v2354 = vunpack.c.l.b16 %v1907
  %v2355 = vunpack.c.h.b16 %v1907
  %v2356 = vunpack.c.l.b16 %v1908
  %v2357 = vunpack.c.h.b16 %v1908
  %v2358 = vunpack.c.l.b16 %v1909
  %v2359 = vunpack.c.h.b16 %v1909
  %v2360 = vunpack.c.l.b16 %v1910
  %v2361 = vunpack.c.h.b16 %v1910
  %v2362 = vunpack.c.l.b16 %v1911
  %v2363 = vunpack.c.h.b16 %v1911
  %v2364 = vunpack.c.l.b16 %v1912
  %v2365 = vunpack.c.h.b16 %v1912
  %v2366 = vunpack.c.l.b16 %v1913
  %v2367 = vunpack.c.h.b16 %v1913
  %v2368 = vunpack.c.l.b16 %v1914
  %v2369 = vunpack.c.h.b16 %v1914
  %v2370 = vunpack.c.l.b16 %v1915
  %v2371 = vunpack.c.h.b16 %v1915
  %v2372 = vunpack.c.l.b16 %v1916
  %v2373 = vunpack.c.h.b16 %v1916
  %v2374 = vunpack.c.l.b16 %v1917
  %v2375 = vunpack.c.h.b16 %v1917
  %v2376 = vunpack.c.l.b16 %v1918
  %v2377 = vunpack.c.h.b16 %v1918
  %v2378 = vunpack.c.l.b16 %v1919
  %v2379 = vunpack.c.h.b16 %v1919
  %v2380 = vunpack.c.l.b16 %v1920
  %v2381 = vunpack.c.h.b16 %v1920
  %v2382 = vunpack.c.l.b16 %v1921
  %v2383 = vunpack.c.h.b16 %v1921
  %v2384 = vunpack.c.l.b16 %v1922
  %v2385 = vunpack.c.h.b16 %v1922
  %v2386 = vunpack.c.l.b16 %v1923
  %v2387 = vunpack.c.h.b16 %v1923
  %v2388 = vunpack.c.l.b16 %v1924
  %v2389 = vunpack.c.h.b16 %v1924
  %v2390 = vunpack.c.l.b16 %v1925
  %v2391 = vunpack.c.h.b16 %v1925
  %v2392 = vunpack.c.l.b16 %v1926
  %v2393 = vunpack.c.h.b16 %v1926
  %v2394 = vunpack.c.l.b16 %v1927
  %v2395 = vunpack.c.h.b16 %v1927
  %v2396 = vunpack.c.l.b16 %v1928
  %v2397 = vunpack.c.h.b16 %v1928
  %v2398 = vunpack.c.l.b16 %v1929
  %v2399 = vunpack.c.h.b16 %v1929
  %v2400 = vunpack.c.l.b16 %v1930
  %v2401 = vunpack.c.h.b16 %v1930
  %v2402 = vunpack.c.l.b16 %v1931
  %v2403 = vunpack.c.h.b16 %v1931
  %v2404 = vunpack.c.l.b16 %v1932
  %v2405 = vunpack.c.h.b16 %v1932
  %v2406 = vunpack.c.l.b16 %v1933
  %v2407 = vunpack.c.h.b16 %v1933
  %v2408 = vunpack.c.l.b16 %v1934
  %v2409 = vunpack.c.h.b16 %v1934
  %v2410 = vunpack.c.l.b16 %v1935
  %v2411 = vunpack.c.h.b16 %v1935
  %v2412 = vunpack.c.l.b16 %v1936
  %v2413 = vunpack.c.h.b16 %v1936
  %v2414 = vunpack.c.l.b16 %v1937
  %v2415 = vunpack.c.h.b16 %v1937
  %v2416 = vunpack.c.l.b16 %v1938
  %v2417 = vunpack.c.h.b16 %v1938
  %v2418 = vunpack.c.l.b16 %v1939
  %v2419 = vunpack.c.h.b16 %v1939
  %v2420 = vunpack.c.l.b16 %v1940
  %v2421 = vunpack.c.h.b16 %v1940
  %v2422 = vunpack.c.l.b16 %v1941
  %v2423 = vunpack.c.h.b16 %v1941
  %v2424 = vunpack.c.l.b16 %v1942
  %v2425 = vunpack.c.h.b16 %v1942
  %v2426 = vunpack.c.l.b16 %v1943
  %v2427 = vunpack.c.h.b16 %v1943
  %v2428 = vunpack.c.l.b16 %v1944
  %v2429 = vunpack.c.h.b16 %v1944
  %v2430 = vunpack.c.l.b16 %v1945
  %v2431 = vunpack.c.h.b16 %v1945
  %v2432 = vunpack.c.l.b16 %v1946
  %v2433 = vunpack.c.h.b16 %v1946
  %v2434 = vunpack.c.l.b16 %v1947
  %v2435 = vunpack.c.h.b16 %v1947
  %v2436 = vunpack.c.l.b16 %v1948
  %v2437 = vunpack.c.h.b16 %v1948
  %v2438 = vunpack.c.l.b16 %v1949
  %v2439 = vunpack.c.h.b16 %v1949
  %v2440 = vunpack.c.l.b16 %v1950
  %v2441 = vunpack.c.h.b16 %v1950
  %v2442 = vunpack.c.l.b16 %v1951
  %v2443 = vunpack.c.h.b16 %v1951
  %v2444 = vunpack.c.l.b16 %v1952
  %v2445 = vunpack.c.h.b16 %v1952
  %v2446 = vunpack.c.l.b16 %v1953
  %v2447 = vunpack.c.h.b16 %v1953
  %v2448 = vunpack.c.l.b16 %v1954
  %v2449 = vunpack.c.h.b16 %v1954
  %v2450 = vunpack.c.l.b16 %v1955
  %v2451 = vunpack.c.h.b16 %v1955
  %v2452 = vunpack.c.l.b16 %v1956
  %v2453 = vunpack.c.h.b16 %v1956
  %v2454 = vunpack.c.l.b16 %v1957
  %v2455 = vunpack.c.h.b16 %v1957
  %v2456 = vunpack.c.l.b16 %v1958
  %v2457 = vunpack.c.h.b16 %v1958
  %v2458 = vunpack.c.l.b16 %v1959
  %v2459 = vunpack.c.h.b16 %v1959
  %v2460 = vunpack.c.l.b16 %v1960
  %v2461 = vunpack.c.h.b16 %v1960
  %v2462 = vunpack.c.l.b16 %v1961
  %v2463 = vunpack.c.h.b16 %v1961
  %v2464 = vunpack.c.l.b16 %v1962
  %v2465 = vunpack.c.h.b16 %v1962
  %v2466 = vunpack.c.l.b16 %v1963
  %v2467 = vunpack.c.h.b16 %v1963
  %v2468 = vunpack.c.l.b16 %v1964
  %v2469 = vunpack.c.h.b16 %v1964
  %v2470 = vunpack.c.l.b16 %v1965
  %v2471 = vunpack.c.h.b16 %v1965
  %v2472 = vunpack.c.l.b16 %v1966
  %v2473 = vunpack.c.h.b16 %v1966
  %v2474 = vunpack.c.l.b16 %v1967
  %v2475 = vunpack.c.h.b16 %v1967
  %v2476 = vunpack.c.l.b16 %v1968
  %v2477 = vunpack.c.h.b16 %v1968
  %v2478 = vunpack.c.l.b16 %v1969
  %v2479 = vunpack.c.h.b16 %v1969
  %v2480 = vunpack.c.l.b16 %v1970
  %v2481 = vunpack.c.h.b16 %v1970
  %v2482 = vunpack.c.l.b16 %v1971
  %v2483 = vunpack.c.h.b16 %v1971
  %v2484 = vunpack.c.l.b16 %v1972
  %v2485 = vunpack.c.h.b16 %v1972
  %v2486 = vunpack.c.l.b16 %v1973
  %v2487 = vunpack.c.h.b16 %v1973
  %v2488 = vunpack.c.l.b16 %v1974
  %v2489 = vunpack.c.h.b16 %v1974
  %v2490 = vunpack.c.l.b16 %v1975
  %v2491 = vunpack.c.h.b16 %v1975
  %v2492 = vunpack.c.l.b16 %v1976
  %v2493 = vunpack.c.h.b16 %v1976
  %v2494 = vunpack.c.l.b16 %v1977
  %v2495 = vunpack.c.h.b16 %v1977
  %v2496 = vunpack.c.l.b16 %v1978
  %v2497 = vunpack.c.h.b16 %v1978
  %v2498 = vunpack.c.l.b16 %v1979
  %v2499 = vunpack.c.h.b16 %v1979
  %v2500 = vunpack.c.l.b16 %v1980
  %v2501 = vunpack.c.h.b16 %v1980
  %v2502 = vunpack.c.l.b16 %v1981
  %v2503 = vunpack.c.h.b16 %v1981
  %v2504 = vunpack.c.l.b16 %v1982
  %v2505 = vunpack.c.h.b16 %v1982
  %v2506 = vunpack.c.l.b16 %v1983
  %v2507 = vunpack.c.h.b16 %v1983
  %v2508 = vunpack.c.l.b16 %v1984
  %v2509 = vunpack.c.h.b16 %v1984
  %v2510 = vunpack.c.l.b16 %v1985
  %v2511 = vunpack.c.h.b16 %v1985
  %v2512 = vunpack.c.l.b16 %v1986
  %v2513 = vunpack.c.h.b16 %v1986
  %v2514 = vunpack.c.l.b16 %v1987
  %v2515 = vunpack.c.h.b16 %v1987
  %v2516 = vunpack.c.l.b16 %v1988
  %v2517 = vunpack.c.h.b16 %v1988
  %v2518 = vunpack.c.l.b16 %v1989
  %v2519 = vunpack.c.h.b16 %v1989
  %v2520 = vunpack.c.l.b16 %v1990
  %v2521 = vunpack.c.h.b16 %v1990
  %v2522 = vunpack.c.l.b16 %v1991
  %v2523 = vunpack.c.h.b16 %v1991
  %v2524 = vunpack.c.l.b16 %v1992
  %v2525 = vunpack.c.h.b16 %v1992
  %v2526 = vunpack.c.l.b16 %v1993
  %v2527 = vunpack.c.h.b16 %v1993
  %v2528 = vunpack.c.l.b16 %v1994
  %v2529 = vunpack.c.h.b16 %v1994
  %v2530 = vunpack.c.l.b16 %v1995
  %v2531 = vunpack.c.h.b16 %v1995
  %v2532 = vunpack.c.l.b16 %v1996
  %v2533 = vunpack.c.h.b16 %v1996
  %v2534 = vunpack.c.l.b16 %v1997
  %v2535 = vunpack.c.h.b16 %v1997
  %v2536 = vunpack.c.l.b16 %v1998
  %v2537 = vunpack.c.h.b16 %v1998
  %v2538 = vunpack.c.l.b16 %v1999
  %v2539 = vunpack.c.h.b16 %v1999
  %v2540 = vunpack.c.l.b16 %v2000
  %v2541 = vunpack.c.h.b16 %v2000
  %v2542 = vunpack.c.l.b16 %v2001
  %v2543 = vunpack.c.h.b16 %v2001
  %v2544 = vunpack.c.l.b16 %v2002
  %v2545 = vunpack.c.h.b16 %v2002
  %v2546 = vunpack.c.l.b16 %v2003
  %v2547 = vunpack.c.h.b16 %v2003
  %v2548 = vunpack.c.l.b16 %v2004
  %v2549 = vunpack.c.h.b16 %v2004
  %v2550 = vunpack.c.l.b16 %v2005
  %v2551 = vunpack.c.h.b16 %v2005
  %v2552 = vunpack.c.l.b16 %v2006
  %v2553 = vunpack.c.h.b16 %v2006
  %v2554 = vunpack.c.l.b16 %v2007
  %v2555 = vunpack.c.h.b16 %v2007
  %v2556 = vunpack.c.l.b16 %v2008
  %v2557 = vunpack.c.h.b16 %v2008
  %v2558 = vunpack.c.l.b16 %v2009
  %v2559 = vunpack.c.h.b16 %v2009
  %v2560 = vunpack.c.l.b16 %v2010
  %v2561 = vunpack.c.h.b16 %v2010
  %v2562 = vunpack.c.l.b16 %v2011
  %v2563 = vunpack.c.h.b16 %v2011
  %v2564 = vunpack.c.l.b16 %v2012
  %v2565 = vunpack.c.h.b16 %v2012
  %v2566 = vunpack.c.l.b16 %v2013
  %v2567 = vunpack.c.h.b16 %v2013
  %v2568 = vunpack.c.l.b16 %v2014
  %v2569 = vunpack.c.h.b16 %v2014
  %v2570 = vunpack.c.l.b16 %v2015
  %v2571 = vunpack.c.h.b16 %v2015
  %v2572 = vunpack.c.l.b16 %v2016
  %v2573 = vunpack.c.h.b16 %v2016
  %v2574 = vunpack.c.l.b16 %v2017
  %v2575 = vunpack.c.h.b16 %v2017
  %v2576 = vunpack.c.l.b16 %v2018
  %v2577 = vunpack.c.h.b16 %v2018
  %v2578 = vunpack.c.l.b16 %v2019
  %v2579 = vunpack.c.h.b16 %v2019
  %v2580 = vunpack.c.l.b16 %v2020
  %v2581 = vunpack.c.h.b16 %v2020
  %v2582 = vunpack.c.l.b16 %v2021
  %v2583 = vunpack.c.h.b16 %v2021
  %v2584 = vunpack.c.l.b16 %v2022
  %v2585 = vunpack.c.h.b16 %v2022
  %v2586 = vunpack.c.l.b16 %v2023
  %v2587 = vunpack.c.h.b16 %v2023
  %v2588 = vunpack.c.l.b16 %v2024
  %v2589 = vunpack.c.h.b16 %v2024
  %v2590 = vunpack.c.l.b16 %v2025
  %v2591 = vunpack.c.h.b16 %v2025
  %v2592 = vunpack.c.l.b16 %v2026
  %v2593 = vunpack.c.h.b16 %v2026
  %v2594 = vunpack.c.l.b16 %v2027
  %v2595 = vunpack.c.h.b16 %v2027
  %v2596 = vunpack.c.l.b16 %v2028
  %v2597 = vunpack.c.h.b16 %v2028
  %v2598 = vunpack.c.l.b16 %v2029
  %v2599 = vunpack.c.h.b16 %v2029
  %v2600 = vunpack.c.l.b16 %v2030
  %v2601 = vunpack.c.h.b16 %v2030
  %v2602 = vunpack.c.l.b16 %v2031
  %v2603 = vunpack.c.h.b16 %v2031
  %v2604 = vunpack.c.l.b16 %v2032
  %v2605 = vunpack.c.h.b16 %v2032
  %v2606 = vunpack.c.l.b16 %v2033
  %v2607 = vunpack.c.h.b16 %v2033
  %v2608 = vunpack.c.l.b16 %v2034
  %v2609 = vunpack.c.h.b16 %v2034
  %v2610 = vunpack.c.l.b16 %v2035
  %v2611 = vunpack.c.h.b16 %v2035
  %v2612 = vunpack.c.l.b16 %v2036
  %v2613 = vunpack.c.h.b16 %v2036
  %v2614 = vunpack.c.l.b16 %v2037
  %v2615 = vunpack.c.h.b16 %v2037
  %v2616 = vunpack.c.l.b16 %v2038
  %v2617 = vunpack.c.h.b16 %v2038
  %v2618 = vunpack.c.l.b16 %v2039
  %v2619 = vunpack.c.h.b16 %v2039
  %v2620 = vunpack.c.l.b16 %v2040
  %v2621 = vunpack.c.h.b16 %v2040
  %v2622 = vunpack.c.l.b16 %v2041
  %v2623 = vunpack.c.h.b16 %v2041
  %v2624 = vunpack.c.l.b16 %v2042
  %v2625 = vunpack.c.h.b16 %v2042
  %v2626 = vunpack.c.l.b16 %v2043
  %v2627 = vunpack.c.h.b16 %v2043
  %v2628 = vunpack.c.l.b16 %v2044
  %v2629 = vunpack.c.h.b16 %v2044
  %v2630 = vunpack.c.l.b16 %v2045
  %v2631 = vunpack.c.h.b16 %v2045
  %v2632 = vunpack.c.l.b16 %v2046
  %v2633 = vunpack.c.h.b16 %v2046
  %v2634 = vunpack.c.l.b16 %v2047
  %v2635 = vunpack.c.h.b16 %v2047
  %v2636 = vunpack.c.l.b16 %v2048
  %v2637 = vunpack.c.h.b16 %v2048
  %v2638 = vunpack.c.l.b16 %v2049
  %v2639 = vunpack.c.h.b16 %v2049
  %v2640 = vpack.c.b16 %v2274, %v2268
  %v2641 = vpack.c.b16 %v2275, %v2269
  %v2642 = vpack.c.b16 %v2276, %v2270
  %v2643 = vpack.c.b16 %v2277, %v2271
  %v2644 = vpack.c.b16 %v2278, %v2272
  %v2645 = vpack.c.b16 %v2279, %v2273
  %v2646 = vpack.c.b16 %v2286, %v2280
  %v2647 = vpack.c.b16 %v2287, %v2281
  %v2648 = vpack.c.b16 %v2288, %v2282
  %v2649 = vpack.c.b16 %v2289, %v2283
  %v2650 = vpack.c.b16 %v2290, %v2284
  %v2651 = vpack.c.b16 %v2291, %v2285
  %v2652 = vpack.c.b16 %v2298, %v2292
  %v2653 = vpack.c.b16 %v2299, %v2293
  %v2654 = vpack.c.b16 %v2300, %v2294
  %v2655 = vpack.c.b16 %v2301, %v2295
  %v2656 = vpack.c.b16 %v2302, %v2296
  %v2657 = vpack.c.b16 %v2303, %v2297
  %v2658 = vpack.c.b16 %v2310, %v2304
  %v2659 = vpack.c.b16 %v2311, %v2305
  %v2660 = vpack.c.b16 %v2312, %v2306
  %v2661 = vpack.c.b16 %v2313, %v2307
  %v2662 = vpack.c.b16 %v2314, %v2308
  %v2663 = vpack.c.b16 %v2315, %v2309
  %v2664 = vpack.c.b16 %v2322, %v2316
  %v2665 = vpack.c.b16 %v2323, %v2317
  %v2666 = vpack.c.b16 %v2324, %v2318
  %v2667 = vpack.c.b16 %v2325, %v2319
  %v2668 = vpack.c.b16 %v2326, %v2320
  %v2669 = vpack.c.b16 %v2327, %v2321
  %v2670 = vpack.c.b16 %v2334, %v2328
  %v2671 = vpack.c.b16 %v2335, %v2329
  %v2672 = vpack.c.b16 %v2336, %v2330
  %v2673 = vpack.c.b16 %v2337, %v2331
  %v2674 = vpack.c.b16 %v2338, %v2332
  %v2675 = vpack.c.b16 %v2339, %v2333
  %v2676 = vpack.c.b16 %v2346, %v2340
  %v2677 = vpack.c.b16 %v2347, %v2341
  %v2678 = vpack.c.b16 %v2348, %v2342
  %v2679 = vpack.c.b16 %v2349, %v2343
  %v2680 = vpack.c.b16 %v2350, %v2344
  %v2681 = vpack.c.b16 %v2351, %v2345
  %v2682 = vpack.c.b16 %v2358, %v2352
  %v2683 = vpack.c.b16 %v2359, %v2353
  %v2684 = vpack.c.b16 %v2360, %v2354
  %v2685 = vpack.c.b16 %v2361, %v2355
  %v2686 = vpack.c.b16 %v2362, %v2356
  %v2687 = vpack.c.b16 %v2363, %v2357
  %v2688 = vpack.c.b16 %v2370, %v2364
  %v2689 = vpack.c.b16 %v2371, %v2365
  %v2690 = vpack.c.b16 %v2372, %v2366
  %v2691 = vpack.c.b16 %v2373, %v2367
  %v2692 = vpack.c.b16 %v2374, %v2368
  %v2693 = vpack.c.b16 %v2375, %v2369
  %v2694 = vpack.c.b16 %v2382, %v2376
  %v2695 = vpack.c.b16 %v2383, %v2377
  %v2696 = vpack.c.b16 %v2384, %v2378
  %v2697 = vpack.c.b16 %v2385, %v2379
  %v2698 = vpack.c.b16 %v2386, %v2380
  %v2699 = vpack.c.b16 %v2387, %v2381
  %v2700 = vpack.c.b16 %v2394, %v2388
  %v2701 = vpack.c.b16 %v2395, %v2389
  %v2702 = vpack.c.b16 %v2396, %v2390
  %v2703 = vpack.c.b16 %v2397, %v2391
  %v2704 = vpack.c.b16 %v2398, %v2392
  %v2705 = vpack.c.b16 %v2399, %v2393
  %v2706 = vpack.c.b16 %v2406, %v2400
  %v2707 = vpack.c.b16 %v2407, %v2401
  %v2708 = vpack.c.b16 %v2408, %v2402
  %v2709 = vpack.c.b16 %v2409, %v2403
  %v2710 = vpack.c.b16 %v2410, %v2404
  %v2711 = vpack.c.b16 %v2411, %v2405
  %v2712 = vpack.c.b16 %v2418, %v2412
  %v2713 = vpack.c.b16 %v2419, %v2413
  %v2714 = vpack.c.b16 %v2420, %v2414
  %v2715 = vpack.c.b16 %v2421, %v2415
  %v2716 = vpack.c.b16 %v2422, %v2416
  %v2717 = vpack.c.b16 %v2423, %v2417
  %v2718 = vpack.c.b16 %v2430, %v2424
  %v2719 = vpack.c.b16 %v2431, %v2425
  %v2720 = vpack.c.b16 %v2432, %v2426
  %v2721 = vpack.c.b16 %v2433, %v2427
  %v2722 = vpack.c.b16 %v2434, %v2428
  %v2723 = vpack.c.b16 %v2435, %v2429
  %v2724 = vpack.c.b16 %v2442, %v2436
  %v2725 = vpack.c.b16 %v2443, %v2437
  %v2726 = vpack.c.b16 %v2444, %v2438
  %v2727 = vpack.c.b16 %v2445, %v2439
  %v2728 = vpack.c.b16 %v2446, %v2440
  %v2729 = vpack.c.b16 %v2447, %v2441
  %v2730 = vpack.c.b16 %v2454, %v2448
  %v2731 = vpack.c.b16 %v2455, %v2449
  %v2732 = vpack.c.b16 %v2456, %v2450
  %v2733 = vpack.c.b16 %v2457, %v2451
  %v2734 = vpack.c.b16 %v2458, %v2452
  %v2735 = vpack.c.b16 %v2459, %v2453
  %v2736 = vpack.c.b16 %v2466, %v2460
  %v2737 = vpack.c.b16 %v2467, %v2461
  %v2738 = vpack.c.b16 %v2468, %v2462
  %v2739 = vpack.c.b16 %v2469, %v2463
  %v2740 = vpack.c.b16 %v2470, %v2464
  %v2741 = vpack.c.b16 %v2471, %v2465
  %v2742 = vpack.c.b16 %v2478, %v2472
  %v2743 = vpack.c.b16 %v2479, %v2473
  %v2744 = vpack.c.b16 %v2480, %v2474
  %v2745 = vpack.c.b16 %v2481, %v2475
  %v2746 = vpack.c.b16 %v2482, %v2476
  %v2747 = vpack.c.b16 %v2483, %v2477
  %v2748 = vpack.c.b16 %v2490, %v2484
  %v2749 = vpack.c.b16 %v2491, %v2485
  %v2750 = vpack.c.b16 %v2492, %v2486
  %v2751 = vpack.c.b16 %v2493, %v2487
  %v2752 = vpack.c.b16 %v2494, %v2488
  %v2753 = vpack.c.b16 %v2495, %v2489
  %v2754 = vpack.c.b16 %v2502, %v2496
  %v2755 = vpack.c.b16 %v2503, %v2497
  %v2756 = vpack.c.b16 %v2504, %v2498
  %v2757 = vpack.c.b16 %v2505, %v2499
  %v2758 = vpack.c.b16 %v2506, %v2500
  %v2759 = vpack.c.b16 %v2507, %v2501
  %v2760 = vpack.c.b16 %v2514, %v2508
  %v2761 = vpack.c.b16 %v2515, %v2509
  %v2762 = vpack.c.b16 %v2516, %v2510
  %v2763 = vpack.c.b16 %v2517, %v2511
  %v2764 = vpack.c.b16 %v2518, %v2512
  %v2765 = vpack.c.b16 %v2519, %v2513
  %v2766 = vpack.c.b16 %v2526, %v2520
  %v2767 = vpack.c.b16 %v2527, %v2521
  %v2768 = vpack.c.b16 %v2528, %v2522
  %v2769 = vpack.c.b16 %v2529, %v2523
  %v2770 = vpack.c.b16 %v2530, %v2524
  %v2771 = vpack.c.b16 %v2531, %v2525
  %v2772 = vpack.c.b16 %v2538, %v2532
  %v2773 = vpack.c.b16 %v2539, %v2533
  %v2774 = vpack.c.b16 %v2540, %v2534
  %v2775 = vpack.c.b16 %v2541, %v2535
  %v2776 = vpack.c.b16 %v2542, %v2536
  %v2777 = vpack.c.b16 %v2543, %v2537
  %v2778 = vpack.c.b16 %v2550, %v2544
  %v2779 = vpack.c.b16 %v2551, %v2545
  %v2780 = vpack.c.b16 %v2552, %v2546
  %v2781 = vpack.c.b16 %v2553, %v2547
  %v2782 = vpack.c.b16 %v2554, %v2548
  %v2783 = vpack.c.b16 %v2555, %v2549
  %v2784 = vpack.c.b16 %v2562, %v2556
  %v2785 = vpack.c.b16 %v2563, %v2557
  %v2786 = vpack.c.b16 %v2564, %v2558
  %v2787 = vpack.c.b16 %v2565, %v2559
  %v2788 = vpack.c.b16 %v2566, %v2560
  %v2789 = vpack.c.b16 %v2567, %v2561
  %v2790 = vpack.c.b16 %v2574, %v2568
  %v2791 = vpack.c.b16 %v2575, %v2569
  %v2792 = vpack.c.b16 %v2576, %v2570
  %v2793 = vpack.c.b16 %v2577, %v2571
  %v2794 = vpack.c.b16 %v2578, %v2572
  %v2795 = vpack.c.b16 %v2579, %v2573
  %v2796 = vpack.c.b16 %v2586, %v2580
  %v2797 = vpack.c.b16 %v2587, %v2581
  %v2798 = vpack.c.b16 %v2588, %v2582
  %v2799 = vpack.c.b16 %v2589, %v2583
  %v2800 = vpack.c.b16 %v2590, %v2584
  %v2801 = vpack.c.b16 %v2591, %v2585
  %v2802 = vpack.c.b16 %v2598, %v2592
  %v2803 = vpack.c.b16 %v2599, %v2593
  %v2804 = vpack.c.b16 %v2600, %v2594
  %v2805 = vpack.c.b16 %v2601, %v2595
  %v2806 = vpack.c.b16 %v2602, %v2596
  %v2807 = vpack.c.b16 %v2603, %v2597
  %v2808 = vpack.c.b16 %v2610, %v2604
  %v2809 = vpack.c.b16 %v2611, %v2605
  %v2810 = vpack.c.b16 %v2612, %v2606
  %v2811 = vpack.c.b16 %v2613, %v2607
  %v2812 = vpack.c.b16 %v2614, %v2608
  %v2813 = vpack.c.b16 %v2615, %v2609
  %v2814 = vpack.c.b16 %v2622, %v2616
  %v2815 = vpack.c.b16 %v2623, %v2617
  %v2816 = vpack.c.b16 %v2624, %v2618
  %v2817 = vpack.c.b16 %v2625, %v2619
  %v2818 = vpack.c.b16 %v2626, %v2620
  %v2819 = vpack.c.b16 %v2627, %v2621
  %v2820 = vpack.c.b16 %v2634, %v2628
  %v2821 = vpack.c.b16 %v2635, %v2629
  %v2822 = vpack.c.b16 %v2636, %v2630
  %v2823 = vpack.c.b16 %v2637, %v2631
  %v2824 = vpack.c.b16 %v2638, %v2632
  %v2825 = vpack.c.b16 %v2639, %v2633
  %vm3006 = vcmask 867328
  %v3008 = vsel %vm3006, %v1863, 0
  %vm3010 = vcmask 1044480
  %v3012 = vsel %vm3010, %v2820, 0
  %v3015 = vsel %vm3010, %v2821, 0
  %v3018 = vsel %vm3010, %v2822, 0
  %v3021 = vsel %vm3010, %v2823, 0
  %v3024 = vsel %vm3010, %v2824, 0
  %v3027 = vsel %vm3010, %v2825, 0
  %3029 = vmatprep.subr.bf16.mxu0 %v2641
  %3030 = vmatpush1.bf16.msra.mxu0 %v2640
  %3031 = vmatprep.subr.bf16.mxu0 %v2647
  %3032 = vmatpush1.bf16.msra.mxu0 %v2646
  %3033 = vmatprep.subr.bf16.mxu0 %v2653
  %3034 = vmatpush1.bf16.msra.mxu0 %v2652
  %3035 = vmatprep.subr.bf16.mxu0 %v2659
  %3036 = vmatpush1.bf16.msra.mxu0 %v2658
  %3037 = vmatprep.subr.bf16.mxu0 %v2665
  %3038 = vmatpush1.bf16.msra.mxu0 %v2664
  %3039 = vmatprep.subr.bf16.mxu0 %v2671
  %3040 = vmatpush1.bf16.msra.mxu0 %v2670
  %3041 = vmatprep.subr.bf16.mxu0 %v2677
  %3042 = vmatpush1.bf16.msra.mxu0 %v2676
  %3043 = vmatprep.subr.bf16.mxu0 %v2683
  %3044 = vmatpush1.bf16.msra.mxu0 %v2682
  %3045 = vmatprep.subr.bf16.mxu0 %v2689
  %3046 = vmatpush1.bf16.msra.mxu0 %v2688
  %3047 = vmatprep.subr.bf16.mxu0 %v2695
  %3048 = vmatpush1.bf16.msra.mxu0 %v2694
  %3049 = vmatprep.subr.bf16.mxu0 %v2701
  %3050 = vmatpush1.bf16.msra.mxu0 %v2700
  %3051 = vmatprep.subr.bf16.mxu0 %v2707
  %3052 = vmatpush1.bf16.msra.mxu0 %v2706
  %3053 = vmatprep.subr.bf16.mxu0 %v2713
  %3054 = vmatpush1.bf16.msra.mxu0 %v2712
  %3055 = vmatprep.subr.bf16.mxu0 %v2719
  %3056 = vmatpush1.bf16.msra.mxu0 %v2718
  %3057 = vmatprep.subr.bf16.mxu0 %v2725
  %3058 = vmatpush1.bf16.msra.mxu0 %v2724
  %3059 = vmatprep.subr.bf16.mxu0 %v2731
  %3060 = vmatpush1.bf16.msra.mxu0 %v2730
  %3061 = vmatprep.mubr.bf16.mxu0 %v1861
  %3062 = vmatmul.mubr.bf16.gmra.mrb[0].mxu0 %v1860
  %v3063 = vpop.f32.mrb[0].mxu0
  %v3064 = vadd.f32 %v2055, %v3063
  %v3065 = vpop.f32.mrb[0].mxu0
  %v3066 = vadd.f32 %v2059, %v3065
  %v3067 = vpop.f32.mrb[0].mxu0
  %v3068 = vpop.f32.mrb[0].mxu0
  %3069 = vdwg.mxu0
  %3070 = vmatprep.subr.bf16.mxu0 %v2737
  %3071 = vmatpush1.bf16.msra.mxu0 %v2736
  %3072 = vmatprep.subr.bf16.mxu0 %v2743
  %3073 = vmatpush1.bf16.msra.mxu0 %v2742
  %3074 = vmatprep.subr.bf16.mxu0 %v2749
  %3075 = vmatpush1.bf16.msra.mxu0 %v2748
  %3076 = vmatprep.subr.bf16.mxu0 %v2755
  %3077 = vmatpush1.bf16.msra.mxu0 %v2754
  %3078 = vmatprep.subr.bf16.mxu0 %v2761
  %3079 = vmatpush1.bf16.msra.mxu0 %v2760
  %3080 = vmatprep.subr.bf16.mxu0 %v2767
  %3081 = vmatpush1.bf16.msra.mxu0 %v2766
  %3082 = vmatprep.subr.bf16.mxu0 %v2773
  %3083 = vmatpush1.bf16.msra.mxu0 %v2772
  %3084 = vmatprep.subr.bf16.mxu0 %v2779
  %3085 = vmatpush1.bf16.msra.mxu0 %v2778
  %3086 = vmatprep.subr.bf16.mxu0 %v2785
  %3087 = vmatpush1.bf16.msra.mxu0 %v2784
  %3088 = vmatprep.subr.bf16.mxu0 %v2791
  %3089 = vmatpush1.bf16.msra.mxu0 %v2790
  %3090 = vmatprep.subr.bf16.mxu0 %v2797
  %3091 = vmatpush1.bf16.msra.mxu0 %v2796
  %3092 = vmatprep.subr.bf16.mxu0 %v2803
  %3093 = vmatpush1.bf16.msra.mxu0 %v2802
  %3094 = vmatprep.subr.bf16.mxu0 %v2809
  %3095 = vmatpush1.bf16.msra.mxu0 %v2808
  %3096 = vmatprep.subr.bf16.mxu0 %v2815
  %3097 = vmatpush1.bf16.msra.mxu0 %v2814
  %3098 = vmatprep.subr.bf16.mxu0 %v3015
  %3099 = vmatpush1.bf16.msra.mxu0 %v3012
  %3100 = vmatprep.subr.bf16.mxu0 0
  %3101 = vmatpush1.bf16.msra.mxu0 0
  %3102 = vmatprep.mubr.bf16.mxu0 %v3008
  %3103 = vmatmul.mubr.bf16.gmra.mrb[0].mxu0 %v1862
  %v3104 = vpop.f32.mrb[0].mxu0
  %v3105 = vadd.f32 %v3064, %v3104
  %v3106 = vpop.f32.mrb[0].mxu0
  %v3107 = vadd.f32 %v3066, %v3106
  %v3108 = vpop.f32.mrb[0].mxu0
  %v3109 = vpop.f32.mrb[0].mxu0
  %3110 = vdwg.mxu0
  %3111 = vmatprep.subr.bf16.mxu0 %v2643
  %3112 = vmatpush1.bf16.msra.mxu0 %v2642
  %3113 = vmatprep.subr.bf16.mxu0 %v2649
  %3114 = vmatpush1.bf16.msra.mxu0 %v2648
  %3115 = vmatprep.subr.bf16.mxu0 %v2655
  %3116 = vmatpush1.bf16.msra.mxu0 %v2654
  %3117 = vmatprep.subr.bf16.mxu0 %v2661
  %3118 = vmatpush1.bf16.msra.mxu0 %v2660
  %3119 = vmatprep.subr.bf16.mxu0 %v2667
  %3120 = vmatpush1.bf16.msra.mxu0 %v2666
  %3121 = vmatprep.subr.bf16.mxu0 %v2673
  %3122 = vmatpush1.bf16.msra.mxu0 %v2672
  %3123 = vmatprep.subr.bf16.mxu0 %v2679
  %3124 = vmatpush1.bf16.msra.mxu0 %v2678
  %3125 = vmatprep.subr.bf16.mxu0 %v2685
  %3126 = vmatpush1.bf16.msra.mxu0 %v2684
  %3127 = vmatprep.subr.bf16.mxu0 %v2691
  %3128 = vmatpush1.bf16.msra.mxu0 %v2690
  %3129 = vmatprep.subr.bf16.mxu0 %v2697
  %3130 = vmatpush1.bf16.msra.mxu0 %v2696
  %3131 = vmatprep.subr.bf16.mxu0 %v2703
  %3132 = vmatpush1.bf16.msra.mxu0 %v2702
  %3133 = vmatprep.subr.bf16.mxu0 %v2709
  %3134 = vmatpush1.bf16.msra.mxu0 %v2708
  %3135 = vmatprep.subr.bf16.mxu0 %v2715
  %3136 = vmatpush1.bf16.msra.mxu0 %v2714
  %3137 = vmatprep.subr.bf16.mxu0 %v2721
  %3138 = vmatpush1.bf16.msra.mxu0 %v2720
  %3139 = vmatprep.subr.bf16.mxu0 %v2727
  %3140 = vmatpush1.bf16.msra.mxu0 %v2726
  %3141 = vmatprep.subr.bf16.mxu0 %v2733
  %3142 = vmatpush1.bf16.msra.mxu0 %v2732
  %3143 = vmatprep.mubr.bf16.mxu0 %v1861
  %3144 = vmatmul.mubr.bf16.gmra.mrb[0].mxu0 %v1860
  %v3145 = vpop.f32.mrb[0].mxu0
  %v3146 = vadd.f32 %v2063, %v3145
  %v3147 = vpop.f32.mrb[0].mxu0
  %v3148 = vadd.f32 %v2067, %v3147
  %v3149 = vpop.f32.mrb[0].mxu0
  %v3150 = vpop.f32.mrb[0].mxu0
  %3151 = vdwg.mxu0
  %3152 = vmatprep.subr.bf16.mxu0 %v2739
  %3153 = vmatpush1.bf16.msra.mxu0 %v2738
  %3154 = vmatprep.subr.bf16.mxu0 %v2745
  %3155 = vmatpush1.bf16.msra.mxu0 %v2744
  %3156 = vmatprep.subr.bf16.mxu0 %v2751
  %3157 = vmatpush1.bf16.msra.mxu0 %v2750
  %3158 = vmatprep.subr.bf16.mxu0 %v2757
  %3159 = vmatpush1.bf16.msra.mxu0 %v2756
  %3160 = vmatprep.subr.bf16.mxu0 %v2763
  %3161 = vmatpush1.bf16.msra.mxu0 %v2762
  %3162 = vmatprep.subr.bf16.mxu0 %v2769
  %3163 = vmatpush1.bf16.msra.mxu0 %v2768
  %3164 = vmatprep.subr.bf16.mxu0 %v2775
  %3165 = vmatpush1.bf16.msra.mxu0 %v2774
  %3166 = vmatprep.subr.bf16.mxu0 %v2781
  %3167 = vmatpush1.bf16.msra.mxu0 %v2780
  %3168 = vmatprep.subr.bf16.mxu0 %v2787
  %3169 = vmatpush1.bf16.msra.mxu0 %v2786
  %3170 = vmatprep.subr.bf16.mxu0 %v2793
  %3171 = vmatpush1.bf16.msra.mxu0 %v2792
  %3172 = vmatprep.subr.bf16.mxu0 %v2799
  %3173 = vmatpush1.bf16.msra.mxu0 %v2798
  %3174 = vmatprep.subr.bf16.mxu0 %v2805
  %3175 = vmatpush1.bf16.msra.mxu0 %v2804
  %3176 = vmatprep.subr.bf16.mxu0 %v2811
  %3177 = vmatpush1.bf16.msra.mxu0 %v2810
  %3178 = vmatprep.subr.bf16.mxu0 %v2817
  %3179 = vmatpush1.bf16.msra.mxu0 %v2816
  %3180 = vmatprep.subr.bf16.mxu0 %v3021
  %3181 = vmatpush1.bf16.msra.mxu0 %v3018
  %3182 = vmatprep.subr.bf16.mxu0 0
  %3183 = vmatpush1.bf16.msra.mxu0 0
  %3184 = vmatprep.mubr.bf16.mxu0 %v3008
  %3185 = vmatmul.mubr.bf16.gmra.mrb[0].mxu0 %v1862
  %v3186 = vpop.f32.mrb[0].mxu0
  %v3187 = vadd.f32 %v3146, %v3186
  %v3188 = vpop.f32.mrb[0].mxu0
  %v3189 = vadd.f32 %v3148, %v3188
  %v3190 = vpop.f32.mrb[0].mxu0
  %v3191 = vpop.f32.mrb[0].mxu0
  %3192 = vdwg.mxu0
  %3193 = vmatprep.subr.bf16.mxu0 %v2645
  %3194 = vmatpush1.bf16.msra.mxu0 %v2644
  %3195 = vmatprep.subr.bf16.mxu0 %v2651
  %3196 = vmatpush1.bf16.msra.mxu0 %v2650
  %3197 = vmatprep.subr.bf16.mxu0 %v2657
  %3198 = vmatpush1.bf16.msra.mxu0 %v2656
  %3199 = vmatprep.subr.bf16.mxu0 %v2663
  %3200 = vmatpush1.bf16.msra.mxu0 %v2662
  %3201 = vmatprep.subr.bf16.mxu0 %v2669
  %3202 = vmatpush1.bf16.msra.mxu0 %v2668
  %3203 = vmatprep.subr.bf16.mxu0 %v2675
  %3204 = vmatpush1.bf16.msra.mxu0 %v2674
  %3205 = vmatprep.subr.bf16.mxu0 %v2681
  %3206 = vmatpush1.bf16.msra.mxu0 %v2680
  %3207 = vmatprep.subr.bf16.mxu0 %v2687
  %3208 = vmatpush1.bf16.msra.mxu0 %v2686
  %3209 = vmatprep.subr.bf16.mxu0 %v2693
  %3210 = vmatpush1.bf16.msra.mxu0 %v2692
  %3211 = vmatprep.subr.bf16.mxu0 %v2699
  %3212 = vmatpush1.bf16.msra.mxu0 %v2698
  %3213 = vmatprep.subr.bf16.mxu0 %v2705
  %3214 = vmatpush1.bf16.msra.mxu0 %v2704
  %3215 = vmatprep.subr.bf16.mxu0 %v2711
  %3216 = vmatpush1.bf16.msra.mxu0 %v2710
  %3217 = vmatprep.subr.bf16.mxu0 %v2717
  %3218 = vmatpush1.bf16.msra.mxu0 %v2716
  %3219 = vmatprep.subr.bf16.mxu0 %v2723
  %3220 = vmatpush1.bf16.msra.mxu0 %v2722
  %3221 = vmatprep.subr.bf16.mxu0 %v2729
  %3222 = vmatpush1.bf16.msra.mxu0 %v2728
  %3223 = vmatprep.subr.bf16.mxu0 %v2735
  %3224 = vmatpush1.bf16.msra.mxu0 %v2734
  %3225 = vmatprep.mubr.bf16.mxu0 %v1861
  %3226 = vmatmul.mubr.bf16.gmra.mrb[0].mxu0 %v1860
  %v3227 = vpop.f32.mrb[0].mxu0
  %v3228 = vadd.f32 %v2071, %v3227
  %v3229 = vpop.f32.mrb[0].mxu0
  %v3230 = vadd.f32 %v2075, %v3229
  %v3231 = vpop.f32.mrb[0].mxu0
  %v3232 = vpop.f32.mrb[0].mxu0
  %3233 = vdwg.mxu0
  %3234 = vmatprep.subr.bf16.mxu0 %v2741
  %3235 = vmatpush1.bf16.msra.mxu0 %v2740
  %3236 = vmatprep.subr.bf16.mxu0 %v2747
  %3237 = vmatpush1.bf16.msra.mxu0 %v2746
  %3238 = vmatprep.subr.bf16.mxu0 %v2753
  %3239 = vmatpush1.bf16.msra.mxu0 %v2752
  %3240 = vmatprep.subr.bf16.mxu0 %v2759
  %3241 = vmatpush1.bf16.msra.mxu0 %v2758
  %3242 = vmatprep.subr.bf16.mxu0 %v2765
  %3243 = vmatpush1.bf16.msra.mxu0 %v2764
  %3244 = vmatprep.subr.bf16.mxu0 %v2771
  %3245 = vmatpush1.bf16.msra.mxu0 %v2770
  %3246 = vmatprep.subr.bf16.mxu0 %v2777
  %3247 = vmatpush1.bf16.msra.mxu0 %v2776
  %3248 = vmatprep.subr.bf16.mxu0 %v2783
  %3249 = vmatpush1.bf16.msra.mxu0 %v2782
  %3250 = vmatprep.subr.bf16.mxu0 %v2789
  %3251 = vmatpush1.bf16.msra.mxu0 %v2788
  %3252 = vmatprep.subr.bf16.mxu0 %v2795
  %3253 = vmatpush1.bf16.msra.mxu0 %v2794
  %3254 = vmatprep.subr.bf16.mxu0 %v2801
  %3255 = vmatpush1.bf16.msra.mxu0 %v2800
  %3256 = vmatprep.subr.bf16.mxu0 %v2807
  %3257 = vmatpush1.bf16.msra.mxu0 %v2806
  %3258 = vmatprep.subr.bf16.mxu0 %v2813
  %3259 = vmatpush1.bf16.msra.mxu0 %v2812
  %3260 = vmatprep.subr.bf16.mxu0 %v2819
  %3261 = vmatpush1.bf16.msra.mxu0 %v2818
  %3262 = vmatprep.subr.bf16.mxu0 %v3027
  %3263 = vmatpush1.bf16.msra.mxu0 %v3024
  %3264 = vmatprep.subr.bf16.mxu0 0
  %3265 = vmatpush1.bf16.msra.mxu0 0
  %3266 = vmatprep.mubr.bf16.mxu0 %v3008
  %3267 = vmatmul.mubr.bf16.gmra.mrb[0].mxu0 %v1862
  %v3268 = vpop.f32.mrb[0].mxu0
  %v3269 = vadd.f32 %v3228, %v3268
  %v3270 = vpop.f32.mrb[0].mxu0
  %v3271 = vadd.f32 %v3230, %v3270
  %v3272 = vpop.f32.mrb[0].mxu0
  %v3273 = vpop.f32.mrb[0].mxu0
  %3274 = vdwg.mxu0
  %v3275 = vmax.f32 %v3105, 0.0
  %v3276 = vmax.f32 %v3107, 0.0
  %v3277 = vmax.f32 %v3187, 0.0
  %v3278 = vmax.f32 %v3189, 0.0
  %v3279 = vmax.f32 %v3269, 0.0
  %v3280 = vmax.f32 %v3271, 0.0
  %v3281 = vpack.c.bf16 %v3275, %v3275
  %v3282 = vpack.c.bf16 %v3276, %v3276
  %v3283 = vpack.c.bf16 %v3277, %v3277
  %v3284 = vpack.c.bf16 %v3278, %v3278
  %v3285 = vpack.c.bf16 %v3279, %v3279
  %v3286 = vpack.c.bf16 %v3280, %v3280
  %v3287 = vld [vmem:[%s5] sm:$0xff]
  %v3288 = vld [vmem:[%s5 + $0x8] sm:$0xff]
  %v3289 = vld [vmem:[%s5 + $0x10] sm:$0xff]
  %v3290 = vld [vmem:[%s5 + $0x18] sm:$0xff]
  %v3291 = vld [vmem:[%s5 + $0x20] sm:$0xff]
  %v3292 = vld [vmem:[%s5 + $0x28] sm:$0xff]
  %v3293 = vld [vmem:[%s5 + $0x30] sm:$0xff]
  %v3294 = vld [vmem:[%s5 + $0x38] sm:$0xff]
  %v3295 = vld [vmem:[%s5 + $0x40] sm:$0xff]
  %v3296 = vld [vmem:[%s5 + $0x48] sm:$0xff]
  %v3297 = vld [vmem:[%s5 + $0x50] sm:$0xff]
  %v3298 = vld [vmem:[%s5 + $0x58] sm:$0xff]
  %v3299 = vld [vmem:[%s5 + $0x60] sm:$0xff]
  %v3300 = vld [vmem:[%s5 + $0x68] sm:$0xff]
  %v3301 = vld [vmem:[%s5 + $0x70] sm:$0xff]
  %v3302 = vld [vmem:[%s5 + $0x78] sm:$0xff]
  %v3303 = vld [vmem:[%s5 + $0x80] sm:$0xff]
  %v3304 = vld [vmem:[%s5 + $0x88] sm:$0xff]
  %v3305 = vld [vmem:[%s5 + $0x90] sm:$0xff]
  %v3306 = vld [vmem:[%s5 + $0x98] sm:$0xff]
  %v3307 = vld [vmem:[%s5 + $0xa0] sm:$0xff]
  %v3308 = vld [vmem:[%s5 + $0xa8] sm:$0xff]
  %v3309 = vld [vmem:[%s5 + $0xb0] sm:$0xff]
  %v3310 = vld [vmem:[%s5 + $0xb8] sm:$0xff]
  %v3311 = vld [vmem:[%s5 + $0xc0] sm:$0xff]
  %v3312 = vld [vmem:[%s5 + $0xc8] sm:$0xff]
  %v3313 = vld [vmem:[%s5 + $0xd0] sm:$0xff]
  %v3314 = vld [vmem:[%s5 + $0xd8] sm:$0xff]
  %v3315 = vld [vmem:[%s5 + $0xe0] sm:$0xff]
  %v3316 = vld [vmem:[%s5 + $0xe8] sm:$0xff]
  %v3317 = vld [vmem:[%s5 + $0xf0] sm:$0xff]
  %v3318 = vld [vmem:[%s5 + $0xf8] sm:$0xff]
  %v3319 = vld [vmem:[%s5 + $0x100] sm:$0xff]
  %v3320 = vld [vmem:[%s5 + $0x108] sm:$0xff]
  %v3321 = vld [vmem:[%s5 + $0x110] sm:$0xff]
  %v3322 = vld [vmem:[%s5 + $0x118] sm:$0xff]
  %v3323 = vld [vmem:[%s5 + $0x120] sm:$0xff]
  %v3324 = vld [vmem:[%s5 + $0x128] sm:$0xff]
  %v3325 = vld [vmem:[%s5 + $0x130] sm:$0xff]
  %v3326 = vld [vmem:[%s5 + $0x138] sm:$0xff]
  %v3327 = vld [vmem:[%s5 + $0x140] sm:$0xff]
  %v3328 = vld [vmem:[%s5 + $0x148] sm:$0xff]
  %v3329 = vld [vmem:[%s5 + $0x150] sm:$0xff]
  %v3330 = vld [vmem:[%s5 + $0x158] sm:$0xff]
  %v3331 = vld [vmem:[%s5 + $0x160] sm:$0xff]
  %v3332 = vld [vmem:[%s5 + $0x168] sm:$0xff]
  %v3333 = vld [vmem:[%s5 + $0x170] sm:$0xff]
  %v3334 = vld [vmem:[%s5 + $0x178] sm:$0xff]
  %v3335 = vld [vmem:[%s5 + $0x180] sm:$0xff]
  %v3336 = vld [vmem:[%s5 + $0x188] sm:$0xff]
  %v3337 = vld [vmem:[%s5 + $0x190] sm:$0xff]
  %v3338 = vld [vmem:[%s5 + $0x198] sm:$0xff]
  %v3339 = vld [vmem:[%s5 + $0x1a0] sm:$0xff]
  %v3340 = vld [vmem:[%s5 + $0x1a8] sm:$0xff]
  %v3341 = vld [vmem:[%s5 + $0x1b0] sm:$0xff]
  %v3342 = vld [vmem:[%s5 + $0x1b8] sm:$0xff]
  %v3343 = vld [vmem:[%s5 + $0x1c0] sm:$0xff]
  %v3344 = vld [vmem:[%s5 + $0x1c8] sm:$0xff]
  %v3345 = vld [vmem:[%s5 + $0x1d0] sm:$0xff]
  %v3346 = vld [vmem:[%s5 + $0x1d8] sm:$0xff]
  %v3347 = vld [vmem:[%s5 + $0x1e0] sm:$0xff]
  %v3348 = vld [vmem:[%s5 + $0x1e8] sm:$0xff]
  %v3349 = vld [vmem:[%s5 + $0x1f0] sm:$0xff]
  %v3350 = vld [vmem:[%s5 + $0x1f8] sm:$0xff]
  %v3351 = vld [vmem:[%s5 + $0x200] sm:$0xff]
  %v3352 = vld [vmem:[%s5 + $0x208] sm:$0xff]
  %v3353 = vld [vmem:[%s5 + $0x210] sm:$0xff]
  %v3354 = vld [vmem:[%s5 + $0x218] sm:$0xff]
  %v3355 = vld [vmem:[%s5 + $0x220] sm:$0xff]
  %v3356 = vld [vmem:[%s5 + $0x228] sm:$0xff]
  %v3357 = vld [vmem:[%s5 + $0x230] sm:$0xff]
  %v3358 = vld [vmem:[%s5 + $0x238] sm:$0xff]
  %v3359 = vld [vmem:[%s5 + $0x240] sm:$0xff]
  %v3360 = vld [vmem:[%s5 + $0x248] sm:$0xff]
  %v3361 = vld [vmem:[%s5 + $0x250] sm:$0xff]
  %v3362 = vld [vmem:[%s5 + $0x258] sm:$0xff]
  %v3363 = vld [vmem:[%s5 + $0x260] sm:$0xff]
  %v3364 = vld [vmem:[%s5 + $0x268] sm:$0xff]
  %v3365 = vld [vmem:[%s5 + $0x270] sm:$0xff]
  %v3366 = vld [vmem:[%s5 + $0x278] sm:$0xff]
  %v3367 = vld [vmem:[%s5 + $0x280] sm:$0xff]
  %v3368 = vld [vmem:[%s5 + $0x288] sm:$0xff]
  %v3369 = vld [vmem:[%s5 + $0x290] sm:$0xff]
  %v3370 = vld [vmem:[%s5 + $0x298] sm:$0xff]
  %v3371 = vld [vmem:[%s5 + $0x2a0] sm:$0xff]
  %v3372 = vld [vmem:[%s5 + $0x2a8] sm:$0xff]
  %v3373 = vld [vmem:[%s5 + $0x2b0] sm:$0xff]
  %v3374 = vld [vmem:[%s5 + $0x2b8] sm:$0xff]
  %v3375 = vld [vmem:[%s5 + $0x2c0] sm:$0xff]
  %v3376 = vld [vmem:[%s5 + $0x2c8] sm:$0xff]
  %v3377 = vld [vmem:[%s5 + $0x2d0] sm:$0xff]
  %v3378 = vld [vmem:[%s5 + $0x2d8] sm:$0xff]
  %v3379 = vld [vmem:[%s5 + $0x2e0] sm:$0xff]
  %v3380 = vld [vmem:[%s5 + $0x2e8] sm:$0xff]
  %v3381 = vld [vmem:[%s5 + $0x2f0] sm:$0xff]
  %v3382 = vld [vmem:[%s5 + $0x2f8] sm:$0xff]
  %v3383 = vld [vmem:[%s5 + $0x300] sm:$0xff]
  %v3384 = vld [vmem:[%s5 + $0x308] sm:$0xff]
  %v3385 = vld [vmem:[%s5 + $0x310] sm:$0xff]
  %v3386 = vld [vmem:[%s5 + $0x318] sm:$0xff]
  %v3387 = vld [vmem:[%s5 + $0x320] sm:$0xff]
  %v3388 = vld [vmem:[%s5 + $0x328] sm:$0xff]
  %v3389 = vld [vmem:[%s5 + $0x330] sm:$0xff]
  %v3390 = vld [vmem:[%s5 + $0x338] sm:$0xff]
  %v3391 = vld [vmem:[%s5 + $0x340] sm:$0xff]
  %v3392 = vld [vmem:[%s5 + $0x348] sm:$0xff]
  %v3393 = vld [vmem:[%s5 + $0x350] sm:$0xff]
  %v3394 = vld [vmem:[%s5 + $0x358] sm:$0xff]
  %v3395 = vld [vmem:[%s5 + $0x360] sm:$0xff]
  %v3396 = vld [vmem:[%s5 + $0x368] sm:$0xff]
  %v3397 = vld [vmem:[%s5 + $0x370] sm:$0xff]
  %v3398 = vld [vmem:[%s5 + $0x378] sm:$0xff]
  %v3399 = vld [vmem:[%s5 + $0x380] sm:$0xff]
  %v3400 = vld [vmem:[%s5 + $0x388] sm:$0xff]
  %v3401 = vld [vmem:[%s5 + $0x390] sm:$0xff]
  %v3402 = vld [vmem:[%s5 + $0x398] sm:$0xff]
  %v3403 = vld [vmem:[%s5 + $0x3a0] sm:$0xff]
  %v3404 = vld [vmem:[%s5 + $0x3a8] sm:$0xff]
  %v3405 = vld [vmem:[%s5 + $0x3b0] sm:$0xff]
  %v3406 = vld [vmem:[%s5 + $0x3b8] sm:$0xff]
  %v3407 = vld [vmem:[%s5 + $0x3c0] sm:$0xff]
  %v3408 = vld [vmem:[%s5 + $0x3c8] sm:$0xff]
  %v3409 = vld [vmem:[%s5 + $0x3d0] sm:$0xff]
  %v3410 = vld [vmem:[%s5 + $0x3d8] sm:$0xff]
  %v3411 = vld [vmem:[%s5 + $0x3e0] sm:$0xff]
  %v3412 = vld [vmem:[%s5 + $0x3e8] sm:$0xff]
  %v3413 = vld [vmem:[%s5 + $0x3f0] sm:$0xff]
  %v3414 = vld [vmem:[%s5 + $0x3f8] sm:$0xff]
  %v3415 = vld [vmem:[%s5 + $0x400] sm:$0xff]
  %v3416 = vld [vmem:[%s5 + $0x408] sm:$0xff]
  %v3417 = vld [vmem:[%s5 + $0x410] sm:$0xff]
  %v3418 = vld [vmem:[%s5 + $0x418] sm:$0xff]
  %v3419 = vld [vmem:[%s5 + $0x420] sm:$0xff]
  %v3420 = vld [vmem:[%s5 + $0x428] sm:$0xff]
  %v3421 = vld [vmem:[%s5 + $0x430] sm:$0xff]
  %v3422 = vld [vmem:[%s5 + $0x438] sm:$0xff]
  %v3423 = vld [vmem:[%s5 + $0x440] sm:$0xff]
  %v3424 = vld [vmem:[%s5 + $0x448] sm:$0xff]
  %v3425 = vld [vmem:[%s5 + $0x450] sm:$0xff]
  %v3426 = vld [vmem:[%s5 + $0x458] sm:$0xff]
  %v3427 = vld [vmem:[%s5 + $0x460] sm:$0xff]
  %v3428 = vld [vmem:[%s5 + $0x468] sm:$0xff]
  %v3429 = vld [vmem:[%s5 + $0x470] sm:$0xff]
  %v3430 = vld [vmem:[%s5 + $0x478] sm:$0xff]
  %v3431 = vld [vmem:[%s5 + $0x480] sm:$0xff]
  %v3432 = vld [vmem:[%s5 + $0x488] sm:$0xff]
  %v3433 = vld [vmem:[%s5 + $0x490] sm:$0xff]
  %v3434 = vld [vmem:[%s5 + $0x498] sm:$0xff]
  %v3435 = vld [vmem:[%s5 + $0x4a0] sm:$0xff]
  %v3436 = vld [vmem:[%s5 + $0x4a8] sm:$0xff]
  %v3437 = vld [vmem:[%s5 + $0x4b0] sm:$0xff]
  %v3438 = vld [vmem:[%s5 + $0x4b8] sm:$0xff]
  %v3439 = vld [vmem:[%s5 + $0x4c0] sm:$0xff]
  %v3440 = vld [vmem:[%s5 + $0x4c8] sm:$0xff]
  %v3441 = vld [vmem:[%s5 + $0x4d0] sm:$0xff]
  %v3442 = vld [vmem:[%s5 + $0x4d8] sm:$0xff]
  %v3443 = vld [vmem:[%s5 + $0x4e0] sm:$0xff]
  %v3444 = vld [vmem:[%s5 + $0x4e8] sm:$0xff]
  %v3445 = vld [vmem:[%s5 + $0x4f0] sm:$0xff]
  %v3446 = vld [vmem:[%s5 + $0x4f8] sm:$0xff]
  %v3447 = vld [vmem:[%s5 + $0x500] sm:$0xff]
  %v3448 = vld [vmem:[%s5 + $0x508] sm:$0xff]
  %v3449 = vld [vmem:[%s5 + $0x510] sm:$0xff]
  %v3450 = vld [vmem:[%s5 + $0x518] sm:$0xff]
  %v3451 = vld [vmem:[%s5 + $0x520] sm:$0xff]
  %v3452 = vld [vmem:[%s5 + $0x528] sm:$0xff]
  %v3453 = vld [vmem:[%s5 + $0x530] sm:$0xff]
  %v3454 = vld [vmem:[%s5 + $0x538] sm:$0xff]
  %v3455 = vld [vmem:[%s5 + $0x540] sm:$0xff]
  %v3456 = vld [vmem:[%s5 + $0x548] sm:$0xff]
  %v3457 = vld [vmem:[%s5 + $0x550] sm:$0xff]
  %v3458 = vld [vmem:[%s5 + $0x558] sm:$0xff]
  %v3459 = vld [vmem:[%s5 + $0x560] sm:$0xff]
  %v3460 = vld [vmem:[%s5 + $0x568] sm:$0xff]
  %v3461 = vld [vmem:[%s5 + $0x570] sm:$0xff]
  %v3462 = vld [vmem:[%s5 + $0x578] sm:$0xff]
  %v3463 = vld [vmem:[%s5 + $0x580] sm:$0xff]
  %v3464 = vld [vmem:[%s5 + $0x588] sm:$0xff]
  %v3465 = vld [vmem:[%s5 + $0x590] sm:$0xff]
  %v3466 = vld [vmem:[%s5 + $0x598] sm:$0xff]
  %v3467 = vld [vmem:[%s6] sm:$0xf]
  %v3469 = vlaneseq
  %v3470 = vshrl.u32 %v3469, 7
  %v3471 = vsub.s32 0, %v3470
  %v3472 = vrot.slane %v3467, %v3471
  %v3473 = vlaneseq
  %v3474 = vshrl.u32 %v3473, 7
  %v3475 = vsub.s32 1, %v3474
  %v3476 = vrot.slane %v3467, %v3475
  %v3477 = vlaneseq
  %v3478 = vshrl.u32 %v3477, 7
  %v3479 = vsub.s32 2, %v3478
  %v3480 = vrot.slane %v3467, %v3479
  %v3481 = vlaneseq
  %v3482 = vshrl.u32 %v3481, 7
  %v3483 = vsub.s32 3, %v3482
  %v3484 = vrot.slane %v3467, %v3483
  %v3669 = vunpack.c.l.b16 %v3287
  %v3670 = vunpack.c.h.b16 %v3287
  %v3671 = vunpack.c.l.b16 %v3288
  %v3672 = vunpack.c.h.b16 %v3288
  %v3673 = vunpack.c.l.b16 %v3289
  %v3674 = vunpack.c.h.b16 %v3289
  %v3675 = vunpack.c.l.b16 %v3290
  %v3676 = vunpack.c.h.b16 %v3290
  %v3677 = vunpack.c.l.b16 %v3291
  %v3678 = vunpack.c.h.b16 %v3291
  %v3679 = vunpack.c.l.b16 %v3292
  %v3680 = vunpack.c.h.b16 %v3292
  %v3681 = vunpack.c.l.b16 %v3293
  %v3682 = vunpack.c.h.b16 %v3293
  %v3683 = vunpack.c.l.b16 %v3294
  %v3684 = vunpack.c.h.b16 %v3294
  %v3685 = vunpack.c.l.b16 %v3295
  %v3686 = vunpack.c.h.b16 %v3295
  %v3687 = vunpack.c.l.b16 %v3296
  %v3688 = vunpack.c.h.b16 %v3296
  %v3689 = vunpack.c.l.b16 %v3297
  %v3690 = vunpack.c.h.b16 %v3297
  %v3691 = vunpack.c.l.b16 %v3298
  %v3692 = vunpack.c.h.b16 %v3298
  %v3693 = vunpack.c.l.b16 %v3299
  %v3694 = vunpack.c.h.b16 %v3299
  %v3695 = vunpack.c.l.b16 %v3300
  %v3696 = vunpack.c.h.b16 %v3300
  %v3697 = vunpack.c.l.b16 %v3301
  %v3698 = vunpack.c.h.b16 %v3301
  %v3699 = vunpack.c.l.b16 %v3302
  %v3700 = vunpack.c.h.b16 %v3302
  %v3701 = vunpack.c.l.b16 %v3303
  %v3702 = vunpack.c.h.b16 %v3303
  %v3703 = vunpack.c.l.b16 %v3304
  %v3704 = vunpack.c.h.b16 %v3304
  %v3705 = vunpack.c.l.b16 %v3305
  %v3706 = vunpack.c.h.b16 %v3305
  %v3707 = vunpack.c.l.b16 %v3306
  %v3708 = vunpack.c.h.b16 %v3306
  %v3709 = vunpack.c.l.b16 %v3307
  %v3710 = vunpack.c.h.b16 %v3307
  %v3711 = vunpack.c.l.b16 %v3308
  %v3712 = vunpack.c.h.b16 %v3308
  %v3713 = vunpack.c.l.b16 %v3309
  %v3714 = vunpack.c.h.b16 %v3309
  %v3715 = vunpack.c.l.b16 %v3310
  %v3716 = vunpack.c.h.b16 %v3310
  %v3717 = vunpack.c.l.b16 %v3311
  %v3718 = vunpack.c.h.b16 %v3311
  %v3719 = vunpack.c.l.b16 %v3312
  %v3720 = vunpack.c.h.b16 %v3312
  %v3721 = vunpack.c.l.b16 %v3313
  %v3722 = vunpack.c.h.b16 %v3313
  %v3723 = vunpack.c.l.b16 %v3314
  %v3724 = vunpack.c.h.b16 %v3314
  %v3725 = vunpack.c.l.b16 %v3315
  %v3726 = vunpack.c.h.b16 %v3315
  %v3727 = vunpack.c.l.b16 %v3316
  %v3728 = vunpack.c.h.b16 %v3316
  %v3729 = vunpack.c.l.b16 %v3317
  %v3730 = vunpack.c.h.b16 %v3317
  %v3731 = vunpack.c.l.b16 %v3318
  %v3732 = vunpack.c.h.b16 %v3318
  %v3733 = vunpack.c.l.b16 %v3319
  %v3734 = vunpack.c.h.b16 %v3319
  %v3735 = vunpack.c.l.b16 %v3320
  %v3736 = vunpack.c.h.b16 %v3320
  %v3737 = vunpack.c.l.b16 %v3321
  %v3738 = vunpack.c.h.b16 %v3321
  %v3739 = vunpack.c.l.b16 %v3322
  %v3740 = vunpack.c.h.b16 %v3322
  %v3741 = vunpack.c.l.b16 %v3323
  %v3742 = vunpack.c.h.b16 %v3323
  %v3743 = vunpack.c.l.b16 %v3324
  %v3744 = vunpack.c.h.b16 %v3324
  %v3745 = vunpack.c.l.b16 %v3325
  %v3746 = vunpack.c.h.b16 %v3325
  %v3747 = vunpack.c.l.b16 %v3326
  %v3748 = vunpack.c.h.b16 %v3326
  %v3749 = vunpack.c.l.b16 %v3327
  %v3750 = vunpack.c.h.b16 %v3327
  %v3751 = vunpack.c.l.b16 %v3328
  %v3752 = vunpack.c.h.b16 %v3328
  %v3753 = vunpack.c.l.b16 %v3329
  %v3754 = vunpack.c.h.b16 %v3329
  %v3755 = vunpack.c.l.b16 %v3330
  %v3756 = vunpack.c.h.b16 %v3330
  %v3757 = vunpack.c.l.b16 %v3331
  %v3758 = vunpack.c.h.b16 %v3331
  %v3759 = vunpack.c.l.b16 %v3332
  %v3760 = vunpack.c.h.b16 %v3332
  %v3761 = vunpack.c.l.b16 %v3333
  %v3762 = vunpack.c.h.b16 %v3333
  %v3763 = vunpack.c.l.b16 %v3334
  %v3764 = vunpack.c.h.b16 %v3334
  %v3765 = vunpack.c.l.b16 %v3335
  %v3766 = vunpack.c.h.b16 %v3335
  %v3767 = vunpack.c.l.b16 %v3336
  %v3768 = vunpack.c.h.b16 %v3336
  %v3769 = vunpack.c.l.b16 %v3337
  %v3770 = vunpack.c.h.b16 %v3337
  %v3771 = vunpack.c.l.b16 %v3338
  %v3772 = vunpack.c.h.b16 %v3338
  %v3773 = vunpack.c.l.b16 %v3339
  %v3774 = vunpack.c.h.b16 %v3339
  %v3775 = vunpack.c.l.b16 %v3340
  %v3776 = vunpack.c.h.b16 %v3340
  %v3777 = vunpack.c.l.b16 %v3341
  %v3778 = vunpack.c.h.b16 %v3341
  %v3779 = vunpack.c.l.b16 %v3342
  %v3780 = vunpack.c.h.b16 %v3342
  %v3781 = vunpack.c.l.b16 %v3343
  %v3782 = vunpack.c.h.b16 %v3343
  %v3783 = vunpack.c.l.b16 %v3344
  %v3784 = vunpack.c.h.b16 %v3344
  %v3785 = vunpack.c.l.b16 %v3345
  %v3786 = vunpack.c.h.b16 %v3345
  %v3787 = vunpack.c.l.b16 %v3346
  %v3788 = vunpack.c.h.b16 %v3346
  %v3789 = vunpack.c.l.b16 %v3347
  %v3790 = vunpack.c.h.b16 %v3347
  %v3791 = vunpack.c.l.b16 %v3348
  %v3792 = vunpack.c.h.b16 %v3348
  %v3793 = vunpack.c.l.b16 %v3349
  %v3794 = vunpack.c.h.b16 %v3349
  %v3795 = vunpack.c.l.b16 %v3350
  %v3796 = vunpack.c.h.b16 %v3350
  %v3797 = vunpack.c.l.b16 %v3351
  %v3798 = vunpack.c.h.b16 %v3351
  %v3799 = vunpack.c.l.b16 %v3352
  %v3800 = vunpack.c.h.b16 %v3352
  %v3801 = vunpack.c.l.b16 %v3353
  %v3802 = vunpack.c.h.b16 %v3353
  %v3803 = vunpack.c.l.b16 %v3354
  %v3804 = vunpack.c.h.b16 %v3354
  %v3805 = vunpack.c.l.b16 %v3355
  %v3806 = vunpack.c.h.b16 %v3355
  %v3807 = vunpack.c.l.b16 %v3356
  %v3808 = vunpack.c.h.b16 %v3356
  %v3809 = vunpack.c.l.b16 %v3357
  %v3810 = vunpack.c.h.b16 %v3357
  %v3811 = vunpack.c.l.b16 %v3358
  %v3812 = vunpack.c.h.b16 %v3358
  %v3813 = vunpack.c.l.b16 %v3359
  %v3814 = vunpack.c.h.b16 %v3359
  %v3815 = vunpack.c.l.b16 %v3360
  %v3816 = vunpack.c.h.b16 %v3360
  %v3817 = vunpack.c.l.b16 %v3361
  %v3818 = vunpack.c.h.b16 %v3361
  %v3819 = vunpack.c.l.b16 %v3362
  %v3820 = vunpack.c.h.b16 %v3362
  %v3821 = vunpack.c.l.b16 %v3363
  %v3822 = vunpack.c.h.b16 %v3363
  %v3823 = vunpack.c.l.b16 %v3364
  %v3824 = vunpack.c.h.b16 %v3364
  %v3825 = vunpack.c.l.b16 %v3365
  %v3826 = vunpack.c.h.b16 %v3365
  %v3827 = vunpack.c.l.b16 %v3366
  %v3828 = vunpack.c.h.b16 %v3366
  %v3829 = vunpack.c.l.b16 %v3367
  %v3830 = vunpack.c.h.b16 %v3367
  %v3831 = vunpack.c.l.b16 %v3368
  %v3832 = vunpack.c.h.b16 %v3368
  %v3833 = vunpack.c.l.b16 %v3369
  %v3834 = vunpack.c.h.b16 %v3369
  %v3835 = vunpack.c.l.b16 %v3370
  %v3836 = vunpack.c.h.b16 %v3370
  %v3837 = vunpack.c.l.b16 %v3371
  %v3838 = vunpack.c.h.b16 %v3371
  %v3839 = vunpack.c.l.b16 %v3372
  %v3840 = vunpack.c.h.b16 %v3372
  %v3841 = vunpack.c.l.b16 %v3373
  %v3842 = vunpack.c.h.b16 %v3373
  %v3843 = vunpack.c.l.b16 %v3374
  %v3844 = vunpack.c.h.b16 %v3374
  %v3845 = vunpack.c.l.b16 %v3375
  %v3846 = vunpack.c.h.b16 %v3375
  %v3847 = vunpack.c.l.b16 %v3376
  %v3848 = vunpack.c.h.b16 %v3376
  %v3849 = vunpack.c.l.b16 %v3377
  %v3850 = vunpack.c.h.b16 %v3377
  %v3851 = vunpack.c.l.b16 %v3378
  %v3852 = vunpack.c.h.b16 %v3378
  %v3853 = vunpack.c.l.b16 %v3379
  %v3854 = vunpack.c.h.b16 %v3379
  %v3855 = vunpack.c.l.b16 %v3380
  %v3856 = vunpack.c.h.b16 %v3380
  %v3857 = vunpack.c.l.b16 %v3381
  %v3858 = vunpack.c.h.b16 %v3381
  %v3859 = vunpack.c.l.b16 %v3382
  %v3860 = vunpack.c.h.b16 %v3382
  %v3861 = vunpack.c.l.b16 %v3383
  %v3862 = vunpack.c.h.b16 %v3383
  %v3863 = vunpack.c.l.b16 %v3384
  %v3864 = vunpack.c.h.b16 %v3384
  %v3865 = vunpack.c.l.b16 %v3385
  %v3866 = vunpack.c.h.b16 %v3385
  %v3867 = vunpack.c.l.b16 %v3386
  %v3868 = vunpack.c.h.b16 %v3386
  %v3869 = vunpack.c.l.b16 %v3387
  %v3870 = vunpack.c.h.b16 %v3387
  %v3871 = vunpack.c.l.b16 %v3388
  %v3872 = vunpack.c.h.b16 %v3388
  %v3873 = vunpack.c.l.b16 %v3389
  %v3874 = vunpack.c.h.b16 %v3389
  %v3875 = vunpack.c.l.b16 %v3390
  %v3876 = vunpack.c.h.b16 %v3390
  %v3877 = vunpack.c.l.b16 %v3391
  %v3878 = vunpack.c.h.b16 %v3391
  %v3879 = vunpack.c.l.b16 %v3392
  %v3880 = vunpack.c.h.b16 %v3392
  %v3881 = vunpack.c.l.b16 %v3393
  %v3882 = vunpack.c.h.b16 %v3393
  %v3883 = vunpack.c.l.b16 %v3394
  %v3884 = vunpack.c.h.b16 %v3394
  %v3885 = vunpack.c.l.b16 %v3395
  %v3886 = vunpack.c.h.b16 %v3395
  %v3887 = vunpack.c.l.b16 %v3396
  %v3888 = vunpack.c.h.b16 %v3396
  %v3889 = vunpack.c.l.b16 %v3397
  %v3890 = vunpack.c.h.b16 %v3397
  %v3891 = vunpack.c.l.b16 %v3398
  %v3892 = vunpack.c.h.b16 %v3398
  %v3893 = vunpack.c.l.b16 %v3399
  %v3894 = vunpack.c.h.b16 %v3399
  %v3895 = vunpack.c.l.b16 %v3400
  %v3896 = vunpack.c.h.b16 %v3400
  %v3897 = vunpack.c.l.b16 %v3401
  %v3898 = vunpack.c.h.b16 %v3401
  %v3899 = vunpack.c.l.b16 %v3402
  %v3900 = vunpack.c.h.b16 %v3402
  %v3901 = vunpack.c.l.b16 %v3403
  %v3902 = vunpack.c.h.b16 %v3403
  %v3903 = vunpack.c.l.b16 %v3404
  %v3904 = vunpack.c.h.b16 %v3404
  %v3905 = vunpack.c.l.b16 %v3405
  %v3906 = vunpack.c.h.b16 %v3405
  %v3907 = vunpack.c.l.b16 %v3406
  %v3908 = vunpack.c.h.b16 %v3406
  %v3909 = vunpack.c.l.b16 %v3407
  %v3910 = vunpack.c.h.b16 %v3407
  %v3911 = vunpack.c.l.b16 %v3408
  %v3912 = vunpack.c.h.b16 %v3408
  %v3913 = vunpack.c.l.b16 %v3409
  %v3914 = vunpack.c.h.b16 %v3409
  %v3915 = vunpack.c.l.b16 %v3410
  %v3916 = vunpack.c.h.b16 %v3410
  %v3917 = vunpack.c.l.b16 %v3411
  %v3918 = vunpack.c.h.b16 %v3411
  %v3919 = vunpack.c.l.b16 %v3412
  %v3920 = vunpack.c.h.b16 %v3412
  %v3921 = vunpack.c.l.b16 %v3413
  %v3922 = vunpack.c.h.b16 %v3413
  %v3923 = vunpack.c.l.b16 %v3414
  %v3924 = vunpack.c.h.b16 %v3414
  %v3925 = vunpack.c.l.b16 %v3415
  %v3926 = vunpack.c.h.b16 %v3415
  %v3927 = vunpack.c.l.b16 %v3416
  %v3928 = vunpack.c.h.b16 %v3416
  %v3929 = vunpack.c.l.b16 %v3417
  %v3930 = vunpack.c.h.b16 %v3417
  %v3931 = vunpack.c.l.b16 %v3418
  %v3932 = vunpack.c.h.b16 %v3418
  %v3933 = vunpack.c.l.b16 %v3419
  %v3934 = vunpack.c.h.b16 %v3419
  %v3935 = vunpack.c.l.b16 %v3420
  %v3936 = vunpack.c.h.b16 %v3420
  %v3937 = vunpack.c.l.b16 %v3421
  %v3938 = vunpack.c.h.b16 %v3421
  %v3939 = vunpack.c.l.b16 %v3422
  %v3940 = vunpack.c.h.b16 %v3422
  %v3941 = vunpack.c.l.b16 %v3423
  %v3942 = vunpack.c.h.b16 %v3423
  %v3943 = vunpack.c.l.b16 %v3424
  %v3944 = vunpack.c.h.b16 %v3424
  %v3945 = vunpack.c.l.b16 %v3425
  %v3946 = vunpack.c.h.b16 %v3425
  %v3947 = vunpack.c.l.b16 %v3426
  %v3948 = vunpack.c.h.b16 %v3426
  %v3949 = vunpack.c.l.b16 %v3427
  %v3950 = vunpack.c.h.b16 %v3427
  %v3951 = vunpack.c.l.b16 %v3428
  %v3952 = vunpack.c.h.b16 %v3428
  %v3953 = vunpack.c.l.b16 %v3429
  %v3954 = vunpack.c.h.b16 %v3429
  %v3955 = vunpack.c.l.b16 %v3430
  %v3956 = vunpack.c.h.b16 %v3430
  %v3957 = vunpack.c.l.b16 %v3431
  %v3958 = vunpack.c.h.b16 %v3431
  %v3959 = vunpack.c.l.b16 %v3432
  %v3960 = vunpack.c.h.b16 %v3432
  %v3961 = vunpack.c.l.b16 %v3433
  %v3962 = vunpack.c.h.b16 %v3433
  %v3963 = vunpack.c.l.b16 %v3434
  %v3964 = vunpack.c.h.b16 %v3434
  %v3965 = vunpack.c.l.b16 %v3435
  %v3966 = vunpack.c.h.b16 %v3435
  %v3967 = vunpack.c.l.b16 %v3436
  %v3968 = vunpack.c.h.b16 %v3436
  %v3969 = vunpack.c.l.b16 %v3437
  %v3970 = vunpack.c.h.b16 %v3437
  %v3971 = vunpack.c.l.b16 %v3438
  %v3972 = vunpack.c.h.b16 %v3438
  %v3973 = vunpack.c.l.b16 %v3439
  %v3974 = vunpack.c.h.b16 %v3439
  %v3975 = vunpack.c.l.b16 %v3440
  %v3976 = vunpack.c.h.b16 %v3440
  %v3977 = vunpack.c.l.b16 %v3441
  %v3978 = vunpack.c.h.b16 %v3441
  %v3979 = vunpack.c.l.b16 %v3442
  %v3980 = vunpack.c.h.b16 %v3442
  %v3981 = vunpack.c.l.b16 %v3443
  %v3982 = vunpack.c.h.b16 %v3443
  %v3983 = vunpack.c.l.b16 %v3444
  %v3984 = vunpack.c.h.b16 %v3444
  %v3985 = vunpack.c.l.b16 %v3445
  %v3986 = vunpack.c.h.b16 %v3445
  %v3987 = vunpack.c.l.b16 %v3446
  %v3988 = vunpack.c.h.b16 %v3446
  %v3989 = vunpack.c.l.b16 %v3447
  %v3990 = vunpack.c.h.b16 %v3447
  %v3991 = vunpack.c.l.b16 %v3448
  %v3992 = vunpack.c.h.b16 %v3448
  %v3993 = vunpack.c.l.b16 %v3449
  %v3994 = vunpack.c.h.b16 %v3449
  %v3995 = vunpack.c.l.b16 %v3450
  %v3996 = vunpack.c.h.b16 %v3450
  %v3997 = vunpack.c.l.b16 %v3451
  %v3998 = vunpack.c.h.b16 %v3451
  %v3999 = vunpack.c.l.b16 %v3452
  %v4000 = vunpack.c.h.b16 %v3452
  %v4001 = vunpack.c.l.b16 %v3453
  %v4002 = vunpack.c.h.b16 %v3453
  %v4003 = vunpack.c.l.b16 %v3454
  %v4004 = vunpack.c.h.b16 %v3454
  %v4005 = vunpack.c.l.b16 %v3455
  %v4006 = vunpack.c.h.b16 %v3455
  %v4007 = vunpack.c.l.b16 %v3456
  %v4008 = vunpack.c.h.b16 %v3456
  %v4009 = vunpack.c.l.b16 %v3457
  %v4010 = vunpack.c.h.b16 %v3457
  %v4011 = vunpack.c.l.b16 %v3458
  %v4012 = vunpack.c.h.b16 %v3458
  %v4013 = vunpack.c.l.b16 %v3459
  %v4014 = vunpack.c.h.b16 %v3459
  %v4015 = vunpack.c.l.b16 %v3460
  %v4016 = vunpack.c.h.b16 %v3460
  %v4017 = vunpack.c.l.b16 %v3461
  %v4018 = vunpack.c.h.b16 %v3461
  %v4019 = vunpack.c.l.b16 %v3462
  %v4020 = vunpack.c.h.b16 %v3462
  %v4021 = vunpack.c.l.b16 %v3463
  %v4022 = vunpack.c.h.b16 %v3463
  %v4023 = vunpack.c.l.b16 %v3464
  %v4024 = vunpack.c.h.b16 %v3464
  %v4025 = vunpack.c.l.b16 %v3465
  %v4026 = vunpack.c.h.b16 %v3465
  %v4027 = vunpack.c.l.b16 %v3466
  %v4028 = vunpack.c.h.b16 %v3466
  %v4029 = vpack.c.b16 %v3673, %v3669
  %v4030 = vpack.c.b16 %v3674, %v3670
  %v4031 = vpack.c.b16 %v3675, %v3671
  %v4032 = vpack.c.b16 %v3676, %v3672
  %v4033 = vpack.c.b16 %v3681, %v3677
  %v4034 = vpack.c.b16 %v3682, %v3678
  %v4035 = vpack.c.b16 %v3683, %v3679
  %v4036 = vpack.c.b16 %v3684, %v3680
  %v4037 = vpack.c.b16 %v3689, %v3685
  %v4038 = vpack.c.b16 %v3690, %v3686
  %v4039 = vpack.c.b16 %v3691, %v3687
  %v4040 = vpack.c.b16 %v3692, %v3688
  %v4041 = vpack.c.b16 %v3697, %v3693
  %v4042 = vpack.c.b16 %v3698, %v3694
  %v4043 = vpack.c.b16 %v3699, %v3695
  %v4044 = vpack.c.b16 %v3700, %v3696
  %v4045 = vpack.c.b16 %v3705, %v3701
  %v4046 = vpack.c.b16 %v3706, %v3702
  %v4047 = vpack.c.b16 %v3707, %v3703
  %v4048 = vpack.c.b16 %v3708, %v3704
  %v4049 = vpack.c.b16 %v3713, %v3709
  %v4050 = vpack.c.b16 %v3714, %v3710
  %v4051 = vpack.c.b16 %v3715, %v3711
  %v4052 = vpack.c.b16 %v3716, %v3712
  %v4053 = vpack.c.b16 %v3721, %v3717
  %v4054 = vpack.c.b16 %v3722, %v3718
  %v4055 = vpack.c.b16 %v3723, %v3719
  %v4056 = vpack.c.b16 %v3724, %v3720
  %v4057 = vpack.c.b16 %v3729, %v3725
  %v4058 = vpack.c.b16 %v3730, %v3726
  %v4059 = vpack.c.b16 %v3731, %v3727
  %v4060 = vpack.c.b16 %v3732, %v3728
  %v4061 = vpack.c.b16 %v3737, %v3733
  %v4062 = vpack.c.b16 %v3738, %v3734
  %v4063 = vpack.c.b16 %v3739, %v3735
  %v4064 = vpack.c.b16 %v3740, %v3736
  %v4065 = vpack.c.b16 %v3745, %v3741
  %v4066 = vpack.c.b16 %v3746, %v3742
  %v4067 = vpack.c.b16 %v3747, %v3743
  %v4068 = vpack.c.b16 %v3748, %v3744
  %v4069 = vpack.c.b16 %v3753, %v3749
  %v4070 = vpack.c.b16 %v3754, %v3750
  %v4071 = vpack.c.b16 %v3755, %v3751
  %v4072 = vpack.c.b16 %v3756, %v3752
  %v4073 = vpack.c.b16 %v3761, %v3757
  %v4074 = vpack.c.b16 %v3762, %v3758
  %v4075 = vpack.c.b16 %v3763, %v3759
  %v4076 = vpack.c.b16 %v3764, %v3760
  %v4077 = vpack.c.b16 %v3769, %v3765
  %v4078 = vpack.c.b16 %v3770, %v3766
  %v4079 = vpack.c.b16 %v3771, %v3767
  %v4080 = vpack.c.b16 %v3772, %v3768
  %v4081 = vpack.c.b16 %v3777, %v3773
  %v4082 = vpack.c.b16 %v3778, %v3774
  %v4083 = vpack.c.b16 %v3779, %v3775
  %v4084 = vpack.c.b16 %v3780, %v3776
  %v4085 = vpack.c.b16 %v3785, %v3781
  %v4086 = vpack.c.b16 %v3786, %v3782
  %v4087 = vpack.c.b16 %v3787, %v3783
  %v4088 = vpack.c.b16 %v3788, %v3784
  %v4089 = vpack.c.b16 %v3793, %v3789
  %v4090 = vpack.c.b16 %v3794, %v3790
  %v4091 = vpack.c.b16 %v3795, %v3791
  %v4092 = vpack.c.b16 %v3796, %v3792
  %v4093 = vpack.c.b16 %v3801, %v3797
  %v4094 = vpack.c.b16 %v3802, %v3798
  %v4095 = vpack.c.b16 %v3803, %v3799
  %v4096 = vpack.c.b16 %v3804, %v3800
  %v4097 = vpack.c.b16 %v3809, %v3805
  %v4098 = vpack.c.b16 %v3810, %v3806
  %v4099 = vpack.c.b16 %v3811, %v3807
  %v4100 = vpack.c.b16 %v3812, %v3808
  %v4101 = vpack.c.b16 %v3817, %v3813
  %v4102 = vpack.c.b16 %v3818, %v3814
  %v4103 = vpack.c.b16 %v3819, %v3815
  %v4104 = vpack.c.b16 %v3820, %v3816
  %v4105 = vpack.c.b16 %v3825, %v3821
  %v4106 = vpack.c.b16 %v3826, %v3822
  %v4107 = vpack.c.b16 %v3827, %v3823
  %v4108 = vpack.c.b16 %v3828, %v3824
  %v4109 = vpack.c.b16 %v3833, %v3829
  %v4110 = vpack.c.b16 %v3834, %v3830
  %v4111 = vpack.c.b16 %v3835, %v3831
  %v4112 = vpack.c.b16 %v3836, %v3832
  %v4113 = vpack.c.b16 %v3841, %v3837
  %v4114 = vpack.c.b16 %v3842, %v3838
  %v4115 = vpack.c.b16 %v3843, %v3839
  %v4116 = vpack.c.b16 %v3844, %v3840
  %v4117 = vpack.c.b16 %v3849, %v3845
  %v4118 = vpack.c.b16 %v3850, %v3846
  %v4119 = vpack.c.b16 %v3851, %v3847
  %v4120 = vpack.c.b16 %v3852, %v3848
  %v4121 = vpack.c.b16 %v3857, %v3853
  %v4122 = vpack.c.b16 %v3858, %v3854
  %v4123 = vpack.c.b16 %v3859, %v3855
  %v4124 = vpack.c.b16 %v3860, %v3856
  %v4125 = vpack.c.b16 %v3865, %v3861
  %v4126 = vpack.c.b16 %v3866, %v3862
  %v4127 = vpack.c.b16 %v3867, %v3863
  %v4128 = vpack.c.b16 %v3868, %v3864
  %v4129 = vpack.c.b16 %v3873, %v3869
  %v4130 = vpack.c.b16 %v3874, %v3870
  %v4131 = vpack.c.b16 %v3875, %v3871
  %v4132 = vpack.c.b16 %v3876, %v3872
  %v4133 = vpack.c.b16 %v3881, %v3877
  %v4134 = vpack.c.b16 %v3882, %v3878
  %v4135 = vpack.c.b16 %v3883, %v3879
  %v4136 = vpack.c.b16 %v3884, %v3880
  %v4137 = vpack.c.b16 %v3889, %v3885
  %v4138 = vpack.c.b16 %v3890, %v3886
  %v4139 = vpack.c.b16 %v3891, %v3887
  %v4140 = vpack.c.b16 %v3892, %v3888
  %v4141 = vpack.c.b16 %v3897, %v3893
  %v4142 = vpack.c.b16 %v3898, %v3894
  %v4143 = vpack.c.b16 %v3899, %v3895
  %v4144 = vpack.c.b16 %v3900, %v3896
  %v4145 = vpack.c.b16 %v3905, %v3901
  %v4146 = vpack.c.b16 %v3906, %v3902
  %v4147 = vpack.c.b16 %v3907, %v3903
  %v4148 = vpack.c.b16 %v3908, %v3904
  %v4149 = vpack.c.b16 %v3913, %v3909
  %v4150 = vpack.c.b16 %v3914, %v3910
  %v4151 = vpack.c.b16 %v3915, %v3911
  %v4152 = vpack.c.b16 %v3916, %v3912
  %v4153 = vpack.c.b16 %v3921, %v3917
  %v4154 = vpack.c.b16 %v3922, %v3918
  %v4155 = vpack.c.b16 %v3923, %v3919
  %v4156 = vpack.c.b16 %v3924, %v3920
  %v4157 = vpack.c.b16 %v3929, %v3925
  %v4158 = vpack.c.b16 %v3930, %v3926
  %v4159 = vpack.c.b16 %v3931, %v3927
  %v4160 = vpack.c.b16 %v3932, %v3928
  %v4161 = vpack.c.b16 %v3937, %v3933
  %v4162 = vpack.c.b16 %v3938, %v3934
  %v4163 = vpack.c.b16 %v3939, %v3935
  %v4164 = vpack.c.b16 %v3940, %v3936
  %v4165 = vpack.c.b16 %v3945, %v3941
  %v4166 = vpack.c.b16 %v3946, %v3942
  %v4167 = vpack.c.b16 %v3947, %v3943
  %v4168 = vpack.c.b16 %v3948, %v3944
  %v4169 = vpack.c.b16 %v3953, %v3949
  %v4170 = vpack.c.b16 %v3954, %v3950
  %v4171 = vpack.c.b16 %v3955, %v3951
  %v4172 = vpack.c.b16 %v3956, %v3952
  %v4173 = vpack.c.b16 %v3961, %v3957
  %v4174 = vpack.c.b16 %v3962, %v3958
  %v4175 = vpack.c.b16 %v3963, %v3959
  %v4176 = vpack.c.b16 %v3964, %v3960
  %v4177 = vpack.c.b16 %v3969, %v3965
  %v4178 = vpack.c.b16 %v3970, %v3966
  %v4179 = vpack.c.b16 %v3971, %v3967
  %v4180 = vpack.c.b16 %v3972, %v3968
  %v4181 = vpack.c.b16 %v3977, %v3973
  %v4182 = vpack.c.b16 %v3978, %v3974
  %v4183 = vpack.c.b16 %v3979, %v3975
  %v4184 = vpack.c.b16 %v3980, %v3976
  %v4185 = vpack.c.b16 %v3985, %v3981
  %v4186 = vpack.c.b16 %v3986, %v3982
  %v4187 = vpack.c.b16 %v3987, %v3983
  %v4188 = vpack.c.b16 %v3988, %v3984
  %v4189 = vpack.c.b16 %v3993, %v3989
  %v4190 = vpack.c.b16 %v3994, %v3990
  %v4191 = vpack.c.b16 %v3995, %v3991
  %v4192 = vpack.c.b16 %v3996, %v3992
  %v4193 = vpack.c.b16 %v4001, %v3997
  %v4194 = vpack.c.b16 %v4002, %v3998
  %v4195 = vpack.c.b16 %v4003, %v3999
  %v4196 = vpack.c.b16 %v4004, %v4000
  %v4197 = vpack.c.b16 %v4009, %v4005
  %v4198 = vpack.c.b16 %v4010, %v4006
  %v4199 = vpack.c.b16 %v4011, %v4007
  %v4200 = vpack.c.b16 %v4012, %v4008
  %v4201 = vpack.c.b16 %v4017, %v4013
  %v4202 = vpack.c.b16 %v4018, %v4014
  %v4203 = vpack.c.b16 %v4019, %v4015
  %v4204 = vpack.c.b16 %v4020, %v4016
  %v4205 = vpack.c.b16 %v4025, %v4021
  %v4206 = vpack.c.b16 %v4026, %v4022
  %v4207 = vpack.c.b16 %v4027, %v4023
  %v4208 = vpack.c.b16 %v4028, %v4024
  %vm4389 = vcmask 654336
  %v4391 = vsel %vm4389, %v3286, 0
  %4393 = vmatprep.subr.bf16.mxu0 %v4030
  %4394 = vmatpush1.bf16.msra.mxu0 %v4029
  %4395 = vmatprep.subr.bf16.mxu0 %v4034
  %4396 = vmatpush1.bf16.msra.mxu0 %v4033
  %4397 = vmatprep.subr.bf16.mxu0 %v4038
  %4398 = vmatpush1.bf16.msra.mxu0 %v4037
  %4399 = vmatprep.subr.bf16.mxu0 %v4042
  %4400 = vmatpush1.bf16.msra.mxu0 %v4041
  %4401 = vmatprep.subr.bf16.mxu0 %v4046
  %4402 = vmatpush1.bf16.msra.mxu0 %v4045
  %4403 = vmatprep.subr.bf16.mxu0 %v4050
  %4404 = vmatpush1.bf16.msra.mxu0 %v4049
  %4405 = vmatprep.subr.bf16.mxu0 %v4054
  %4406 = vmatpush1.bf16.msra.mxu0 %v4053
  %4407 = vmatprep.subr.bf16.mxu0 %v4058
  %4408 = vmatpush1.bf16.msra.mxu0 %v4057
  %4409 = vmatprep.subr.bf16.mxu0 %v4062
  %4410 = vmatpush1.bf16.msra.mxu0 %v4061
  %4411 = vmatprep.subr.bf16.mxu0 %v4066
  %4412 = vmatpush1.bf16.msra.mxu0 %v4065
  %4413 = vmatprep.subr.bf16.mxu0 %v4070
  %4414 = vmatpush1.bf16.msra.mxu0 %v4069
  %4415 = vmatprep.subr.bf16.mxu0 %v4074
  %4416 = vmatpush1.bf16.msra.mxu0 %v4073
  %4417 = vmatprep.subr.bf16.mxu0 %v4078
  %4418 = vmatpush1.bf16.msra.mxu0 %v4077
  %4419 = vmatprep.subr.bf16.mxu0 %v4082
  %4420 = vmatpush1.bf16.msra.mxu0 %v4081
  %4421 = vmatprep.subr.bf16.mxu0 %v4086
  %4422 = vmatpush1.bf16.msra.mxu0 %v4085
  %4423 = vmatprep.subr.bf16.mxu0 %v4090
  %4424 = vmatpush1.bf16.msra.mxu0 %v4089
  %4425 = vmatprep.mubr.bf16.mxu0 %v3282
  %4426 = vmatmul.mubr.bf16.gmra.mrb[0].mxu0 %v3281
  %v4427 = vpop.f32.mrb[0].mxu0
  %v4428 = vadd.f32 %v3472, %v4427
  %v4429 = vpop.f32.mrb[0].mxu0
  %v4430 = vadd.f32 %v3476, %v4429
  %v4431 = vpop.f32.mrb[0].mxu0
  %v4432 = vpop.f32.mrb[0].mxu0
  %4433 = vdwg.mxu0
  %4434 = vmatprep.subr.bf16.mxu0 %v4094
  %4435 = vmatpush1.bf16.msra.mxu0 %v4093
  %4436 = vmatprep.subr.bf16.mxu0 %v4098
  %4437 = vmatpush1.bf16.msra.mxu0 %v4097
  %4438 = vmatprep.subr.bf16.mxu0 %v4102
  %4439 = vmatpush1.bf16.msra.mxu0 %v4101
  %4440 = vmatprep.subr.bf16.mxu0 %v4106
  %4441 = vmatpush1.bf16.msra.mxu0 %v4105
  %4442 = vmatprep.subr.bf16.mxu0 %v4110
  %4443 = vmatpush1.bf16.msra.mxu0 %v4109
  %4444 = vmatprep.subr.bf16.mxu0 %v4114
  %4445 = vmatpush1.bf16.msra.mxu0 %v4113
  %4446 = vmatprep.subr.bf16.mxu0 %v4118
  %4447 = vmatpush1.bf16.msra.mxu0 %v4117
  %4448 = vmatprep.subr.bf16.mxu0 %v4122
  %4449 = vmatpush1.bf16.msra.mxu0 %v4121
  %4450 = vmatprep.subr.bf16.mxu0 %v4126
  %4451 = vmatpush1.bf16.msra.mxu0 %v4125
  %4452 = vmatprep.subr.bf16.mxu0 %v4130
  %4453 = vmatpush1.bf16.msra.mxu0 %v4129
  %4454 = vmatprep.subr.bf16.mxu0 %v4134
  %4455 = vmatpush1.bf16.msra.mxu0 %v4133
  %4456 = vmatprep.subr.bf16.mxu0 %v4138
  %4457 = vmatpush1.bf16.msra.mxu0 %v4137
  %4458 = vmatprep.subr.bf16.mxu0 %v4142
  %4459 = vmatpush1.bf16.msra.mxu0 %v4141
  %4460 = vmatprep.subr.bf16.mxu0 %v4146
  %4461 = vmatpush1.bf16.msra.mxu0 %v4145
  %4462 = vmatprep.subr.bf16.mxu0 %v4150
  %4463 = vmatpush1.bf16.msra.mxu0 %v4149
  %4464 = vmatprep.subr.bf16.mxu0 %v4154
  %4465 = vmatpush1.bf16.msra.mxu0 %v4153
  %4466 = vmatprep.mubr.bf16.mxu0 %v3284
  %4467 = vmatmul.mubr.bf16.gmra.mrb[0].mxu0 %v3283
  %v4468 = vpop.f32.mrb[0].mxu0
  %v4469 = vadd.f32 %v4428, %v4468
  %v4470 = vpop.f32.mrb[0].mxu0
  %v4471 = vadd.f32 %v4430, %v4470
  %v4472 = vpop.f32.mrb[0].mxu0
  %v4473 = vpop.f32.mrb[0].mxu0
  %4474 = vdwg.mxu0
  %4475 = vmatprep.subr.bf16.mxu0 %v4158
  %4476 = vmatpush1.bf16.msra.mxu0 %v4157
  %4477 = vmatprep.subr.bf16.mxu0 %v4162
  %4478 = vmatpush1.bf16.msra.mxu0 %v4161
  %4479 = vmatprep.subr.bf16.mxu0 %v4166
  %4480 = vmatpush1.bf16.msra.mxu0 %v4165
  %4481 = vmatprep.subr.bf16.mxu0 %v4170
  %4482 = vmatpush1.bf16.msra.mxu0 %v4169
  %4483 = vmatprep.subr.bf16.mxu0 %v4174
  %4484 = vmatpush1.bf16.msra.mxu0 %v4173
  %4485 = vmatprep.subr.bf16.mxu0 %v4178
  %4486 = vmatpush1.bf16.msra.mxu0 %v4177
  %4487 = vmatprep.subr.bf16.mxu0 %v4182
  %4488 = vmatpush1.bf16.msra.mxu0 %v4181
  %4489 = vmatprep.subr.bf16.mxu0 %v4186
  %4490 = vmatpush1.bf16.msra.mxu0 %v4185
  %4491 = vmatprep.subr.bf16.mxu0 %v4190
  %4492 = vmatpush1.bf16.msra.mxu0 %v4189
  %4493 = vmatprep.subr.bf16.mxu0 %v4194
  %4494 = vmatpush1.bf16.msra.mxu0 %v4193
  %4495 = vmatprep.subr.bf16.mxu0 %v4198
  %4496 = vmatpush1.bf16.msra.mxu0 %v4197
  %4497 = vmatprep.subr.bf16.mxu0 %v4202
  %4498 = vmatpush1.bf16.msra.mxu0 %v4201
  %4499 = vmatprep.subr.bf16.mxu0 %v4206
  %4500 = vmatpush1.bf16.msra.mxu0 %v4205
  %4501 = vmatprep.subr.bf16.mxu0 0
  %4502 = vmatpush1.bf16.msra.mxu0 0
  %4503 = vmatprep.subr.bf16.mxu0 0
  %4504 = vmatpush1.bf16.msra.mxu0 0
  %4505 = vmatprep.subr.bf16.mxu0 0
  %4506 = vmatpush1.bf16.msra.mxu0 0
  %4507 = vmatprep.mubr.bf16.mxu0 %v4391
  %4508 = vmatmul.mubr.bf16.gmra.mrb[0].mxu0 %v3285
  %v4509 = vpop.f32.mrb[0].mxu0
  %v4510 = vadd.f32 %v4469, %v4509
  %v4511 = vpop.f32.mrb[0].mxu0
  %v4512 = vadd.f32 %v4471, %v4511
  %v4513 = vpop.f32.mrb[0].mxu0
  %v4514 = vpop.f32.mrb[0].mxu0
  %4515 = vdwg.mxu0
  %4516 = vmatprep.subr.bf16.mxu0 %v4032
  %4517 = vmatpush1.bf16.msra.mxu0 %v4031
  %4518 = vmatprep.subr.bf16.mxu0 %v4036
  %4519 = vmatpush1.bf16.msra.mxu0 %v4035
  %4520 = vmatprep.subr.bf16.mxu0 %v4040
  %4521 = vmatpush1.bf16.msra.mxu0 %v4039
  %4522 = vmatprep.subr.bf16.mxu0 %v4044
  %4523 = vmatpush1.bf16.msra.mxu0 %v4043
  %4524 = vmatprep.subr.bf16.mxu0 %v4048
  %4525 = vmatpush1.bf16.msra.mxu0 %v4047
  %4526 = vmatprep.subr.bf16.mxu0 %v4052
  %4527 = vmatpush1.bf16.msra.mxu0 %v4051
  %4528 = vmatprep.subr.bf16.mxu0 %v4056
  %4529 = vmatpush1.bf16.msra.mxu0 %v4055
  %4530 = vmatprep.subr.bf16.mxu0 %v4060
  %4531 = vmatpush1.bf16.msra.mxu0 %v4059
  %4532 = vmatprep.subr.bf16.mxu0 %v4064
  %4533 = vmatpush1.bf16.msra.mxu0 %v4063
  %4534 = vmatprep.subr.bf16.mxu0 %v4068
  %4535 = vmatpush1.bf16.msra.mxu0 %v4067
  %4536 = vmatprep.subr.bf16.mxu0 %v4072
  %4537 = vmatpush1.bf16.msra.mxu0 %v4071
  %4538 = vmatprep.subr.bf16.mxu0 %v4076
  %4539 = vmatpush1.bf16.msra.mxu0 %v4075
  %4540 = vmatprep.subr.bf16.mxu0 %v4080
  %4541 = vmatpush1.bf16.msra.mxu0 %v4079
  %4542 = vmatprep.subr.bf16.mxu0 %v4084
  %4543 = vmatpush1.bf16.msra.mxu0 %v4083
  %4544 = vmatprep.subr.bf16.mxu0 %v4088
  %4545 = vmatpush1.bf16.msra.mxu0 %v4087
  %4546 = vmatprep.subr.bf16.mxu0 %v4092
  %4547 = vmatpush1.bf16.msra.mxu0 %v4091
  %4548 = vmatprep.mubr.bf16.mxu0 %v3282
  %4549 = vmatmul.mubr.bf16.gmra.mrb[0].mxu0 %v3281
  %v4550 = vpop.f32.mrb[0].mxu0
  %v4551 = vadd.f32 %v3480, %v4550
  %v4552 = vpop.f32.mrb[0].mxu0
  %v4553 = vadd.f32 %v3484, %v4552
  %v4554 = vpop.f32.mrb[0].mxu0
  %v4555 = vpop.f32.mrb[0].mxu0
  %4556 = vdwg.mxu0
  %4557 = vmatprep.subr.bf16.mxu0 %v4096
  %4558 = vmatpush1.bf16.msra.mxu0 %v4095
  %4559 = vmatprep.subr.bf16.mxu0 %v4100
  %4560 = vmatpush1.bf16.msra.mxu0 %v4099
  %4561 = vmatprep.subr.bf16.mxu0 %v4104
  %4562 = vmatpush1.bf16.msra.mxu0 %v4103
  %4563 = vmatprep.subr.bf16.mxu0 %v4108
  %4564 = vmatpush1.bf16.msra.mxu0 %v4107
  %4565 = vmatprep.subr.bf16.mxu0 %v4112
  %4566 = vmatpush1.bf16.msra.mxu0 %v4111
  %4567 = vmatprep.subr.bf16.mxu0 %v4116
  %4568 = vmatpush1.bf16.msra.mxu0 %v4115
  %4569 = vmatprep.subr.bf16.mxu0 %v4120
  %4570 = vmatpush1.bf16.msra.mxu0 %v4119
  %4571 = vmatprep.subr.bf16.mxu0 %v4124
  %4572 = vmatpush1.bf16.msra.mxu0 %v4123
  %4573 = vmatprep.subr.bf16.mxu0 %v4128
  %4574 = vmatpush1.bf16.msra.mxu0 %v4127
  %4575 = vmatprep.subr.bf16.mxu0 %v4132
  %4576 = vmatpush1.bf16.msra.mxu0 %v4131
  %4577 = vmatprep.subr.bf16.mxu0 %v4136
  %4578 = vmatpush1.bf16.msra.mxu0 %v4135
  %4579 = vmatprep.subr.bf16.mxu0 %v4140
  %4580 = vmatpush1.bf16.msra.mxu0 %v4139
  %4581 = vmatprep.subr.bf16.mxu0 %v4144
  %4582 = vmatpush1.bf16.msra.mxu0 %v4143
  %4583 = vmatprep.subr.bf16.mxu0 %v4148
  %4584 = vmatpush1.bf16.msra.mxu0 %v4147
  %4585 = vmatprep.subr.bf16.mxu0 %v4152
  %4586 = vmatpush1.bf16.msra.mxu0 %v4151
  %4587 = vmatprep.subr.bf16.mxu0 %v4156
  %4588 = vmatpush1.bf16.msra.mxu0 %v4155
  %4589 = vmatprep.mubr.bf16.mxu0 %v3284
  %4590 = vmatmul.mubr.bf16.gmra.mrb[0].mxu0 %v3283
  %v4591 = vpop.f32.mrb[0].mxu0
  %v4592 = vadd.f32 %v4551, %v4591
  %v4593 = vpop.f32.mrb[0].mxu0
  %v4594 = vadd.f32 %v4553, %v4593
  %v4595 = vpop.f32.mrb[0].mxu0
  %v4596 = vpop.f32.mrb[0].mxu0
  %4597 = vdwg.mxu0
  %4598 = vmatprep.subr.bf16.mxu0 %v4160
  %4599 = vmatpush1.bf16.msra.mxu0 %v4159
  %4600 = vmatprep.subr.bf16.mxu0 %v4164
  %4601 = vmatpush1.bf16.msra.mxu0 %v4163
  %4602 = vmatprep.subr.bf16.mxu0 %v4168
  %4603 = vmatpush1.bf16.msra.mxu0 %v4167
  %4604 = vmatprep.subr.bf16.mxu0 %v4172
  %4605 = vmatpush1.bf16.msra.mxu0 %v4171
  %4606 = vmatprep.subr.bf16.mxu0 %v4176
  %4607 = vmatpush1.bf16.msra.mxu0 %v4175
  %4608 = vmatprep.subr.bf16.mxu0 %v4180
  %4609 = vmatpush1.bf16.msra.mxu0 %v4179
  %4610 = vmatprep.subr.bf16.mxu0 %v4184
  %4611 = vmatpush1.bf16.msra.mxu0 %v4183
  %4612 = vmatprep.subr.bf16.mxu0 %v4188
  %4613 = vmatpush1.bf16.msra.mxu0 %v4187
  %4614 = vmatprep.subr.bf16.mxu0 %v4192
  %4615 = vmatpush1.bf16.msra.mxu0 %v4191
  %4616 = vmatprep.subr.bf16.mxu0 %v4196
  %4617 = vmatpush1.bf16.msra.mxu0 %v4195
  %4618 = vmatprep.subr.bf16.mxu0 %v4200
  %4619 = vmatpush1.bf16.msra.mxu0 %v4199
  %4620 = vmatprep.subr.bf16.mxu0 %v4204
  %4621 = vmatpush1.bf16.msra.mxu0 %v4203
  %4622 = vmatprep.subr.bf16.mxu0 %v4208
  %4623 = vmatpush1.bf16.msra.mxu0 %v4207
  %4624 = vmatprep.subr.bf16.mxu0 0
  %4625 = vmatpush1.bf16.msra.mxu0 0
  %4626 = vmatprep.subr.bf16.mxu0 0
  %4627 = vmatpush1.bf16.msra.mxu0 0
  %4628 = vmatprep.subr.bf16.mxu0 0
  %4629 = vmatpush1.bf16.msra.mxu0 0
  %4630 = vmatprep.mubr.bf16.mxu0 %v4391
  %4631 = vmatmul.mubr.bf16.gmra.mrb[0].mxu0 %v3285
  %v4632 = vpop.f32.mrb[0].mxu0
  %v4633 = vadd.f32 %v4592, %v4632
  %v4634 = vpop.f32.mrb[0].mxu0
  %v4635 = vadd.f32 %v4594, %v4634
  %v4636 = vpop.f32.mrb[0].mxu0
  %v4637 = vpop.f32.mrb[0].mxu0
  %4638 = vdwg.mxu0
  %v4639 = vmax.f32 %v4510, 0.0
  %v4640 = vmax.f32 %v4512, 0.0
  %v4641 = vmax.f32 %v4633, 0.0
  %v4642 = vmax.f32 %v4635, 0.0
  %v4643 = vpack.c.bf16 %v4639, %v4639
  %v4644 = vpack.c.bf16 %v4640, %v4640
  %v4645 = vpack.c.bf16 %v4641, %v4641
  %v4646 = vpack.c.bf16 %v4642, %v4642
  %v4647 = vld [vmem:[%s7] sm:$0xff]
  %v4648 = vld [vmem:[%s7 + $0x8] sm:$0xff]
  %v4649 = vld [vmem:[%s7 + $0x10] sm:$0xff]
  %v4650 = vld [vmem:[%s7 + $0x18] sm:$0xff]
  %v4651 = vld [vmem:[%s7 + $0x20] sm:$0xff]
  %v4652 = vld [vmem:[%s7 + $0x28] sm:$0xff]
  %v4653 = vld [vmem:[%s7 + $0x30] sm:$0xff]
  %v4654 = vld [vmem:[%s7 + $0x38] sm:$0xff]
  %v4655 = vld [vmem:[%s7 + $0x40] sm:$0xff]
  %v4656 = vld [vmem:[%s7 + $0x48] sm:$0xff]
  %v4657 = vld [vmem:[%s7 + $0x50] sm:$0xff]
  %v4658 = vld [vmem:[%s7 + $0x58] sm:$0xff]
  %v4659 = vld [vmem:[%s7 + $0x60] sm:$0xff]
  %v4660 = vld [vmem:[%s7 + $0x68] sm:$0xff]
  %v4661 = vld [vmem:[%s7 + $0x70] sm:$0xff]
  %v4662 = vld [vmem:[%s7 + $0x78] sm:$0xff]
  %v4663 = vld [vmem:[%s7 + $0x80] sm:$0xff]
  %v4664 = vld [vmem:[%s7 + $0x88] sm:$0xff]
  %v4665 = vld [vmem:[%s7 + $0x90] sm:$0xff]
  %v4666 = vld [vmem:[%s7 + $0x98] sm:$0xff]
  %v4667 = vld [vmem:[%s7 + $0xa0] sm:$0xff]
  %v4668 = vld [vmem:[%s7 + $0xa8] sm:$0xff]
  %v4669 = vld [vmem:[%s7 + $0xb0] sm:$0xff]
  %v4670 = vld [vmem:[%s7 + $0xb8] sm:$0xff]
  %v4671 = vld [vmem:[%s7 + $0xc0] sm:$0xff]
  %v4672 = vld [vmem:[%s7 + $0xc8] sm:$0xff]
  %v4673 = vld [vmem:[%s7 + $0xd0] sm:$0xff]
  %v4674 = vld [vmem:[%s7 + $0xd8] sm:$0xff]
  %v4675 = vld [vmem:[%s7 + $0xe0] sm:$0xff]
  %v4676 = vld [vmem:[%s7 + $0xe8] sm:$0xff]
  %v4677 = vld [vmem:[%s7 + $0xf0] sm:$0xff]
  %v4678 = vld [vmem:[%s7 + $0xf8] sm:$0xff]
  %v4679 = vld [vmem:[%s7 + $0x100] sm:$0xff]
  %v4680 = vld [vmem:[%s7 + $0x108] sm:$0xff]
  %v4681 = vld [vmem:[%s7 + $0x110] sm:$0xff]
  %v4682 = vld [vmem:[%s7 + $0x118] sm:$0xff]
  %v4683 = vld [vmem:[%s7 + $0x120] sm:$0xff]
  %v4684 = vld [vmem:[%s7 + $0x128] sm:$0xff]
  %v4685 = vld [vmem:[%s7 + $0x130] sm:$0xff]
  %v4686 = vld [vmem:[%s7 + $0x138] sm:$0xff]
  %v4687 = vld [vmem:[%s7 + $0x140] sm:$0xff]
  %v4688 = vld [vmem:[%s7 + $0x148] sm:$0xff]
  %v4689 = vld [vmem:[%s7 + $0x150] sm:$0xff]
  %v4690 = vld [vmem:[%s7 + $0x158] sm:$0xff]
  %v4691 = vld [vmem:[%s7 + $0x160] sm:$0xff]
  %v4692 = vld [vmem:[%s7 + $0x168] sm:$0xff]
  %v4693 = vld [vmem:[%s7 + $0x170] sm:$0xff]
  %v4694 = vld [vmem:[%s7 + $0x178] sm:$0xff]
  %v4695 = vld [vmem:[%s7 + $0x180] sm:$0xff]
  %v4696 = vld [vmem:[%s7 + $0x188] sm:$0xff]
  %v4697 = vld [vmem:[%s8] sm:$0x3]
  %v4699 = vlaneseq
  %v4700 = vshrl.u32 %v4699, 7
  %v4701 = vsub.s32 0, %v4700
  %v4702 = vrot.slane %v4697, %v4701
  %v4703 = vlaneseq
  %v4704 = vshrl.u32 %v4703, 7
  %v4705 = vsub.s32 1, %v4704
  %v4706 = vrot.slane %v4697, %v4705
  %v4759 = vunpack.c.l.b16 %v4647
  %v4760 = vunpack.c.h.b16 %v4647
  %v4761 = vunpack.c.l.b16 %v4648
  %v4762 = vunpack.c.h.b16 %v4648
  %v4763 = vunpack.c.l.b16 %v4649
  %v4764 = vunpack.c.h.b16 %v4649
  %v4765 = vunpack.c.l.b16 %v4650
  %v4766 = vunpack.c.h.b16 %v4650
  %v4767 = vunpack.c.l.b16 %v4651
  %v4768 = vunpack.c.h.b16 %v4651
  %v4769 = vunpack.c.l.b16 %v4652
  %v4770 = vunpack.c.h.b16 %v4652
  %v4771 = vunpack.c.l.b16 %v4653
  %v4772 = vunpack.c.h.b16 %v4653
  %v4773 = vunpack.c.l.b16 %v4654
  %v4774 = vunpack.c.h.b16 %v4654
  %v4775 = vunpack.c.l.b16 %v4655
  %v4776 = vunpack.c.h.b16 %v4655
  %v4777 = vunpack.c.l.b16 %v4656
  %v4778 = vunpack.c.h.b16 %v4656
  %v4779 = vunpack.c.l.b16 %v4657
  %v4780 = vunpack.c.h.b16 %v4657
  %v4781 = vunpack.c.l.b16 %v4658
  %v4782 = vunpack.c.h.b16 %v4658
  %v4783 = vunpack.c.l.b16 %v4659
  %v4784 = vunpack.c.h.b16 %v4659
  %v4785 = vunpack.c.l.b16 %v4660
  %v4786 = vunpack.c.h.b16 %v4660
  %v4787 = vunpack.c.l.b16 %v4661
  %v4788 = vunpack.c.h.b16 %v4661
  %v4789 = vunpack.c.l.b16 %v4662
  %v4790 = vunpack.c.h.b16 %v4662
  %v4791 = vunpack.c.l.b16 %v4663
  %v4792 = vunpack.c.h.b16 %v4663
  %v4793 = vunpack.c.l.b16 %v4664
  %v4794 = vunpack.c.h.b16 %v4664
  %v4795 = vunpack.c.l.b16 %v4665
  %v4796 = vunpack.c.h.b16 %v4665
  %v4797 = vunpack.c.l.b16 %v4666
  %v4798 = vunpack.c.h.b16 %v4666
  %v4799 = vunpack.c.l.b16 %v4667
  %v4800 = vunpack.c.h.b16 %v4667
  %v4801 = vunpack.c.l.b16 %v4668
  %v4802 = vunpack.c.h.b16 %v4668
  %v4803 = vunpack.c.l.b16 %v4669
  %v4804 = vunpack.c.h.b16 %v4669
  %v4805 = vunpack.c.l.b16 %v4670
  %v4806 = vunpack.c.h.b16 %v4670
  %v4807 = vunpack.c.l.b16 %v4671
  %v4808 = vunpack.c.h.b16 %v4671
  %v4809 = vunpack.c.l.b16 %v4672
  %v4810 = vunpack.c.h.b16 %v4672
  %v4811 = vunpack.c.l.b16 %v4673
  %v4812 = vunpack.c.h.b16 %v4673
  %v4813 = vunpack.c.l.b16 %v4674
  %v4814 = vunpack.c.h.b16 %v4674
  %v4815 = vunpack.c.l.b16 %v4675
  %v4816 = vunpack.c.h.b16 %v4675
  %v4817 = vunpack.c.l.b16 %v4676
  %v4818 = vunpack.c.h.b16 %v4676
  %v4819 = vunpack.c.l.b16 %v4677
  %v4820 = vunpack.c.h.b16 %v4677
  %v4821 = vunpack.c.l.b16 %v4678
  %v4822 = vunpack.c.h.b16 %v4678
  %v4823 = vunpack.c.l.b16 %v4679
  %v4824 = vunpack.c.h.b16 %v4679
  %v4825 = vunpack.c.l.b16 %v4680
  %v4826 = vunpack.c.h.b16 %v4680
  %v4827 = vunpack.c.l.b16 %v4681
  %v4828 = vunpack.c.h.b16 %v4681
  %v4829 = vunpack.c.l.b16 %v4682
  %v4830 = vunpack.c.h.b16 %v4682
  %v4831 = vunpack.c.l.b16 %v4683
  %v4832 = vunpack.c.h.b16 %v4683
  %v4833 = vunpack.c.l.b16 %v4684
  %v4834 = vunpack.c.h.b16 %v4684
  %v4835 = vunpack.c.l.b16 %v4685
  %v4836 = vunpack.c.h.b16 %v4685
  %v4837 = vunpack.c.l.b16 %v4686
  %v4838 = vunpack.c.h.b16 %v4686
  %v4839 = vunpack.c.l.b16 %v4687
  %v4840 = vunpack.c.h.b16 %v4687
  %v4841 = vunpack.c.l.b16 %v4688
  %v4842 = vunpack.c.h.b16 %v4688
  %v4843 = vunpack.c.l.b16 %v4689
  %v4844 = vunpack.c.h.b16 %v4689
  %v4845 = vunpack.c.l.b16 %v4690
  %v4846 = vunpack.c.h.b16 %v4690
  %v4847 = vunpack.c.l.b16 %v4691
  %v4848 = vunpack.c.h.b16 %v4691
  %v4849 = vunpack.c.l.b16 %v4692
  %v4850 = vunpack.c.h.b16 %v4692
  %v4851 = vunpack.c.l.b16 %v4693
  %v4852 = vunpack.c.h.b16 %v4693
  %v4853 = vunpack.c.l.b16 %v4694
  %v4854 = vunpack.c.h.b16 %v4694
  %v4855 = vunpack.c.l.b16 %v4695
  %v4856 = vunpack.c.h.b16 %v4695
  %v4857 = vunpack.c.l.b16 %v4696
  %v4858 = vunpack.c.h.b16 %v4696
  %v4859 = vpack.c.b16 %v4761, %v4759
  %v4860 = vpack.c.b16 %v4762, %v4760
  %v4861 = vpack.c.b16 %v4765, %v4763
  %v4862 = vpack.c.b16 %v4766, %v4764
  %v4863 = vpack.c.b16 %v4769, %v4767
  %v4864 = vpack.c.b16 %v4770, %v4768
  %v4865 = vpack.c.b16 %v4773, %v4771
  %v4866 = vpack.c.b16 %v4774, %v4772
  %v4867 = vpack.c.b16 %v4777, %v4775
  %v4868 = vpack.c.b16 %v4778, %v4776
  %v4869 = vpack.c.b16 %v4781, %v4779
  %v4870 = vpack.c.b16 %v4782, %v4780
  %v4871 = vpack.c.b16 %v4785, %v4783
  %v4872 = vpack.c.b16 %v4786, %v4784
  %v4873 = vpack.c.b16 %v4789, %v4787
  %v4874 = vpack.c.b16 %v4790, %v4788
  %v4875 = vpack.c.b16 %v4793, %v4791
  %v4876 = vpack.c.b16 %v4794, %v4792
  %v4877 = vpack.c.b16 %v4797, %v4795
  %v4878 = vpack.c.b16 %v4798, %v4796
  %v4879 = vpack.c.b16 %v4801, %v4799
  %v4880 = vpack.c.b16 %v4802, %v4800
  %v4881 = vpack.c.b16 %v4805, %v4803
  %v4882 = vpack.c.b16 %v4806, %v4804
  %v4883 = vpack.c.b16 %v4809, %v4807
  %v4884 = vpack.c.b16 %v4810, %v4808
  %v4885 = vpack.c.b16 %v4813, %v4811
  %v4886 = vpack.c.b16 %v4814, %v4812
  %v4887 = vpack.c.b16 %v4817, %v4815
  %v4888 = vpack.c.b16 %v4818, %v4816
  %v4889 = vpack.c.b16 %v4821, %v4819
  %v4890 = vpack.c.b16 %v4822, %v4820
  %v4891 = vpack.c.b16 %v4825, %v4823
  %v4892 = vpack.c.b16 %v4826, %v4824
  %v4893 = vpack.c.b16 %v4829, %v4827
  %v4894 = vpack.c.b16 %v4830, %v4828
  %v4895 = vpack.c.b16 %v4833, %v4831
  %v4896 = vpack.c.b16 %v4834, %v4832
  %v4897 = vpack.c.b16 %v4837, %v4835
  %v4898 = vpack.c.b16 %v4838, %v4836
  %v4899 = vpack.c.b16 %v4841, %v4839
  %v4900 = vpack.c.b16 %v4842, %v4840
  %v4901 = vpack.c.b16 %v4845, %v4843
  %v4902 = vpack.c.b16 %v4846, %v4844
  %v4903 = vpack.c.b16 %v4849, %v4847
  %v4904 = vpack.c.b16 %v4850, %v4848
  %v4905 = vpack.c.b16 %v4853, %v4851
  %v4906 = vpack.c.b16 %v4854, %v4852
  %v4907 = vpack.c.b16 %v4857, %v4855
  %v4908 = vpack.c.b16 %v4858, %v4856
  %vm4959 = vcmask 130048
  %v4961 = vsel %vm4959, %v4646, 0
  %4963 = vmatprep.subr.bf16.mxu0 %v4860
  %4964 = vmatpush1.bf16.msra.mxu0 %v4859
  %4965 = vmatprep.subr.bf16.mxu0 %v4862
  %4966 = vmatpush1.bf16.msra.mxu0 %v4861
  %4967 = vmatprep.subr.bf16.mxu0 %v4864
  %4968 = vmatpush1.bf16.msra.mxu0 %v4863
  %4969 = vmatprep.subr.bf16.mxu0 %v4866
  %4970 = vmatpush1.bf16.msra.mxu0 %v4865
  %4971 = vmatprep.subr.bf16.mxu0 %v4868
  %4972 = vmatpush1.bf16.msra.mxu0 %v4867
  %4973 = vmatprep.subr.bf16.mxu0 %v4870
  %4974 = vmatpush1.bf16.msra.mxu0 %v4869
  %4975 = vmatprep.subr.bf16.mxu0 %v4872
  %4976 = vmatpush1.bf16.msra.mxu0 %v4871
  %4977 = vmatprep.subr.bf16.mxu0 %v4874
  %4978 = vmatpush1.bf16.msra.mxu0 %v4873
  %4979 = vmatprep.subr.bf16.mxu0 %v4876
  %4980 = vmatpush1.bf16.msra.mxu0 %v4875
  %4981 = vmatprep.subr.bf16.mxu0 %v4878
  %4982 = vmatpush1.bf16.msra.mxu0 %v4877
  %4983 = vmatprep.subr.bf16.mxu0 %v4880
  %4984 = vmatpush1.bf16.msra.mxu0 %v4879
  %4985 = vmatprep.subr.bf16.mxu0 %v4882
  %4986 = vmatpush1.bf16.msra.mxu0 %v4881
  %4987 = vmatprep.subr.bf16.mxu0 %v4884
  %4988 = vmatpush1.bf16.msra.mxu0 %v4883
  %4989 = vmatprep.subr.bf16.mxu0 %v4886
  %4990 = vmatpush1.bf16.msra.mxu0 %v4885
  %4991 = vmatprep.subr.bf16.mxu0 %v4888
  %4992 = vmatpush1.bf16.msra.mxu0 %v4887
  %4993 = vmatprep.subr.bf16.mxu0 %v4890
  %4994 = vmatpush1.bf16.msra.mxu0 %v4889
  %4995 = vmatprep.mubr.bf16.mxu0 %v4644
  %4996 = vmatmul.mubr.bf16.gmra.mrb[0].mxu0 %v4643
  %v4997 = vpop.f32.mrb[0].mxu0
  %v4998 = vadd.f32 %v4702, %v4997
  %v4999 = vpop.f32.mrb[0].mxu0
  %v5000 = vadd.f32 %v4706, %v4999
  %v5001 = vpop.f32.mrb[0].mxu0
  %v5002 = vpop.f32.mrb[0].mxu0
  %5003 = vdwg.mxu0
  %5004 = vmatprep.subr.bf16.mxu0 %v4892
  %5005 = vmatpush1.bf16.msra.mxu0 %v4891
  %5006 = vmatprep.subr.bf16.mxu0 %v4894
  %5007 = vmatpush1.bf16.msra.mxu0 %v4893
  %5008 = vmatprep.subr.bf16.mxu0 %v4896
  %5009 = vmatpush1.bf16.msra.mxu0 %v4895
  %5010 = vmatprep.subr.bf16.mxu0 %v4898
  %5011 = vmatpush1.bf16.msra.mxu0 %v4897
  %5012 = vmatprep.subr.bf16.mxu0 %v4900
  %5013 = vmatpush1.bf16.msra.mxu0 %v4899
  %5014 = vmatprep.subr.bf16.mxu0 %v4902
  %5015 = vmatpush1.bf16.msra.mxu0 %v4901
  %5016 = vmatprep.subr.bf16.mxu0 %v4904
  %5017 = vmatpush1.bf16.msra.mxu0 %v4903
  %5018 = vmatprep.subr.bf16.mxu0 %v4906
  %5019 = vmatpush1.bf16.msra.mxu0 %v4905
  %5020 = vmatprep.subr.bf16.mxu0 %v4908
  %5021 = vmatpush1.bf16.msra.mxu0 %v4907
  %5022 = vmatprep.subr.bf16.mxu0 0
  %5023 = vmatpush1.bf16.msra.mxu0 0
  %5024 = vmatprep.subr.bf16.mxu0 0
  %5025 = vmatpush1.bf16.msra.mxu0 0
  %5026 = vmatprep.subr.bf16.mxu0 0
  %5027 = vmatpush1.bf16.msra.mxu0 0
  %5028 = vmatprep.subr.bf16.mxu0 0
  %5029 = vmatpush1.bf16.msra.mxu0 0
  %5030 = vmatprep.subr.bf16.mxu0 0
  %5031 = vmatpush1.bf16.msra.mxu0 0
  %5032 = vmatprep.subr.bf16.mxu0 0
  %5033 = vmatpush1.bf16.msra.mxu0 0
  %5034 = vmatprep.subr.bf16.mxu0 0
  %5035 = vmatpush1.bf16.msra.mxu0 0
  %5036 = vmatprep.mubr.bf16.mxu0 %v4961
  %5037 = vmatmul.mubr.bf16.gmra.mrb[0].mxu0 %v4645
  %v5038 = vpop.f32.mrb[0].mxu0
  %v5039 = vadd.f32 %v4998, %v5038
  %v5040 = vpop.f32.mrb[0].mxu0
  %v5041 = vadd.f32 %v5000, %v5040
  %v5042 = vpop.f32.mrb[0].mxu0
  %v5043 = vpop.f32.mrb[0].mxu0
  %5044 = vdwg.mxu0
  %v5045 = vmax.f32 %v5039, %v5041
  %5046 = vmax.xlane.f32.xlu0 %v5045
  %v5047 = vpop.xlane.xlu0 %5046
  %v5048 = vsub.f32 %v5039, %v5047
  %v5049 = vsub.f32 %v5041, %v5047
  %v5050 = vmul.f32 %v5048, 1.442695
  %v5051 = vpow.pop %v5050
  %v5052 = vmul.f32 %v5049, 1.442695
  %v5053 = vpow.pop %v5052
  %v5054 = vadd.f32 %v5051, %v5053
  %5055 = vadd.xlane.f32.xlu0 %v5054
  %v5056 = vpop.xlane.xlu0 %5055
  %v5057 = vlog2.pop %v5056
  %v5058 = vmul.f32 %v5057, 0.6931472
  %v5059 = vadd.f32 %v5047, %v5058
  %v5060 = vsub.f32 %v5039, %v5059
  %v5061 = vsub.f32 %v5041, %v5059
  %5062 = vst [vmem:[%s9] sm:$0xff] %v5060
  %5063 = vst [vmem:[%s9 + $0x8] sm:$0xff] %v5061
  // Predicated region
  $region38: #{dqn_forward.1} parent=0 // pred_check
    _
  $region39: #{dqn_forward.1} parent=0 // pred_check_branch
    %5065 = sbr.rel (0) target = $region41
  $region40: #{dqn_forward.1} parent=0 // pred_region
    _
  $region41: #{dqn_forward.1} parent=0 // pred_fallthru
    _
  // Predicated region
  $region42: #{dqn_forward.1} parent=0 // pred_check
    _
  $region43: #{dqn_forward.1} parent=0 // pred_check_branch
    %5067 = sbr.rel (0) target = $region45
  $region44: #{dqn_forward.1} parent=0 // pred_region
    _
  $region45: #{dqn_forward.1} parent=0 // pred_fallthru
    _

</llo_original>
